<compile_context>
chip_gen: v7x
topology: tpu7x:2x2x1
jax: 0.10.0
libtpu: 0.0.40
codegen_flags: <defaults>
</compile_context>

<pallas_src>
import math

import jax
import jax.numpy as jnp
from jax import lax
from jax.experimental import pallas as pl
from jax.experimental.pallas import tpu as pltpu

# ---- small synthetic BERT config (stands in for 768-dim bert-base) ----
B, S, H = 2, 8, 32          # batch, seq, hidden
NUM_HEADS = 2
HEAD_DIM = H // NUM_HEADS
FFN = 64
VOCAB = 64
NUM_LAYERS = 2
NUM_LABELS = 4              # self.num_labels1 = 4
LN_EPS = 1e-12
OUT_LANES = 128             # lane-dense output slab: logits lanes 0..3, loss lane 4


def _layernorm(x, g, b):
    mu = jnp.mean(x, axis=-1, keepdims=True)
    var = jnp.mean((x - mu) ** 2, axis=-1, keepdims=True)
    return (x - mu) * lax.rsqrt(var + LN_EPS) * g + b


# ---------------------------------------------------------------------------
# Single fused kernel: embeddings + NUM_LAYERS transformer layers + span head
# + batched cross-entropy.  No grid: everything resident in VMEM.
# ---------------------------------------------------------------------------
def fused_forward_kernel(
        datas_ref,                                   # (B*S, 1) int32
        span_ref,                                    # (B, 6)  int32: [e1s,e1e,e2s,e2e,trs,tre]
        label_ref,                                   # (B, 1)  int32
        wtab_ref,                                    # (VOCAB, H) bf16 word-embedding table
        pos_type_ref,                                # (B*S, H)   f32  pos+type embeddings (pre-tiled)
        embg_ref, embb_ref,                          # (1, H) f32 embedding LayerNorm
        wqkv_ref, bqkv_ref,                          # (L, H, 3H) bf16 / (L, 1, 3H) f32 (Q pre-scaled)
        wo_ref, bo_ref,                              # (L, H, H) bf16 / (L, 1, H) f32
        ln1g_ref, ln1b_ref,                          # (L, 1, H) f32
        w1_ref, b1_ref, w2_ref, b2_ref,              # FFN weights (bf16) / biases (f32)
        ln2g_ref, ln2b_ref,                          # (L, 1, H) f32
        attw_ref, attb_ref,                          # (1, H), (1, 1) f32 span-attention scorer
        outw_ref, outb_ref,                          # (4H, NL) bf16, (1, NL) f32
        out_ref):                                    # (B, OUT_LANES) f32
    bf16 = jnp.bfloat16

    # ---- BERT embeddings: one-hot matmul gather + add + LayerNorm ----
    idx = datas_ref[...]                                              # (B*S, 1) int32
    vocab_iota = lax.broadcasted_iota(jnp.int32, (B * S, VOCAB), 1)
    onehot = (idx == vocab_iota).astype(jnp.float32).astype(bf16)     # (B*S, VOCAB)
    emb = jnp.dot(onehot, wtab_ref[...],
                  preferred_element_type=jnp.float32) + pos_type_ref[...]
    x = _layernorm(emb, embg_ref[...], embb_ref[...])                 # (B*S, H) f32

    # head folding helpers: (B, S, H) <-> (NUM_HEADS*B, S, HEAD_DIM)
    def split_heads(t):
        return jnp.concatenate(
            [t[:, :, h * HEAD_DIM:(h + 1) * HEAD_DIM] for h in range(NUM_HEADS)],
            axis=0).astype(bf16)

    def merge_heads(t):
        return jnp.concatenate(
            [t[h * B:(h + 1) * B] for h in range(NUM_HEADS)], axis=-1
        ).reshape(B * S, H)

    # ---- transformer encoder layers (weights stacked on a leading axis) ----
    for l in range(NUM_LAYERS):                      # static unroll (NUM_LAYERS = 2)
        xb = x.astype(bf16)
        # fused QKV projection: one (B*S, H) @ (H, 3H) matmul, then lane-slice
        qkv = jnp.dot(xb, wqkv_ref[l],
                      preferred_element_type=jnp.float32) + bqkv_ref[l]   # (B*S, 3H)
        q = qkv[:, 0 * H:1 * H].reshape(B, S, H)     # Q already scaled by 1/sqrt(hd)
        k = qkv[:, 1 * H:2 * H].reshape(B, S, H)
        v = qkv[:, 2 * H:3 * H].reshape(B, S, H)

        # heads folded into the einsum batch dim: one score + one p@v einsum
        qh, kh, vh = split_heads(q), split_heads(k), split_heads(v)      # (NH*B, S, HD) bf16
        s = jnp.einsum('bqd,bkd->bqk', qh, kh,
                       preferred_element_type=jnp.float32)               # (NH*B, S, S)
        s = s - jnp.max(s, axis=-1, keepdims=True)
        p = jnp.exp(s)
        p = p * pl.reciprocal(jnp.sum(p, axis=-1, keepdims=True), approx=True)
        ctx = jnp.einsum('bqk,bkd->bqd', p.astype(bf16), vh,
                         preferred_element_type=jnp.float32)             # (NH*B, S, HD)
        ctx = merge_heads(ctx)                                           # (B*S, H)

        attn = jnp.dot(ctx.astype(bf16), wo_ref[l],
                       preferred_element_type=jnp.float32) + bo_ref[l]
        h1 = _layernorm(x + attn, ln1g_ref[l], ln1b_ref[l])

        ff = jnp.dot(h1.astype(bf16), w1_ref[l],
                     preferred_element_type=jnp.float32) + b1_ref[l]
        ff = jax.nn.gelu(ff, approximate=True)
        ff = jnp.dot(ff.astype(bf16), w2_ref[l],
                     preferred_element_type=jnp.float32) + b2_ref[l]
        x = _layernorm(h1 + ff, ln2g_ref[l], ln2b_ref[l])

    # ---- head: 3x span extraction + |diff| features + outlin1 + batched CE ----
    wemb = x.reshape(B, S, H)                                            # (B, S, H) f32
    # global span-attention logits on the VPU (no degenerate N=1 matmul)
    att = jnp.sum(wemb * attw_ref[...], axis=-1, keepdims=True) + attb_ref[...]   # (B, S, 1)

    s_iota = lax.broadcasted_iota(jnp.int32, (B, S, 1), 1)
    spans = span_ref[...]                                                # (B, 6) int32

    def span_emb(j):
        start = spans[:, 2 * j:2 * j + 1].reshape(B, 1, 1)
        end = spans[:, 2 * j + 1:2 * j + 2].reshape(B, 1, 1)             # inclusive end
        msk = jnp.logical_and(s_iota >= start, s_iota <= end)            # (B, S, 1)
        ml = jnp.where(msk, att, -1e30)
        m = jnp.max(ml, axis=1, keepdims=True)                           # (B, 1, 1)
        pw = jnp.exp(ml - m) * msk.astype(jnp.float32)
        denom = jnp.maximum(jnp.sum(pw, axis=1, keepdims=True), 1e-30)   # empty-span guard
        pw = pw * pl.reciprocal(denom, approx=True)
        return jnp.sum(pw * wemb, axis=1)                                # (B, H)

    e1 = span_emb(0)
    e2 = span_emb(1)
    tr = span_emb(2)
    mask_emb = wemb[:, S - 1:S, :].reshape(B, H)                         # wemb[:, -1, :]

    # (B, 4H) = (B, 128): one batched matmul for the classifier
    activ = jnp.concatenate([mask_emb, jnp.abs(e1 - e2),
                             jnp.abs(e1 - tr), jnp.abs(e2 - tr)], axis=-1)
    logits = jnp.dot(activ.astype(bf16), outw_ref[...],
                     preferred_element_type=jnp.float32) + outb_ref[...]  # (B, NL)

    # batched cross-entropy, mean over B computed in-kernel
    m = jnp.max(logits, axis=-1, keepdims=True)
    lse = m + jnp.log(jnp.sum(jnp.exp(logits - m), axis=-1, keepdims=True))   # (B, 1)
    cls_iota = lax.broadcasted_iota(jnp.int32, (B, NUM_LABELS), 1)
    correct = jnp.sum(jnp.where(cls_iota == label_ref[...], logits, 0.0),
                      axis=-1, keepdims=True)                                 # (B, 1)
    loss = lse - correct                                                      # (B, 1)
    loss_mean = jnp.sum(loss, axis=0, keepdims=True) * (1.0 / B)              # (1, 1)
    loss_col = jnp.broadcast_to(loss_mean, (B, 1))

    pad = jnp.zeros((B, OUT_LANES - NUM_LABELS - 1), jnp.float32)
    out_ref[...] = jnp.concatenate([logits, loss_col, pad], axis=-1)          # one lane-dense store


# ---------------------------------------------------------------------------
# Parameters (deterministic synthetic init; matmul weights stored in bf16)
# ---------------------------------------------------------------------------
def init_params(key):
    keys = iter(jax.random.split(key, 64))
    bf16 = jnp.bfloat16

    def nrm(shape, scale=0.02):
        return (scale * jax.random.normal(next(keys), shape)).astype(jnp.float32)

    q_scale = 1.0 / math.sqrt(HEAD_DIM)
    wqkv, bqkv, wo, bo = [], [], [], []
    ln1g, ln1b, w1, b1, w2, b2, ln2g, ln2b = [], [], [], [], [], [], [], []
    for _ in range(NUM_LAYERS):
        wq, wk, wv = nrm((H, H)), nrm((H, H)), nrm((H, H))
        bq = bk = bv = jnp.zeros((1, H), jnp.float32)
        # fused QKV weight; 1/sqrt(HEAD_DIM) folded into the Q block
        wqkv.append(jnp.concatenate([wq * q_scale, wk, wv], axis=-1))
        bqkv.append(jnp.concatenate([bq * q_scale, bk, bv], axis=-1))
        wo.append(nrm((H, H)))
        bo.append(jnp.zeros((1, H), jnp.float32))
        ln1g.append(jnp.ones((1, H), jnp.float32))
        ln1b.append(jnp.zeros((1, H), jnp.float32))
        w1.append(nrm((H, FFN)))
        b1.append(jnp.zeros((1, FFN), jnp.float32))
        w2.append(nrm((FFN, H)))
        b2.append(jnp.zeros((1, H), jnp.float32))
        ln2g.append(jnp.ones((1, H), jnp.float32))
        ln2b.append(jnp.zeros((1, H), jnp.float32))

    word_emb = nrm((VOCAB, H))
    pos_emb = nrm((S, H))
    type_emb = nrm((2, H))
    # position + token-type(0) embeddings, pre-tiled over the folded batch dim
    pos_type = jnp.tile(pos_emb + type_emb[0:1], (B, 1))                 # (B*S, H)

    # outlin1: Linear(4*H, NUM_LABELS) with Xavier-uniform weight init
    limit = math.sqrt(6.0 / (4 * H + NUM_LABELS))
    out_w = jax.random.uniform(next(keys), (4 * H, NUM_LABELS), jnp.float32, -limit, limit)

    return {
        'word_emb': word_emb.astype(bf16),
        'pos_type': pos_type,
        'emb_ln_g': jnp.ones((1, H), jnp.float32),
        'emb_ln_b': jnp.zeros((1, H), jnp.float32),
        'wqkv': jnp.stack(wqkv).astype(bf16),   # (L, H, 3H)
        'bqkv': jnp.stack(bqkv),                # (L, 1, 3H)
        'wo': jnp.stack(wo).astype(bf16),
        'bo': jnp.stack(bo),
        'ln1g': jnp.stack(ln1g), 'ln1b': jnp.stack(ln1b),
        'w1': jnp.stack(w1).astype(bf16), 'b1': jnp.stack(b1),
        'w2': jnp.stack(w2).astype(bf16), 'b2': jnp.stack(b2),
        'ln2g': jnp.stack(ln2g), 'ln2b': jnp.stack(ln2b),
        # SelfAttentiveSpanExtractor global attention Linear(H, 1) stored as a row
        'att_w': nrm((1, H)),
        'att_b': jnp.zeros((1, 1), jnp.float32),
        'out_w': out_w.astype(bf16),
        'out_b': jnp.zeros((1, NUM_LABELS), jnp.float32),
    }


# ---------------------------------------------------------------------------
# Forward: single fused Pallas kernel launch (everything in one jit region)
# ---------------------------------------------------------------------------
@jax.jit
def forward(params, datas, e1_mask, e2_mask, tr_mask, y_labels):
    datas_col = datas.reshape(B * S, 1).astype(jnp.int32)
    span_bounds = jnp.concatenate([e1_mask, e2_mask, tr_mask], axis=-1).astype(jnp.int32)  # (B, 6)
    labels_col = y_labels.reshape(B, 1).astype(jnp.int32)

    inputs = (
        datas_col, span_bounds, labels_col,
        params['word_emb'], params['pos_type'], params['emb_ln_g'], params['emb_ln_b'],
        params['wqkv'], params['bqkv'], params['wo'], params['bo'],
        params['ln1g'], params['ln1b'], params['w1'], params['b1'],
        params['w2'], params['b2'], params['ln2g'], params['ln2b'],
        params['att_w'], params['att_b'], params['out_w'], params['out_b'],
    )
    out = pl.pallas_call(
        fused_forward_kernel,
        out_shape=jax.ShapeDtypeStruct((B, OUT_LANES), jnp.float32),
        in_specs=[pl.BlockSpec(memory_space=pltpu.MemorySpace.VMEM) for _ in inputs],
        out_specs=pl.BlockSpec(memory_space=pltpu.MemorySpace.VMEM),
    )(*inputs)

    wemb1 = out[:, :NUM_LABELS]              # (B, 4) logits
    l1 = out[0, NUM_LABELS]                  # CrossEntropyLoss mean reduction (in-kernel)
    return l1, wemb1


if __name__ == "__main__":
    key = jax.random.PRNGKey(0)
    pkey, dkey, lkey, skey = jax.random.split(key, 4)
    params = init_params(pkey)

    datas = jax.random.randint(dkey, (B, S), 0, VOCAB, dtype=jnp.int32)
    # span indices (start, end) inclusive, as expected by SelfAttentiveSpanExtractor
    starts = jax.random.randint(skey, (3, B), 0, S - 2, dtype=jnp.int32)
    e1_mask = jnp.stack([starts[0], starts[0] + 1], axis=-1)            # (B, 2)
    e2_mask = jnp.stack([starts[1], starts[1] + 1], axis=-1)            # (B, 2)
    tr_mask = jnp.stack([starts[2], starts[2] + 1], axis=-1)            # (B, 2)
    y_labels = jax.random.randint(lkey, (B,), 0, NUM_LABELS, dtype=jnp.int32)

    l1, wemb1 = forward(params, datas, e1_mask, e2_mask, tr_mask, y_labels)
    jax.block_until_ready((l1, wemb1))
    assert wemb1.shape == (B, NUM_LABELS)
    assert l1.shape == ()
    print("KERNEL_OK")
</pallas_src>

<mosaic_0001>
module attributes {stable_mosaic.version = 11 : i64} {
  func.func @fused_forward_kernel(%arg0: memref<16x1xi32, #tpu.memory_space<vmem>>, %arg1: memref<2x6xi32, #tpu.memory_space<vmem>>, %arg2: memref<2x1xi32, #tpu.memory_space<vmem>>, %arg3: memref<64x32xbf16, #tpu.memory_space<vmem>>, %arg4: memref<16x32xf32, #tpu.memory_space<vmem>>, %arg5: memref<1x32xf32, #tpu.memory_space<vmem>>, %arg6: memref<1x32xf32, #tpu.memory_space<vmem>>, %arg7: memref<2x32x96xbf16, #tpu.memory_space<vmem>>, %arg8: memref<2x1x96xf32, #tpu.memory_space<vmem>>, %arg9: memref<2x32x32xbf16, #tpu.memory_space<vmem>>, %arg10: memref<2x1x32xf32, #tpu.memory_space<vmem>>, %arg11: memref<2x1x32xf32, #tpu.memory_space<vmem>>, %arg12: memref<2x1x32xf32, #tpu.memory_space<vmem>>, %arg13: memref<2x32x64xbf16, #tpu.memory_space<vmem>>, %arg14: memref<2x1x64xf32, #tpu.memory_space<vmem>>, %arg15: memref<2x64x32xbf16, #tpu.memory_space<vmem>>, %arg16: memref<2x1x32xf32, #tpu.memory_space<vmem>>, %arg17: memref<2x1x32xf32, #tpu.memory_space<vmem>>, %arg18: memref<2x1x32xf32, #tpu.memory_space<vmem>>, %arg19: memref<1x32xf32, #tpu.memory_space<vmem>>, %arg20: memref<1x1xf32, #tpu.memory_space<vmem>>, %arg21: memref<128x4xbf16, #tpu.memory_space<vmem>>, %arg22: memref<1x4xf32, #tpu.memory_space<vmem>>, %arg23: memref<2x128xf32, #tpu.memory_space<vmem>>) attributes {dimension_semantics = [], scalar_prefetch = 0 : i64, scratch_operands = 0 : i64, tpu.core_type = #tpu.core_type<tc>} {
    %c0 = arith.constant 0 : index
    %c0_0 = arith.constant 0 : index
    %0 = vector.load %arg0[%c0, %c0_0] : memref<16x1xi32, #tpu.memory_space<vmem>>, vector<16x1xi32>
    %1 = tpu.iota {dimensions = array<i32: 1>} : vector<16x64xi32>
    %2 = vector.broadcast %0 : vector<16x1xi32> to vector<16x64xi32>
    %3 = arith.cmpi eq, %2, %1 : vector<16x64xi32>
    %4 = arith.extui %3 : vector<16x64xi1> to vector<16x64xi32>
    %5 = arith.sitofp %4 : vector<16x64xi32> to vector<16x64xf32>
    %6 = arith.truncf %5 : vector<16x64xf32> to vector<16x64xbf16>
    %c0_1 = arith.constant 0 : index
    %c0_2 = arith.constant 0 : index
    %7 = vector.load %arg3[%c0_1, %c0_2] : memref<64x32xbf16, #tpu.memory_space<vmem>>, vector<64x32xbf16>
    %cst = arith.constant dense<0.000000e+00> : vector<16x32xf32>
    %8 = tpu.matmul %6, %7, %cst {dimension_numbers = #tpu.dot_dimension_numbers<[1], [0], [0], [1], [0, 0, 1, 1], [], []>} : vector<16x64xbf16>, vector<64x32xbf16>, vector<16x32xf32> -> vector<16x32xf32>
    %c0_3 = arith.constant 0 : index
    %c0_4 = arith.constant 0 : index
    %9 = vector.load %arg4[%c0_3, %c0_4] : memref<16x32xf32, #tpu.memory_space<vmem>>, vector<16x32xf32>
    %10 = arith.addf %8, %9 : vector<16x32xf32>
    %c0_5 = arith.constant 0 : index
    %c0_6 = arith.constant 0 : index
    %11 = vector.load %arg5[%c0_5, %c0_6] : memref<1x32xf32, #tpu.memory_space<vmem>>, vector<1x32xf32>
    %c0_7 = arith.constant 0 : index
    %c0_8 = arith.constant 0 : index
    %12 = vector.load %arg6[%c0_7, %c0_8] : memref<1x32xf32, #tpu.memory_space<vmem>>, vector<1x32xf32>
    %cst_9 = arith.constant dense<0.000000e+00> : vector<16xf32>
    %13 = vector.multi_reduction <add>, %10, %cst_9 [1] : vector<16x32xf32> to vector<16xf32>
    %14 = vector.shape_cast %13 : vector<16xf32> to vector<16x1xf32>
    %cst_10 = arith.constant 3.200000e+01 : f32
    %15 = vector.broadcast %cst_10 : f32 to vector<16x1xf32>
    %16 = arith.divf %14, %15 : vector<16x1xf32>
    %17 = vector.broadcast %16 : vector<16x1xf32> to vector<16x32xf32>
    %18 = arith.subf %10, %17 : vector<16x32xf32>
    %19 = arith.mulf %18, %18 : vector<16x32xf32>
    %cst_11 = arith.constant dense<0.000000e+00> : vector<16xf32>
    %20 = vector.multi_reduction <add>, %19, %cst_11 [1] : vector<16x32xf32> to vector<16xf32>
    %21 = vector.shape_cast %20 : vector<16xf32> to vector<16x1xf32>
    %cst_12 = arith.constant 3.200000e+01 : f32
    %22 = vector.broadcast %cst_12 : f32 to vector<16x1xf32>
    %23 = arith.divf %21, %22 : vector<16x1xf32>
    %24 = vector.broadcast %16 : vector<16x1xf32> to vector<16x32xf32>
    %25 = arith.subf %10, %24 : vector<16x32xf32>
    %cst_13 = arith.constant 9.99999996E-13 : f32
    %26 = vector.broadcast %cst_13 : f32 to vector<16x1xf32>
    %27 = arith.addf %23, %26 : vector<16x1xf32>
    %28 = math.rsqrt %27 : vector<16x1xf32>
    %29 = vector.broadcast %28 : vector<16x1xf32> to vector<16x32xf32>
    %30 = arith.mulf %25, %29 : vector<16x32xf32>
    %31 = vector.broadcast %11 : vector<1x32xf32> to vector<16x32xf32>
    %32 = arith.mulf %30, %31 : vector<16x32xf32>
    %33 = vector.broadcast %12 : vector<1x32xf32> to vector<16x32xf32>
    %34 = arith.addf %32, %33 : vector<16x32xf32>
    %35 = arith.truncf %34 : vector<16x32xf32> to vector<16x32xbf16>
    %c0_14 = arith.constant 0 : index
    %c0_15 = arith.constant 0 : index
    %c0_16 = arith.constant 0 : index
    %36 = vector.load %arg7[%c0_14, %c0_15, %c0_16] : memref<2x32x96xbf16, #tpu.memory_space<vmem>>, vector<1x32x96xbf16>
    %37 = vector.shape_cast %36 : vector<1x32x96xbf16> to vector<32x96xbf16>
    %cst_17 = arith.constant dense<0.000000e+00> : vector<16x96xf32>
    %38 = tpu.matmul %35, %37, %cst_17 {dimension_numbers = #tpu.dot_dimension_numbers<[1], [0], [0], [1], [0, 0, 1, 1], [], []>} : vector<16x32xbf16>, vector<32x96xbf16>, vector<16x96xf32> -> vector<16x96xf32>
    %c0_18 = arith.constant 0 : index
    %c0_19 = arith.constant 0 : index
    %c0_20 = arith.constant 0 : index
    %39 = vector.load %arg8[%c0_18, %c0_19, %c0_20] : memref<2x1x96xf32, #tpu.memory_space<vmem>>, vector<1x1x96xf32>
    %40 = vector.shape_cast %39 : vector<1x1x96xf32> to vector<1x96xf32>
    %41 = vector.broadcast %40 : vector<1x96xf32> to vector<16x96xf32>
    %42 = arith.addf %38, %41 : vector<16x96xf32>
    %43 = vector.extract_strided_slice %42 {offsets = [0, 0], sizes = [16, 32], strides = [1, 1]} : vector<16x96xf32> to vector<16x32xf32>
    %44 = vector.shape_cast %43 : vector<16x32xf32> to vector<2x8x32xf32>
    %45 = vector.extract_strided_slice %42 {offsets = [0, 32], sizes = [16, 32], strides = [1, 1]} : vector<16x96xf32> to vector<16x32xf32>
    %46 = vector.shape_cast %45 : vector<16x32xf32> to vector<2x8x32xf32>
    %47 = vector.extract_strided_slice %42 {offsets = [0, 64], sizes = [16, 32], strides = [1, 1]} : vector<16x96xf32> to vector<16x32xf32>
    %48 = vector.shape_cast %47 : vector<16x32xf32> to vector<2x8x32xf32>
    %49 = vector.extract_strided_slice %44 {offsets = [0, 0, 0], sizes = [2, 8, 16], strides = [1, 1, 1]} : vector<2x8x32xf32> to vector<2x8x16xf32>
    %50 = vector.extract_strided_slice %44 {offsets = [0, 0, 16], sizes = [2, 8, 16], strides = [1, 1, 1]} : vector<2x8x32xf32> to vector<2x8x16xf32>
    %51 = tpu.concatenate %49, %50 in 0 : vector<2x8x16xf32>, vector<2x8x16xf32> -> vector<4x8x16xf32>
    %52 = arith.truncf %51 : vector<4x8x16xf32> to vector<4x8x16xbf16>
    %53 = vector.extract_strided_slice %46 {offsets = [0, 0, 0], sizes = [2, 8, 16], strides = [1, 1, 1]} : vector<2x8x32xf32> to vector<2x8x16xf32>
    %54 = vector.extract_strided_slice %46 {offsets = [0, 0, 16], sizes = [2, 8, 16], strides = [1, 1, 1]} : vector<2x8x32xf32> to vector<2x8x16xf32>
    %55 = tpu.concatenate %53, %54 in 0 : vector<2x8x16xf32>, vector<2x8x16xf32> -> vector<4x8x16xf32>
    %56 = arith.truncf %55 : vector<4x8x16xf32> to vector<4x8x16xbf16>
    %57 = vector.extract_strided_slice %48 {offsets = [0, 0, 0], sizes = [2, 8, 16], strides = [1, 1, 1]} : vector<2x8x32xf32> to vector<2x8x16xf32>
    %58 = vector.extract_strided_slice %48 {offsets = [0, 0, 16], sizes = [2, 8, 16], strides = [1, 1, 1]} : vector<2x8x32xf32> to vector<2x8x16xf32>
    %59 = tpu.concatenate %57, %58 in 0 : vector<2x8x16xf32>, vector<2x8x16xf32> -> vector<4x8x16xf32>
    %60 = arith.truncf %59 : vector<4x8x16xf32> to vector<4x8x16xbf16>
    "tpu.trace_start"() <{level = 10 : i32, message = "bqd,bkd->bqk"}> : () -> ()
    %cst_21 = arith.constant dense<0.000000e+00> : vector<4x8x8xf32>
    %61 = tpu.matmul %52, %56, %cst_21 {dimension_numbers = #tpu.dot_dimension_numbers<[2], [2], [1], [1], [0, 0, 0, 1, 1, 1], [0], [0]>} : vector<4x8x16xbf16>, vector<4x8x16xbf16>, vector<4x8x8xf32> -> vector<4x8x8xf32>
    "tpu.trace_stop"() : () -> ()
    %cst_22 = arith.constant dense<0xFF800000> : vector<4x8xf32>
    %62 = vector.multi_reduction <maximumf>, %61, %cst_22 [2] : vector<4x8x8xf32> to vector<4x8xf32>
    %63 = vector.shape_cast %62 : vector<4x8xf32> to vector<4x8x1xf32>
    %64 = vector.broadcast %63 : vector<4x8x1xf32> to vector<4x8x8xf32>
    %65 = arith.subf %61, %64 : vector<4x8x8xf32>
    %66 = math.exp %65 : vector<4x8x8xf32>
    %cst_23 = arith.constant dense<0.000000e+00> : vector<4x8xf32>
    %67 = vector.multi_reduction <add>, %66, %cst_23 [2] : vector<4x8x8xf32> to vector<4x8xf32>
    %68 = vector.shape_cast %67 : vector<4x8xf32> to vector<4x8x1xf32>
    %69 = tpu.reciprocal %68 {approx = true} : vector<4x8x1xf32> -> vector<4x8x1xf32>
    %70 = vector.broadcast %69 : vector<4x8x1xf32> to vector<4x8x8xf32>
    %71 = arith.mulf %66, %70 : vector<4x8x8xf32>
    %72 = arith.truncf %71 : vector<4x8x8xf32> to vector<4x8x8xbf16>
    "tpu.trace_start"() <{level = 10 : i32, message = "bqk,bkd->bqd"}> : () -> ()
    %cst_24 = arith.constant dense<0.000000e+00> : vector<4x8x16xf32>
    %73 = tpu.matmul %72, %60, %cst_24 {dimension_numbers = #tpu.dot_dimension_numbers<[2], [1], [1], [2], [0, 0, 0, 1, 1, 2], [0], [0]>} : vector<4x8x8xbf16>, vector<4x8x16xbf16>, vector<4x8x16xf32> -> vector<4x8x16xf32>
    "tpu.trace_stop"() : () -> ()
    %74 = vector.extract_strided_slice %73 {offsets = [0, 0, 0], sizes = [2, 8, 16], strides = [1, 1, 1]} : vector<4x8x16xf32> to vector<2x8x16xf32>
    %75 = vector.extract_strided_slice %73 {offsets = [2, 0, 0], sizes = [2, 8, 16], strides = [1, 1, 1]} : vector<4x8x16xf32> to vector<2x8x16xf32>
    %76 = tpu.concatenate %74, %75 in 2 : vector<2x8x16xf32>, vector<2x8x16xf32> -> vector<2x8x32xf32>
    %77 = vector.shape_cast %76 : vector<2x8x32xf32> to vector<16x32xf32>
    %78 = arith.truncf %77 : vector<16x32xf32> to vector<16x32xbf16>
    %c0_25 = arith.constant 0 : index
    %c0_26 = arith.constant 0 : index
    %c0_27 = arith.constant 0 : index
    %79 = vector.load %arg9[%c0_25, %c0_26, %c0_27] : memref<2x32x32xbf16, #tpu.memory_space<vmem>>, vector<1x32x32xbf16>
    %80 = vector.shape_cast %79 : vector<1x32x32xbf16> to vector<32x32xbf16>
    %cst_28 = arith.constant dense<0.000000e+00> : vector<16x32xf32>
    %81 = tpu.matmul %78, %80, %cst_28 {dimension_numbers = #tpu.dot_dimension_numbers<[1], [0], [0], [1], [0, 0, 1, 1], [], []>} : vector<16x32xbf16>, vector<32x32xbf16>, vector<16x32xf32> -> vector<16x32xf32>
    %c0_29 = arith.constant 0 : index
    %c0_30 = arith.constant 0 : index
    %c0_31 = arith.constant 0 : index
    %82 = vector.load %arg10[%c0_29, %c0_30, %c0_31] : memref<2x1x32xf32, #tpu.memory_space<vmem>>, vector<1x1x32xf32>
    %83 = vector.shape_cast %82 : vector<1x1x32xf32> to vector<1x32xf32>
    %84 = vector.broadcast %83 : vector<1x32xf32> to vector<16x32xf32>
    %85 = arith.addf %81, %84 : vector<16x32xf32>
    %86 = arith.addf %34, %85 : vector<16x32xf32>
    %c0_32 = arith.constant 0 : index
    %c0_33 = arith.constant 0 : index
    %c0_34 = arith.constant 0 : index
    %87 = vector.load %arg11[%c0_32, %c0_33, %c0_34] : memref<2x1x32xf32, #tpu.memory_space<vmem>>, vector<1x1x32xf32>
    %88 = vector.shape_cast %87 : vector<1x1x32xf32> to vector<1x32xf32>
    %c0_35 = arith.constant 0 : index
    %c0_36 = arith.constant 0 : index
    %c0_37 = arith.constant 0 : index
    %89 = vector.load %arg12[%c0_35, %c0_36, %c0_37] : memref<2x1x32xf32, #tpu.memory_space<vmem>>, vector<1x1x32xf32>
    %90 = vector.shape_cast %89 : vector<1x1x32xf32> to vector<1x32xf32>
    %cst_38 = arith.constant dense<0.000000e+00> : vector<16xf32>
    %91 = vector.multi_reduction <add>, %86, %cst_38 [1] : vector<16x32xf32> to vector<16xf32>
    %92 = vector.shape_cast %91 : vector<16xf32> to vector<16x1xf32>
    %cst_39 = arith.constant 3.200000e+01 : f32
    %93 = vector.broadcast %cst_39 : f32 to vector<16x1xf32>
    %94 = arith.divf %92, %93 : vector<16x1xf32>
    %95 = vector.broadcast %94 : vector<16x1xf32> to vector<16x32xf32>
    %96 = arith.subf %86, %95 : vector<16x32xf32>
    %97 = arith.mulf %96, %96 : vector<16x32xf32>
    %cst_40 = arith.constant dense<0.000000e+00> : vector<16xf32>
    %98 = vector.multi_reduction <add>, %97, %cst_40 [1] : vector<16x32xf32> to vector<16xf32>
    %99 = vector.shape_cast %98 : vector<16xf32> to vector<16x1xf32>
    %cst_41 = arith.constant 3.200000e+01 : f32
    %100 = vector.broadcast %cst_41 : f32 to vector<16x1xf32>
    %101 = arith.divf %99, %100 : vector<16x1xf32>
    %102 = vector.broadcast %94 : vector<16x1xf32> to vector<16x32xf32>
    %103 = arith.subf %86, %102 : vector<16x32xf32>
    %cst_42 = arith.constant 9.99999996E-13 : f32
    %104 = vector.broadcast %cst_42 : f32 to vector<16x1xf32>
    %105 = arith.addf %101, %104 : vector<16x1xf32>
    %106 = math.rsqrt %105 : vector<16x1xf32>
    %107 = vector.broadcast %106 : vector<16x1xf32> to vector<16x32xf32>
    %108 = arith.mulf %103, %107 : vector<16x32xf32>
    %109 = vector.broadcast %88 : vector<1x32xf32> to vector<16x32xf32>
    %110 = arith.mulf %108, %109 : vector<16x32xf32>
    %111 = vector.broadcast %90 : vector<1x32xf32> to vector<16x32xf32>
    %112 = arith.addf %110, %111 : vector<16x32xf32>
    %113 = arith.truncf %112 : vector<16x32xf32> to vector<16x32xbf16>
    %c0_43 = arith.constant 0 : index
    %c0_44 = arith.constant 0 : index
    %c0_45 = arith.constant 0 : index
    %114 = vector.load %arg13[%c0_43, %c0_44, %c0_45] : memref<2x32x64xbf16, #tpu.memory_space<vmem>>, vector<1x32x64xbf16>
    %115 = vector.shape_cast %114 : vector<1x32x64xbf16> to vector<32x64xbf16>
    %cst_46 = arith.constant dense<0.000000e+00> : vector<16x64xf32>
    %116 = tpu.matmul %113, %115, %cst_46 {dimension_numbers = #tpu.dot_dimension_numbers<[1], [0], [0], [1], [0, 0, 1, 1], [], []>} : vector<16x32xbf16>, vector<32x64xbf16>, vector<16x64xf32> -> vector<16x64xf32>
    %c0_47 = arith.constant 0 : index
    %c0_48 = arith.constant 0 : index
    %c0_49 = arith.constant 0 : index
    %117 = vector.load %arg14[%c0_47, %c0_48, %c0_49] : memref<2x1x64xf32, #tpu.memory_space<vmem>>, vector<1x1x64xf32>
    %118 = vector.shape_cast %117 : vector<1x1x64xf32> to vector<1x64xf32>
    %119 = vector.broadcast %118 : vector<1x64xf32> to vector<16x64xf32>
    %120 = arith.addf %116, %119 : vector<16x64xf32>
    %121 = arith.mulf %120, %120 : vector<16x64xf32>
    %122 = arith.mulf %120, %121 : vector<16x64xf32>
    %cst_50 = arith.constant 4.471500e-02 : f32
    %123 = vector.broadcast %cst_50 : f32 to vector<16x64xf32>
    %124 = arith.mulf %123, %122 : vector<16x64xf32>
    %125 = arith.addf %120, %124 : vector<16x64xf32>
    %cst_51 = arith.constant 0.797884583 : f32
    %126 = vector.broadcast %cst_51 : f32 to vector<16x64xf32>
    %127 = arith.mulf %126, %125 : vector<16x64xf32>
    %128 = math.tanh %127 : vector<16x64xf32>
    %cst_52 = arith.constant 1.000000e+00 : f32
    %129 = vector.broadcast %cst_52 : f32 to vector<16x64xf32>
    %130 = arith.addf %129, %128 : vector<16x64xf32>
    %cst_53 = arith.constant 5.000000e-01 : f32
    %131 = vector.broadcast %cst_53 : f32 to vector<16x64xf32>
    %132 = arith.mulf %131, %130 : vector<16x64xf32>
    %133 = arith.mulf %120, %132 : vector<16x64xf32>
    %134 = arith.truncf %133 : vector<16x64xf32> to vector<16x64xbf16>
    %c0_54 = arith.constant 0 : index
    %c0_55 = arith.constant 0 : index
    %c0_56 = arith.constant 0 : index
    %135 = vector.load %arg15[%c0_54, %c0_55, %c0_56] : memref<2x64x32xbf16, #tpu.memory_space<vmem>>, vector<1x64x32xbf16>
    %136 = vector.shape_cast %135 : vector<1x64x32xbf16> to vector<64x32xbf16>
    %cst_57 = arith.constant dense<0.000000e+00> : vector<16x32xf32>
    %137 = tpu.matmul %134, %136, %cst_57 {dimension_numbers = #tpu.dot_dimension_numbers<[1], [0], [0], [1], [0, 0, 1, 1], [], []>} : vector<16x64xbf16>, vector<64x32xbf16>, vector<16x32xf32> -> vector<16x32xf32>
    %c0_58 = arith.constant 0 : index
    %c0_59 = arith.constant 0 : index
    %c0_60 = arith.constant 0 : index
    %138 = vector.load %arg16[%c0_58, %c0_59, %c0_60] : memref<2x1x32xf32, #tpu.memory_space<vmem>>, vector<1x1x32xf32>
    %139 = vector.shape_cast %138 : vector<1x1x32xf32> to vector<1x32xf32>
    %140 = vector.broadcast %139 : vector<1x32xf32> to vector<16x32xf32>
    %141 = arith.addf %137, %140 : vector<16x32xf32>
    %142 = arith.addf %112, %141 : vector<16x32xf32>
    %c0_61 = arith.constant 0 : index
    %c0_62 = arith.constant 0 : index
    %c0_63 = arith.constant 0 : index
    %143 = vector.load %arg17[%c0_61, %c0_62, %c0_63] : memref<2x1x32xf32, #tpu.memory_space<vmem>>, vector<1x1x32xf32>
    %144 = vector.shape_cast %143 : vector<1x1x32xf32> to vector<1x32xf32>
    %c0_64 = arith.constant 0 : index
    %c0_65 = arith.constant 0 : index
    %c0_66 = arith.constant 0 : index
    %145 = vector.load %arg18[%c0_64, %c0_65, %c0_66] : memref<2x1x32xf32, #tpu.memory_space<vmem>>, vector<1x1x32xf32>
    %146 = vector.shape_cast %145 : vector<1x1x32xf32> to vector<1x32xf32>
    %cst_67 = arith.constant dense<0.000000e+00> : vector<16xf32>
    %147 = vector.multi_reduction <add>, %142, %cst_67 [1] : vector<16x32xf32> to vector<16xf32>
    %148 = vector.shape_cast %147 : vector<16xf32> to vector<16x1xf32>
    %cst_68 = arith.constant 3.200000e+01 : f32
    %149 = vector.broadcast %cst_68 : f32 to vector<16x1xf32>
    %150 = arith.divf %148, %149 : vector<16x1xf32>
    %151 = vector.broadcast %150 : vector<16x1xf32> to vector<16x32xf32>
    %152 = arith.subf %142, %151 : vector<16x32xf32>
    %153 = arith.mulf %152, %152 : vector<16x32xf32>
    %cst_69 = arith.constant dense<0.000000e+00> : vector<16xf32>
    %154 = vector.multi_reduction <add>, %153, %cst_69 [1] : vector<16x32xf32> to vector<16xf32>
    %155 = vector.shape_cast %154 : vector<16xf32> to vector<16x1xf32>
    %cst_70 = arith.constant 3.200000e+01 : f32
    %156 = vector.broadcast %cst_70 : f32 to vector<16x1xf32>
    %157 = arith.divf %155, %156 : vector<16x1xf32>
    %158 = vector.broadcast %150 : vector<16x1xf32> to vector<16x32xf32>
    %159 = arith.subf %142, %158 : vector<16x32xf32>
    %cst_71 = arith.constant 9.99999996E-13 : f32
    %160 = vector.broadcast %cst_71 : f32 to vector<16x1xf32>
    %161 = arith.addf %157, %160 : vector<16x1xf32>
    %162 = math.rsqrt %161 : vector<16x1xf32>
    %163 = vector.broadcast %162 : vector<16x1xf32> to vector<16x32xf32>
    %164 = arith.mulf %159, %163 : vector<16x32xf32>
    %165 = vector.broadcast %144 : vector<1x32xf32> to vector<16x32xf32>
    %166 = arith.mulf %164, %165 : vector<16x32xf32>
    %167 = vector.broadcast %146 : vector<1x32xf32> to vector<16x32xf32>
    %168 = arith.addf %166, %167 : vector<16x32xf32>
    %169 = arith.truncf %168 : vector<16x32xf32> to vector<16x32xbf16>
    %c1 = arith.constant 1 : index
    %c0_72 = arith.constant 0 : index
    %c0_73 = arith.constant 0 : index
    %170 = vector.load %arg7[%c1, %c0_72, %c0_73] : memref<2x32x96xbf16, #tpu.memory_space<vmem>>, vector<1x32x96xbf16>
    %171 = vector.shape_cast %170 : vector<1x32x96xbf16> to vector<32x96xbf16>
    %cst_74 = arith.constant dense<0.000000e+00> : vector<16x96xf32>
    %172 = tpu.matmul %169, %171, %cst_74 {dimension_numbers = #tpu.dot_dimension_numbers<[1], [0], [0], [1], [0, 0, 1, 1], [], []>} : vector<16x32xbf16>, vector<32x96xbf16>, vector<16x96xf32> -> vector<16x96xf32>
    %c1_75 = arith.constant 1 : index
    %c0_76 = arith.constant 0 : index
    %c0_77 = arith.constant 0 : index
    %173 = vector.load %arg8[%c1_75, %c0_76, %c0_77] : memref<2x1x96xf32, #tpu.memory_space<vmem>>, vector<1x1x96xf32>
    %174 = vector.shape_cast %173 : vector<1x1x96xf32> to vector<1x96xf32>
    %175 = vector.broadcast %174 : vector<1x96xf32> to vector<16x96xf32>
    %176 = arith.addf %172, %175 : vector<16x96xf32>
    %177 = vector.extract_strided_slice %176 {offsets = [0, 0], sizes = [16, 32], strides = [1, 1]} : vector<16x96xf32> to vector<16x32xf32>
    %178 = vector.shape_cast %177 : vector<16x32xf32> to vector<2x8x32xf32>
    %179 = vector.extract_strided_slice %176 {offsets = [0, 32], sizes = [16, 32], strides = [1, 1]} : vector<16x96xf32> to vector<16x32xf32>
    %180 = vector.shape_cast %179 : vector<16x32xf32> to vector<2x8x32xf32>
    %181 = vector.extract_strided_slice %176 {offsets = [0, 64], sizes = [16, 32], strides = [1, 1]} : vector<16x96xf32> to vector<16x32xf32>
    %182 = vector.shape_cast %181 : vector<16x32xf32> to vector<2x8x32xf32>
    %183 = vector.extract_strided_slice %178 {offsets = [0, 0, 0], sizes = [2, 8, 16], strides = [1, 1, 1]} : vector<2x8x32xf32> to vector<2x8x16xf32>
    %184 = vector.extract_strided_slice %178 {offsets = [0, 0, 16], sizes = [2, 8, 16], strides = [1, 1, 1]} : vector<2x8x32xf32> to vector<2x8x16xf32>
    %185 = tpu.concatenate %183, %184 in 0 : vector<2x8x16xf32>, vector<2x8x16xf32> -> vector<4x8x16xf32>
    %186 = arith.truncf %185 : vector<4x8x16xf32> to vector<4x8x16xbf16>
    %187 = vector.extract_strided_slice %180 {offsets = [0, 0, 0], sizes = [2, 8, 16], strides = [1, 1, 1]} : vector<2x8x32xf32> to vector<2x8x16xf32>
    %188 = vector.extract_strided_slice %180 {offsets = [0, 0, 16], sizes = [2, 8, 16], strides = [1, 1, 1]} : vector<2x8x32xf32> to vector<2x8x16xf32>
    %189 = tpu.concatenate %187, %188 in 0 : vector<2x8x16xf32>, vector<2x8x16xf32> -> vector<4x8x16xf32>
    %190 = arith.truncf %189 : vector<4x8x16xf32> to vector<4x8x16xbf16>
    %191 = vector.extract_strided_slice %182 {offsets = [0, 0, 0], sizes = [2, 8, 16], strides = [1, 1, 1]} : vector<2x8x32xf32> to vector<2x8x16xf32>
    %192 = vector.extract_strided_slice %182 {offsets = [0, 0, 16], sizes = [2, 8, 16], strides = [1, 1, 1]} : vector<2x8x32xf32> to vector<2x8x16xf32>
    %193 = tpu.concatenate %191, %192 in 0 : vector<2x8x16xf32>, vector<2x8x16xf32> -> vector<4x8x16xf32>
    %194 = arith.truncf %193 : vector<4x8x16xf32> to vector<4x8x16xbf16>
    "tpu.trace_start"() <{level = 10 : i32, message = "bqd,bkd->bqk"}> : () -> ()
    %cst_78 = arith.constant dense<0.000000e+00> : vector<4x8x8xf32>
    %195 = tpu.matmul %186, %190, %cst_78 {dimension_numbers = #tpu.dot_dimension_numbers<[2], [2], [1], [1], [0, 0, 0, 1, 1, 1], [0], [0]>} : vector<4x8x16xbf16>, vector<4x8x16xbf16>, vector<4x8x8xf32> -> vector<4x8x8xf32>
    "tpu.trace_stop"() : () -> ()
    %cst_79 = arith.constant dense<0xFF800000> : vector<4x8xf32>
    %196 = vector.multi_reduction <maximumf>, %195, %cst_79 [2] : vector<4x8x8xf32> to vector<4x8xf32>
    %197 = vector.shape_cast %196 : vector<4x8xf32> to vector<4x8x1xf32>
    %198 = vector.broadcast %197 : vector<4x8x1xf32> to vector<4x8x8xf32>
    %199 = arith.subf %195, %198 : vector<4x8x8xf32>
    %200 = math.exp %199 : vector<4x8x8xf32>
    %cst_80 = arith.constant dense<0.000000e+00> : vector<4x8xf32>
    %201 = vector.multi_reduction <add>, %200, %cst_80 [2] : vector<4x8x8xf32> to vector<4x8xf32>
    %202 = vector.shape_cast %201 : vector<4x8xf32> to vector<4x8x1xf32>
    %203 = tpu.reciprocal %202 {approx = true} : vector<4x8x1xf32> -> vector<4x8x1xf32>
    %204 = vector.broadcast %203 : vector<4x8x1xf32> to vector<4x8x8xf32>
    %205 = arith.mulf %200, %204 : vector<4x8x8xf32>
    %206 = arith.truncf %205 : vector<4x8x8xf32> to vector<4x8x8xbf16>
    "tpu.trace_start"() <{level = 10 : i32, message = "bqk,bkd->bqd"}> : () -> ()
    %cst_81 = arith.constant dense<0.000000e+00> : vector<4x8x16xf32>
    %207 = tpu.matmul %206, %194, %cst_81 {dimension_numbers = #tpu.dot_dimension_numbers<[2], [1], [1], [2], [0, 0, 0, 1, 1, 2], [0], [0]>} : vector<4x8x8xbf16>, vector<4x8x16xbf16>, vector<4x8x16xf32> -> vector<4x8x16xf32>
    "tpu.trace_stop"() : () -> ()
    %208 = vector.extract_strided_slice %207 {offsets = [0, 0, 0], sizes = [2, 8, 16], strides = [1, 1, 1]} : vector<4x8x16xf32> to vector<2x8x16xf32>
    %209 = vector.extract_strided_slice %207 {offsets = [2, 0, 0], sizes = [2, 8, 16], strides = [1, 1, 1]} : vector<4x8x16xf32> to vector<2x8x16xf32>
    %210 = tpu.concatenate %208, %209 in 2 : vector<2x8x16xf32>, vector<2x8x16xf32> -> vector<2x8x32xf32>
    %211 = vector.shape_cast %210 : vector<2x8x32xf32> to vector<16x32xf32>
    %212 = arith.truncf %211 : vector<16x32xf32> to vector<16x32xbf16>
    %c1_82 = arith.constant 1 : index
    %c0_83 = arith.constant 0 : index
    %c0_84 = arith.constant 0 : index
    %213 = vector.load %arg9[%c1_82, %c0_83, %c0_84] : memref<2x32x32xbf16, #tpu.memory_space<vmem>>, vector<1x32x32xbf16>
    %214 = vector.shape_cast %213 : vector<1x32x32xbf16> to vector<32x32xbf16>
    %cst_85 = arith.constant dense<0.000000e+00> : vector<16x32xf32>
    %215 = tpu.matmul %212, %214, %cst_85 {dimension_numbers = #tpu.dot_dimension_numbers<[1], [0], [0], [1], [0, 0, 1, 1], [], []>} : vector<16x32xbf16>, vector<32x32xbf16>, vector<16x32xf32> -> vector<16x32xf32>
    %c1_86 = arith.constant 1 : index
    %c0_87 = arith.constant 0 : index
    %c0_88 = arith.constant 0 : index
    %216 = vector.load %arg10[%c1_86, %c0_87, %c0_88] : memref<2x1x32xf32, #tpu.memory_space<vmem>>, vector<1x1x32xf32>
    %217 = vector.shape_cast %216 : vector<1x1x32xf32> to vector<1x32xf32>
    %218 = vector.broadcast %217 : vector<1x32xf32> to vector<16x32xf32>
    %219 = arith.addf %215, %218 : vector<16x32xf32>
    %220 = arith.addf %168, %219 : vector<16x32xf32>
    %c1_89 = arith.constant 1 : index
    %c0_90 = arith.constant 0 : index
    %c0_91 = arith.constant 0 : index
    %221 = vector.load %arg11[%c1_89, %c0_90, %c0_91] : memref<2x1x32xf32, #tpu.memory_space<vmem>>, vector<1x1x32xf32>
    %222 = vector.shape_cast %221 : vector<1x1x32xf32> to vector<1x32xf32>
    %c1_92 = arith.constant 1 : index
    %c0_93 = arith.constant 0 : index
    %c0_94 = arith.constant 0 : index
    %223 = vector.load %arg12[%c1_92, %c0_93, %c0_94] : memref<2x1x32xf32, #tpu.memory_space<vmem>>, vector<1x1x32xf32>
    %224 = vector.shape_cast %223 : vector<1x1x32xf32> to vector<1x32xf32>
    %cst_95 = arith.constant dense<0.000000e+00> : vector<16xf32>
    %225 = vector.multi_reduction <add>, %220, %cst_95 [1] : vector<16x32xf32> to vector<16xf32>
    %226 = vector.shape_cast %225 : vector<16xf32> to vector<16x1xf32>
    %cst_96 = arith.constant 3.200000e+01 : f32
    %227 = vector.broadcast %cst_96 : f32 to vector<16x1xf32>
    %228 = arith.divf %226, %227 : vector<16x1xf32>
    %229 = vector.broadcast %228 : vector<16x1xf32> to vector<16x32xf32>
    %230 = arith.subf %220, %229 : vector<16x32xf32>
    %231 = arith.mulf %230, %230 : vector<16x32xf32>
    %cst_97 = arith.constant dense<0.000000e+00> : vector<16xf32>
    %232 = vector.multi_reduction <add>, %231, %cst_97 [1] : vector<16x32xf32> to vector<16xf32>
    %233 = vector.shape_cast %232 : vector<16xf32> to vector<16x1xf32>
    %cst_98 = arith.constant 3.200000e+01 : f32
    %234 = vector.broadcast %cst_98 : f32 to vector<16x1xf32>
    %235 = arith.divf %233, %234 : vector<16x1xf32>
    %236 = vector.broadcast %228 : vector<16x1xf32> to vector<16x32xf32>
    %237 = arith.subf %220, %236 : vector<16x32xf32>
    %cst_99 = arith.constant 9.99999996E-13 : f32
    %238 = vector.broadcast %cst_99 : f32 to vector<16x1xf32>
    %239 = arith.addf %235, %238 : vector<16x1xf32>
    %240 = math.rsqrt %239 : vector<16x1xf32>
    %241 = vector.broadcast %240 : vector<16x1xf32> to vector<16x32xf32>
    %242 = arith.mulf %237, %241 : vector<16x32xf32>
    %243 = vector.broadcast %222 : vector<1x32xf32> to vector<16x32xf32>
    %244 = arith.mulf %242, %243 : vector<16x32xf32>
    %245 = vector.broadcast %224 : vector<1x32xf32> to vector<16x32xf32>
    %246 = arith.addf %244, %245 : vector<16x32xf32>
    %247 = arith.truncf %246 : vector<16x32xf32> to vector<16x32xbf16>
    %c1_100 = arith.constant 1 : index
    %c0_101 = arith.constant 0 : index
    %c0_102 = arith.constant 0 : index
    %248 = vector.load %arg13[%c1_100, %c0_101, %c0_102] : memref<2x32x64xbf16, #tpu.memory_space<vmem>>, vector<1x32x64xbf16>
    %249 = vector.shape_cast %248 : vector<1x32x64xbf16> to vector<32x64xbf16>
    %cst_103 = arith.constant dense<0.000000e+00> : vector<16x64xf32>
    %250 = tpu.matmul %247, %249, %cst_103 {dimension_numbers = #tpu.dot_dimension_numbers<[1], [0], [0], [1], [0, 0, 1, 1], [], []>} : vector<16x32xbf16>, vector<32x64xbf16>, vector<16x64xf32> -> vector<16x64xf32>
    %c1_104 = arith.constant 1 : index
    %c0_105 = arith.constant 0 : index
    %c0_106 = arith.constant 0 : index
    %251 = vector.load %arg14[%c1_104, %c0_105, %c0_106] : memref<2x1x64xf32, #tpu.memory_space<vmem>>, vector<1x1x64xf32>
    %252 = vector.shape_cast %251 : vector<1x1x64xf32> to vector<1x64xf32>
    %253 = vector.broadcast %252 : vector<1x64xf32> to vector<16x64xf32>
    %254 = arith.addf %250, %253 : vector<16x64xf32>
    %255 = arith.mulf %254, %254 : vector<16x64xf32>
    %256 = arith.mulf %254, %255 : vector<16x64xf32>
    %cst_107 = arith.constant 4.471500e-02 : f32
    %257 = vector.broadcast %cst_107 : f32 to vector<16x64xf32>
    %258 = arith.mulf %257, %256 : vector<16x64xf32>
    %259 = arith.addf %254, %258 : vector<16x64xf32>
    %cst_108 = arith.constant 0.797884583 : f32
    %260 = vector.broadcast %cst_108 : f32 to vector<16x64xf32>
    %261 = arith.mulf %260, %259 : vector<16x64xf32>
    %262 = math.tanh %261 : vector<16x64xf32>
    %cst_109 = arith.constant 1.000000e+00 : f32
    %263 = vector.broadcast %cst_109 : f32 to vector<16x64xf32>
    %264 = arith.addf %263, %262 : vector<16x64xf32>
    %cst_110 = arith.constant 5.000000e-01 : f32
    %265 = vector.broadcast %cst_110 : f32 to vector<16x64xf32>
    %266 = arith.mulf %265, %264 : vector<16x64xf32>
    %267 = arith.mulf %254, %266 : vector<16x64xf32>
    %268 = arith.truncf %267 : vector<16x64xf32> to vector<16x64xbf16>
    %c1_111 = arith.constant 1 : index
    %c0_112 = arith.constant 0 : index
    %c0_113 = arith.constant 0 : index
    %269 = vector.load %arg15[%c1_111, %c0_112, %c0_113] : memref<2x64x32xbf16, #tpu.memory_space<vmem>>, vector<1x64x32xbf16>
    %270 = vector.shape_cast %269 : vector<1x64x32xbf16> to vector<64x32xbf16>
    %cst_114 = arith.constant dense<0.000000e+00> : vector<16x32xf32>
    %271 = tpu.matmul %268, %270, %cst_114 {dimension_numbers = #tpu.dot_dimension_numbers<[1], [0], [0], [1], [0, 0, 1, 1], [], []>} : vector<16x64xbf16>, vector<64x32xbf16>, vector<16x32xf32> -> vector<16x32xf32>
    %c1_115 = arith.constant 1 : index
    %c0_116 = arith.constant 0 : index
    %c0_117 = arith.constant 0 : index
    %272 = vector.load %arg16[%c1_115, %c0_116, %c0_117] : memref<2x1x32xf32, #tpu.memory_space<vmem>>, vector<1x1x32xf32>
    %273 = vector.shape_cast %272 : vector<1x1x32xf32> to vector<1x32xf32>
    %274 = vector.broadcast %273 : vector<1x32xf32> to vector<16x32xf32>
    %275 = arith.addf %271, %274 : vector<16x32xf32>
    %276 = arith.addf %246, %275 : vector<16x32xf32>
    %c1_118 = arith.constant 1 : index
    %c0_119 = arith.constant 0 : index
    %c0_120 = arith.constant 0 : index
    %277 = vector.load %arg17[%c1_118, %c0_119, %c0_120] : memref<2x1x32xf32, #tpu.memory_space<vmem>>, vector<1x1x32xf32>
    %278 = vector.shape_cast %277 : vector<1x1x32xf32> to vector<1x32xf32>
    %c1_121 = arith.constant 1 : index
    %c0_122 = arith.constant 0 : index
    %c0_123 = arith.constant 0 : index
    %279 = vector.load %arg18[%c1_121, %c0_122, %c0_123] : memref<2x1x32xf32, #tpu.memory_space<vmem>>, vector<1x1x32xf32>
    %280 = vector.shape_cast %279 : vector<1x1x32xf32> to vector<1x32xf32>
    %cst_124 = arith.constant dense<0.000000e+00> : vector<16xf32>
    %281 = vector.multi_reduction <add>, %276, %cst_124 [1] : vector<16x32xf32> to vector<16xf32>
    %282 = vector.shape_cast %281 : vector<16xf32> to vector<16x1xf32>
    %cst_125 = arith.constant 3.200000e+01 : f32
    %283 = vector.broadcast %cst_125 : f32 to vector<16x1xf32>
    %284 = arith.divf %282, %283 : vector<16x1xf32>
    %285 = vector.broadcast %284 : vector<16x1xf32> to vector<16x32xf32>
    %286 = arith.subf %276, %285 : vector<16x32xf32>
    %287 = arith.mulf %286, %286 : vector<16x32xf32>
    %cst_126 = arith.constant dense<0.000000e+00> : vector<16xf32>
    %288 = vector.multi_reduction <add>, %287, %cst_126 [1] : vector<16x32xf32> to vector<16xf32>
    %289 = vector.shape_cast %288 : vector<16xf32> to vector<16x1xf32>
    %cst_127 = arith.constant 3.200000e+01 : f32
    %290 = vector.broadcast %cst_127 : f32 to vector<16x1xf32>
    %291 = arith.divf %289, %290 : vector<16x1xf32>
    %292 = vector.broadcast %284 : vector<16x1xf32> to vector<16x32xf32>
    %293 = arith.subf %276, %292 : vector<16x32xf32>
    %cst_128 = arith.constant 9.99999996E-13 : f32
    %294 = vector.broadcast %cst_128 : f32 to vector<16x1xf32>
    %295 = arith.addf %291, %294 : vector<16x1xf32>
    %296 = math.rsqrt %295 : vector<16x1xf32>
    %297 = vector.broadcast %296 : vector<16x1xf32> to vector<16x32xf32>
    %298 = arith.mulf %293, %297 : vector<16x32xf32>
    %299 = vector.broadcast %278 : vector<1x32xf32> to vector<16x32xf32>
    %300 = arith.mulf %298, %299 : vector<16x32xf32>
    %301 = vector.broadcast %280 : vector<1x32xf32> to vector<16x32xf32>
    %302 = arith.addf %300, %301 : vector<16x32xf32>
    %303 = vector.shape_cast %302 : vector<16x32xf32> to vector<2x8x32xf32>
    %c0_129 = arith.constant 0 : index
    %c0_130 = arith.constant 0 : index
    %304 = vector.load %arg19[%c0_129, %c0_130] : memref<1x32xf32, #tpu.memory_space<vmem>>, vector<1x32xf32>
    %305 = vector.shape_cast %304 : vector<1x32xf32> to vector<1x1x32xf32>
    %306 = vector.broadcast %305 : vector<1x1x32xf32> to vector<2x8x32xf32>
    %307 = arith.mulf %303, %306 : vector<2x8x32xf32>
    %cst_131 = arith.constant dense<0.000000e+00> : vector<2x8xf32>
    %308 = vector.multi_reduction <add>, %307, %cst_131 [2] : vector<2x8x32xf32> to vector<2x8xf32>
    %309 = vector.shape_cast %308 : vector<2x8xf32> to vector<2x8x1xf32>
    %c0_132 = arith.constant 0 : index
    %c0_133 = arith.constant 0 : index
    %310 = vector.load %arg20[%c0_132, %c0_133] : memref<1x1xf32, #tpu.memory_space<vmem>>, vector<1x1xf32>
    %311 = vector.shape_cast %310 : vector<1x1xf32> to vector<1x1x1xf32>
    %312 = vector.broadcast %311 : vector<1x1x1xf32> to vector<2x8x1xf32>
    %313 = arith.addf %309, %312 : vector<2x8x1xf32>
    %314 = tpu.iota {dimensions = array<i32: 1>} : vector<2x8x1xi32>
    %c0_134 = arith.constant 0 : index
    %c0_135 = arith.constant 0 : index
    %315 = vector.load %arg1[%c0_134, %c0_135] : memref<2x6xi32, #tpu.memory_space<vmem>>, vector<2x6xi32>
    %316 = vector.extract_strided_slice %315 {offsets = [0, 0], sizes = [2, 1], strides = [1, 1]} : vector<2x6xi32> to vector<2x1xi32>
    %317 = vector.shape_cast %316 : vector<2x1xi32> to vector<2x1x1xi32>
    %318 = vector.extract_strided_slice %315 {offsets = [0, 1], sizes = [2, 1], strides = [1, 1]} : vector<2x6xi32> to vector<2x1xi32>
    %319 = vector.shape_cast %318 : vector<2x1xi32> to vector<2x1x1xi32>
    %320 = vector.broadcast %317 : vector<2x1x1xi32> to vector<2x8x1xi32>
    %321 = arith.cmpi sge, %314, %320 : vector<2x8x1xi32>
    %322 = vector.broadcast %319 : vector<2x1x1xi32> to vector<2x8x1xi32>
    %323 = arith.cmpi sle, %314, %322 : vector<2x8x1xi32>
    %324 = arith.andi %321, %323 : vector<2x8x1xi1>
    %cst_136 = arith.constant -1.000000e+30 : f32
    %325 = vector.broadcast %cst_136 : f32 to vector<2x8x1xf32>
    %326 = arith.select %324, %313, %325 : vector<2x8x1xi1>, vector<2x8x1xf32>
    %cst_137 = arith.constant dense<0xFF800000> : vector<2x1xf32>
    %327 = vector.multi_reduction <maximumf>, %326, %cst_137 [1] : vector<2x8x1xf32> to vector<2x1xf32>
    %328 = vector.shape_cast %327 : vector<2x1xf32> to vector<2x1x1xf32>
    %329 = vector.broadcast %328 : vector<2x1x1xf32> to vector<2x8x1xf32>
    %330 = arith.subf %326, %329 : vector<2x8x1xf32>
    %331 = math.exp %330 : vector<2x8x1xf32>
    %332 = arith.extui %324 : vector<2x8x1xi1> to vector<2x8x1xi32>
    %333 = arith.sitofp %332 : vector<2x8x1xi32> to vector<2x8x1xf32>
    %334 = arith.mulf %331, %333 : vector<2x8x1xf32>
    %cst_138 = arith.constant dense<0.000000e+00> : vector<2x1xf32>
    %335 = vector.multi_reduction <add>, %334, %cst_138 [1] : vector<2x8x1xf32> to vector<2x1xf32>
    %336 = vector.shape_cast %335 : vector<2x1xf32> to vector<2x1x1xf32>
    %cst_139 = arith.constant 1.000000e-30 : f32
    %337 = vector.broadcast %cst_139 : f32 to vector<2x1x1xf32>
    %338 = arith.maximumf %336, %337 : vector<2x1x1xf32>
    %339 = tpu.reciprocal %338 {approx = true} : vector<2x1x1xf32> -> vector<2x1x1xf32>
    %340 = vector.broadcast %339 : vector<2x1x1xf32> to vector<2x8x1xf32>
    %341 = arith.mulf %334, %340 : vector<2x8x1xf32>
    %342 = vector.broadcast %341 : vector<2x8x1xf32> to vector<2x8x32xf32>
    %343 = arith.mulf %342, %303 : vector<2x8x32xf32>
    %cst_140 = arith.constant dense<0.000000e+00> : vector<2x32xf32>
    %344 = vector.multi_reduction <add>, %343, %cst_140 [1] : vector<2x8x32xf32> to vector<2x32xf32>
    %345 = vector.extract_strided_slice %315 {offsets = [0, 2], sizes = [2, 1], strides = [1, 1]} : vector<2x6xi32> to vector<2x1xi32>
    %346 = vector.shape_cast %345 : vector<2x1xi32> to vector<2x1x1xi32>
    %347 = vector.extract_strided_slice %315 {offsets = [0, 3], sizes = [2, 1], strides = [1, 1]} : vector<2x6xi32> to vector<2x1xi32>
    %348 = vector.shape_cast %347 : vector<2x1xi32> to vector<2x1x1xi32>
    %349 = vector.broadcast %346 : vector<2x1x1xi32> to vector<2x8x1xi32>
    %350 = arith.cmpi sge, %314, %349 : vector<2x8x1xi32>
    %351 = vector.broadcast %348 : vector<2x1x1xi32> to vector<2x8x1xi32>
    %352 = arith.cmpi sle, %314, %351 : vector<2x8x1xi32>
    %353 = arith.andi %350, %352 : vector<2x8x1xi1>
    %cst_141 = arith.constant -1.000000e+30 : f32
    %354 = vector.broadcast %cst_141 : f32 to vector<2x8x1xf32>
    %355 = arith.select %353, %313, %354 : vector<2x8x1xi1>, vector<2x8x1xf32>
    %cst_142 = arith.constant dense<0xFF800000> : vector<2x1xf32>
    %356 = vector.multi_reduction <maximumf>, %355, %cst_142 [1] : vector<2x8x1xf32> to vector<2x1xf32>
    %357 = vector.shape_cast %356 : vector<2x1xf32> to vector<2x1x1xf32>
    %358 = vector.broadcast %357 : vector<2x1x1xf32> to vector<2x8x1xf32>
    %359 = arith.subf %355, %358 : vector<2x8x1xf32>
    %360 = math.exp %359 : vector<2x8x1xf32>
    %361 = arith.extui %353 : vector<2x8x1xi1> to vector<2x8x1xi32>
    %362 = arith.sitofp %361 : vector<2x8x1xi32> to vector<2x8x1xf32>
    %363 = arith.mulf %360, %362 : vector<2x8x1xf32>
    %cst_143 = arith.constant dense<0.000000e+00> : vector<2x1xf32>
    %364 = vector.multi_reduction <add>, %363, %cst_143 [1] : vector<2x8x1xf32> to vector<2x1xf32>
    %365 = vector.shape_cast %364 : vector<2x1xf32> to vector<2x1x1xf32>
    %cst_144 = arith.constant 1.000000e-30 : f32
    %366 = vector.broadcast %cst_144 : f32 to vector<2x1x1xf32>
    %367 = arith.maximumf %365, %366 : vector<2x1x1xf32>
    %368 = tpu.reciprocal %367 {approx = true} : vector<2x1x1xf32> -> vector<2x1x1xf32>
    %369 = vector.broadcast %368 : vector<2x1x1xf32> to vector<2x8x1xf32>
    %370 = arith.mulf %363, %369 : vector<2x8x1xf32>
    %371 = vector.broadcast %370 : vector<2x8x1xf32> to vector<2x8x32xf32>
    %372 = arith.mulf %371, %303 : vector<2x8x32xf32>
    %cst_145 = arith.constant dense<0.000000e+00> : vector<2x32xf32>
    %373 = vector.multi_reduction <add>, %372, %cst_145 [1] : vector<2x8x32xf32> to vector<2x32xf32>
    %374 = vector.extract_strided_slice %315 {offsets = [0, 4], sizes = [2, 1], strides = [1, 1]} : vector<2x6xi32> to vector<2x1xi32>
    %375 = vector.shape_cast %374 : vector<2x1xi32> to vector<2x1x1xi32>
    %376 = vector.extract_strided_slice %315 {offsets = [0, 5], sizes = [2, 1], strides = [1, 1]} : vector<2x6xi32> to vector<2x1xi32>
    %377 = vector.shape_cast %376 : vector<2x1xi32> to vector<2x1x1xi32>
    %378 = vector.broadcast %375 : vector<2x1x1xi32> to vector<2x8x1xi32>
    %379 = arith.cmpi sge, %314, %378 : vector<2x8x1xi32>
    %380 = vector.broadcast %377 : vector<2x1x1xi32> to vector<2x8x1xi32>
    %381 = arith.cmpi sle, %314, %380 : vector<2x8x1xi32>
    %382 = arith.andi %379, %381 : vector<2x8x1xi1>
    %cst_146 = arith.constant -1.000000e+30 : f32
    %383 = vector.broadcast %cst_146 : f32 to vector<2x8x1xf32>
    %384 = arith.select %382, %313, %383 : vector<2x8x1xi1>, vector<2x8x1xf32>
    %cst_147 = arith.constant dense<0xFF800000> : vector<2x1xf32>
    %385 = vector.multi_reduction <maximumf>, %384, %cst_147 [1] : vector<2x8x1xf32> to vector<2x1xf32>
    %386 = vector.shape_cast %385 : vector<2x1xf32> to vector<2x1x1xf32>
    %387 = vector.broadcast %386 : vector<2x1x1xf32> to vector<2x8x1xf32>
    %388 = arith.subf %384, %387 : vector<2x8x1xf32>
    %389 = math.exp %388 : vector<2x8x1xf32>
    %390 = arith.extui %382 : vector<2x8x1xi1> to vector<2x8x1xi32>
    %391 = arith.sitofp %390 : vector<2x8x1xi32> to vector<2x8x1xf32>
    %392 = arith.mulf %389, %391 : vector<2x8x1xf32>
    %cst_148 = arith.constant dense<0.000000e+00> : vector<2x1xf32>
    %393 = vector.multi_reduction <add>, %392, %cst_148 [1] : vector<2x8x1xf32> to vector<2x1xf32>
    %394 = vector.shape_cast %393 : vector<2x1xf32> to vector<2x1x1xf32>
    %cst_149 = arith.constant 1.000000e-30 : f32
    %395 = vector.broadcast %cst_149 : f32 to vector<2x1x1xf32>
    %396 = arith.maximumf %394, %395 : vector<2x1x1xf32>
    %397 = tpu.reciprocal %396 {approx = true} : vector<2x1x1xf32> -> vector<2x1x1xf32>
    %398 = vector.broadcast %397 : vector<2x1x1xf32> to vector<2x8x1xf32>
    %399 = arith.mulf %392, %398 : vector<2x8x1xf32>
    %400 = vector.broadcast %399 : vector<2x8x1xf32> to vector<2x8x32xf32>
    %401 = arith.mulf %400, %303 : vector<2x8x32xf32>
    %cst_150 = arith.constant dense<0.000000e+00> : vector<2x32xf32>
    %402 = vector.multi_reduction <add>, %401, %cst_150 [1] : vector<2x8x32xf32> to vector<2x32xf32>
    %403 = vector.extract_strided_slice %303 {offsets = [0, 7, 0], sizes = [2, 1, 32], strides = [1, 1, 1]} : vector<2x8x32xf32> to vector<2x1x32xf32>
    %404 = vector.shape_cast %403 : vector<2x1x32xf32> to vector<2x32xf32>
    %405 = arith.subf %344, %373 : vector<2x32xf32>
    %406 = math.absf %405 : vector<2x32xf32>
    %407 = arith.subf %344, %402 : vector<2x32xf32>
    %408 = math.absf %407 : vector<2x32xf32>
    %409 = arith.subf %373, %402 : vector<2x32xf32>
    %410 = math.absf %409 : vector<2x32xf32>
    %411 = tpu.concatenate %404, %406, %408, %410 in 1 : vector<2x32xf32>, vector<2x32xf32>, vector<2x32xf32>, vector<2x32xf32> -> vector<2x128xf32>
    %412 = arith.truncf %411 : vector<2x128xf32> to vector<2x128xbf16>
    %c0_151 = arith.constant 0 : index
    %c0_152 = arith.constant 0 : index
    %413 = vector.load %arg21[%c0_151, %c0_152] : memref<128x4xbf16, #tpu.memory_space<vmem>>, vector<128x4xbf16>
    %cst_153 = arith.constant dense<0.000000e+00> : vector<2x4xf32>
    %414 = tpu.matmul %412, %413, %cst_153 {dimension_numbers = #tpu.dot_dimension_numbers<[1], [0], [0], [1], [0, 0, 1, 1], [], []>} : vector<2x128xbf16>, vector<128x4xbf16>, vector<2x4xf32> -> vector<2x4xf32>
    %c0_154 = arith.constant 0 : index
    %c0_155 = arith.constant 0 : index
    %415 = vector.load %arg22[%c0_154, %c0_155] : memref<1x4xf32, #tpu.memory_space<vmem>>, vector<1x4xf32>
    %416 = vector.broadcast %415 : vector<1x4xf32> to vector<2x4xf32>
    %417 = arith.addf %414, %416 : vector<2x4xf32>
    %cst_156 = arith.constant dense<0xFF800000> : vector<2xf32>
    %418 = vector.multi_reduction <maximumf>, %417, %cst_156 [1] : vector<2x4xf32> to vector<2xf32>
    %419 = vector.shape_cast %418 : vector<2xf32> to vector<2x1xf32>
    %420 = vector.broadcast %419 : vector<2x1xf32> to vector<2x4xf32>
    %421 = arith.subf %417, %420 : vector<2x4xf32>
    %422 = math.exp %421 : vector<2x4xf32>
    %cst_157 = arith.constant dense<0.000000e+00> : vector<2xf32>
    %423 = vector.multi_reduction <add>, %422, %cst_157 [1] : vector<2x4xf32> to vector<2xf32>
    %424 = vector.shape_cast %423 : vector<2xf32> to vector<2x1xf32>
    %425 = math.log %424 : vector<2x1xf32>
    %426 = arith.addf %419, %425 : vector<2x1xf32>
    %427 = tpu.iota {dimensions = array<i32: 1>} : vector<2x4xi32>
    %c0_158 = arith.constant 0 : index
    %c0_159 = arith.constant 0 : index
    %428 = vector.load %arg2[%c0_158, %c0_159] : memref<2x1xi32, #tpu.memory_space<vmem>>, vector<2x1xi32>
    %429 = vector.broadcast %428 : vector<2x1xi32> to vector<2x4xi32>
    %430 = arith.cmpi eq, %427, %429 : vector<2x4xi32>
    %cst_160 = arith.constant 0.000000e+00 : f32
    %431 = vector.broadcast %cst_160 : f32 to vector<2x4xf32>
    %432 = arith.select %430, %417, %431 : vector<2x4xi1>, vector<2x4xf32>
    %cst_161 = arith.constant dense<0.000000e+00> : vector<2xf32>
    %433 = vector.multi_reduction <add>, %432, %cst_161 [1] : vector<2x4xf32> to vector<2xf32>
    %434 = vector.shape_cast %433 : vector<2xf32> to vector<2x1xf32>
    %435 = arith.subf %426, %434 : vector<2x1xf32>
    %cst_162 = arith.constant dense<0.000000e+00> : vector<1xf32>
    %436 = vector.multi_reduction <add>, %435, %cst_162 [0] : vector<2x1xf32> to vector<1xf32>
    %437 = vector.shape_cast %436 : vector<1xf32> to vector<1x1xf32>
    %cst_163 = arith.constant 5.000000e-01 : f32
    %438 = vector.broadcast %cst_163 : f32 to vector<1x1xf32>
    %439 = arith.mulf %437, %438 : vector<1x1xf32>
    %440 = vector.shape_cast %439 : vector<1x1xf32> to vector<1x1xf32>
    %441 = vector.broadcast %440 : vector<1x1xf32> to vector<2x1xf32>
    %cst_164 = arith.constant 0.000000e+00 : f32
    %442 = vector.broadcast %cst_164 : f32 to vector<2x123xf32>
    %443 = tpu.concatenate %417, %441, %442 in 1 : vector<2x4xf32>, vector<2x1xf32>, vector<2x123xf32> -> vector<2x128xf32>
    %c0_165 = arith.constant 0 : index
    %c0_166 = arith.constant 0 : index
    %444 = vector.load %arg23[%c0_165, %c0_166] : memref<2x128xf32, #tpu.memory_space<vmem>>, vector<2x128xf32>
    tpu.vector_store %arg23[%c0_165, %c0_166], %443 {strides = array<i32>} : memref<2x128xf32, #tpu.memory_space<vmem>>, vector<2x128xf32>,
    return
  }
}

</mosaic_0001>

<llo_original>
// kernel: forward.1
$region0: #{forward.1}
  #allocation0 [shape = 'u32[]', space=smem, size = 0x4, offset = 0x4, fixed_abs, tag = 'smem constant byte address 0x4 - core index']
  #allocation1 [shape = 'u32[144,128]{1,0:T(1,128)}', space=vmem, size = 0x12000, scoped, tag = 'internal scratch']
  #allocation2 [shape = 'f32[1,1]{1,0:T(1,128)S(1)}', space=vmem, size = 0x200, scoped, tag = 'scoped memory for forward.1']
  %s0 = inlined_call_operand.vmem [shape: s32[16,1], index: 0, kind: input, shape index: {}]
  %s1 = inlined_call_operand.vmem [shape: s32[2,6], index: 1, kind: input, shape index: {}]
  %s2 = inlined_call_operand.vmem [shape: s32[2,1], index: 2, kind: input, shape index: {}]
  %s3 = inlined_call_operand.vmem [shape: bf16[64,32], index: 3, kind: input, shape index: {}]
  %s4 = inlined_call_operand.vmem [shape: f32[16,32], index: 4, kind: input, shape index: {}]
  %s5 = inlined_call_operand.vmem [shape: f32[1,32], index: 5, kind: input, shape index: {}]
  %s6 = inlined_call_operand.vmem [shape: f32[1,32], index: 6, kind: input, shape index: {}]
  %s7 = inlined_call_operand.vmem [shape: bf16[2,32,96], index: 7, kind: input, shape index: {}]
  %s8 = inlined_call_operand.vmem [shape: f32[2,1,96], index: 8, kind: input, shape index: {}]
  %s9 = inlined_call_operand.vmem [shape: bf16[2,32,32], index: 9, kind: input, shape index: {}]
  %s10 = inlined_call_operand.vmem [shape: f32[2,1,32], index: 10, kind: input, shape index: {}]
  %s11 = inlined_call_operand.vmem [shape: f32[2,1,32], index: 11, kind: input, shape index: {}]
  %s12 = inlined_call_operand.vmem [shape: f32[2,1,32], index: 12, kind: input, shape index: {}]
  %s13 = inlined_call_operand.vmem [shape: bf16[2,32,64], index: 13, kind: input, shape index: {}]
  %s14 = inlined_call_operand.vmem [shape: f32[2,1,64], index: 14, kind: input, shape index: {}]
  %s15 = inlined_call_operand.vmem [shape: bf16[2,64,32], index: 15, kind: input, shape index: {}]
  %s16 = inlined_call_operand.vmem [shape: f32[2,1,32], index: 16, kind: input, shape index: {}]
  %s17 = inlined_call_operand.vmem [shape: f32[2,1,32], index: 17, kind: input, shape index: {}]
  %s18 = inlined_call_operand.vmem [shape: f32[2,1,32], index: 18, kind: input, shape index: {}]
  %s19 = inlined_call_operand.vmem [shape: f32[1,32], index: 19, kind: input, shape index: {}]
  %s20 = inlined_call_operand.<no memory space> [shape: f32[1,1], index: 20, kind: input, shape index: {}]
  %s21 = inlined_call_operand.vmem [shape: bf16[128,4], index: 21, kind: input, shape index: {}]
  %s22 = inlined_call_operand.vmem [shape: f32[1,4], index: 22, kind: input, shape index: {}]
  %s23 = inlined_call_operand.vmem [shape: f32[2,128], index: 23, kind: output, shape index: {}]
  %s24 = sld [smem:[#allocation0]]
  $region102: #{forward.1} parent=0
    _
  %s26 = ssub.s32 1, %s24
  %s27 = scalar_select 0, %s26, %s24
  %v28 = vstv %s20
  %29 = vst [vmem:[#allocation2] sm:$0x1] %v28
  // Predicated region
  $region2: #{forward.1} parent=0 // pred_check
    _
  $region3: #{forward.1} parent=0 // pred_check_branch
    %31 = sbr.rel (0) target = $region5
  $region4: #{forward.1} parent=0 // pred_region
    _
  $region5: #{forward.1} parent=0 // pred_fallthru
    _
  // Predicated region
  $region6: #{forward.1} parent=0 // pred_check
    _
  $region7: #{forward.1} parent=0 // pred_check_branch
    %33 = sbr.rel (0) target = $region9
  $region8: #{forward.1} parent=0 // pred_region
    _
  $region9: #{forward.1} parent=0 // pred_fallthru
    _
  // Predicated region
  $region10: #{forward.1} parent=0 // pred_check
    _
  $region11: #{forward.1} parent=0 // pred_check_branch
    %35 = sbr.rel (0) target = $region13
  $region12: #{forward.1} parent=0 // pred_region
    _
  $region13: #{forward.1} parent=0 // pred_fallthru
    _
  // Predicated region
  $region14: #{forward.1} parent=0 // pred_check
    _
  $region15: #{forward.1} parent=0 // pred_check_branch
    %37 = sbr.rel (0) target = $region17
  $region16: #{forward.1} parent=0 // pred_region
    _
  $region17: #{forward.1} parent=0 // pred_fallthru
    _
  // Predicated region
  $region18: #{forward.1} parent=0 // pred_check
    _
  $region19: #{forward.1} parent=0 // pred_check_branch
    %39 = sbr.rel (0) target = $region21
  $region20: #{forward.1} parent=0 // pred_region
    _
  $region21: #{forward.1} parent=0 // pred_fallthru
    _
  // Predicated region
  $region22: #{forward.1} parent=0 // pred_check
    _
  $region23: #{forward.1} parent=0 // pred_check_branch
    %41 = sbr.rel (0) target = $region25
  $region24: #{forward.1} parent=0 // pred_region
    _
  $region25: #{forward.1} parent=0 // pred_fallthru
    _
  // Predicated region
  $region26: #{forward.1} parent=0 // pred_check
    _
  $region27: #{forward.1} parent=0 // pred_check_branch
    %43 = sbr.rel (0) target = $region29
  $region28: #{forward.1} parent=0 // pred_region
    _
  $region29: #{forward.1} parent=0 // pred_fallthru
    _
  // Predicated region
  $region30: #{forward.1} parent=0 // pred_check
    _
  $region31: #{forward.1} parent=0 // pred_check_branch
    %45 = sbr.rel (0) target = $region33
  $region32: #{forward.1} parent=0 // pred_region
    _
  $region33: #{forward.1} parent=0 // pred_fallthru
    _
  // Predicated region
  $region34: #{forward.1} parent=0 // pred_check
    _
  $region35: #{forward.1} parent=0 // pred_check_branch
    %47 = sbr.rel (0) target = $region37
  $region36: #{forward.1} parent=0 // pred_region
    _
  $region37: #{forward.1} parent=0 // pred_fallthru
    _
  // Predicated region
  $region38: #{forward.1} parent=0 // pred_check
    _
  $region39: #{forward.1} parent=0 // pred_check_branch
    %49 = sbr.rel (0) target = $region41
  $region40: #{forward.1} parent=0 // pred_region
    _
  $region41: #{forward.1} parent=0 // pred_fallthru
    _
  // Predicated region
  $region42: #{forward.1} parent=0 // pred_check
    _
  $region43: #{forward.1} parent=0 // pred_check_branch
    %51 = sbr.rel (0) target = $region45
  $region44: #{forward.1} parent=0 // pred_region
    _
  $region45: #{forward.1} parent=0 // pred_fallthru
    _
  // Predicated region
  $region46: #{forward.1} parent=0 // pred_check
    _
  $region47: #{forward.1} parent=0 // pred_check_branch
    %53 = sbr.rel (0) target = $region49
  $region48: #{forward.1} parent=0 // pred_region
    _
  $region49: #{forward.1} parent=0 // pred_fallthru
    _
  // Predicated region
  $region50: #{forward.1} parent=0 // pred_check
    _
  $region51: #{forward.1} parent=0 // pred_check_branch
    %55 = sbr.rel (0) target = $region53
  $region52: #{forward.1} parent=0 // pred_region
    _
  $region53: #{forward.1} parent=0 // pred_fallthru
    _
  // Predicated region
  $region54: #{forward.1} parent=0 // pred_check
    _
  $region55: #{forward.1} parent=0 // pred_check_branch
    %57 = sbr.rel (0) target = $region57
  $region56: #{forward.1} parent=0 // pred_region
    _
  $region57: #{forward.1} parent=0 // pred_fallthru
    _
  // Predicated region
  $region58: #{forward.1} parent=0 // pred_check
    _
  $region59: #{forward.1} parent=0 // pred_check_branch
    %59 = sbr.rel (0) target = $region61
  $region60: #{forward.1} parent=0 // pred_region
    _
  $region61: #{forward.1} parent=0 // pred_fallthru
    _
  // Predicated region
  $region62: #{forward.1} parent=0 // pred_check
    _
  $region63: #{forward.1} parent=0 // pred_check_branch
    %61 = sbr.rel (0) target = $region65
  $region64: #{forward.1} parent=0 // pred_region
    _
  $region65: #{forward.1} parent=0 // pred_fallthru
    _
  // Predicated region
  $region66: #{forward.1} parent=0 // pred_check
    _
  $region67: #{forward.1} parent=0 // pred_check_branch
    %63 = sbr.rel (0) target = $region69
  $region68: #{forward.1} parent=0 // pred_region
    _
  $region69: #{forward.1} parent=0 // pred_fallthru
    _
  // Predicated region
  $region70: #{forward.1} parent=0 // pred_check
    _
  $region71: #{forward.1} parent=0 // pred_check_branch
    %65 = sbr.rel (0) target = $region73
  $region72: #{forward.1} parent=0 // pred_region
    _
  $region73: #{forward.1} parent=0 // pred_fallthru
    _
  // Predicated region
  $region74: #{forward.1} parent=0 // pred_check
    _
  $region75: #{forward.1} parent=0 // pred_check_branch
    %67 = sbr.rel (0) target = $region77
  $region76: #{forward.1} parent=0 // pred_region
    _
  $region77: #{forward.1} parent=0 // pred_fallthru
    _
  // Predicated region
  $region78: #{forward.1} parent=0 // pred_check
    _
  $region79: #{forward.1} parent=0 // pred_check_branch
    %69 = sbr.rel (0) target = $region81
  $region80: #{forward.1} parent=0 // pred_region
    _
  $region81: #{forward.1} parent=0 // pred_fallthru
    _
  // Predicated region
  $region82: #{forward.1} parent=0 // pred_check
    _
  $region83: #{forward.1} parent=0 // pred_check_branch
    %71 = sbr.rel (0) target = $region85
  $region84: #{forward.1} parent=0 // pred_region
    _
  $region85: #{forward.1} parent=0 // pred_fallthru
    _
  // Predicated region
  $region86: #{forward.1} parent=0 // pred_check
    _
  $region87: #{forward.1} parent=0 // pred_check_branch
    %73 = sbr.rel (0) target = $region89
  $region88: #{forward.1} parent=0 // pred_region
    _
  $region89: #{forward.1} parent=0 // pred_fallthru
    _
  // Predicated region
  $region90: #{forward.1} parent=0 // pred_check
    _
  $region91: #{forward.1} parent=0 // pred_check_branch
    %75 = sbr.rel (0) target = $region93
  $region92: #{forward.1} parent=0 // pred_region
    _
  $region93: #{forward.1} parent=0 // pred_fallthru
    _
  %v77 = vld [vmem:[%s0] sm:$0xff]
  %v78 = vld [vmem:[%s0 + $0x8] sm:$0xff]
  %v79 = vlaneseq
  %v80 = vand.u32 %v79, 127
  %81 = vset.pattern.permute.xlu0 0
  %82 = vperm.xlu0 %81, %v77
  %v83 = vpop.permute.xlu0 %82
  %84 = vset.pattern.permute.xlu0 0
  %85 = vperm.xlu0 %84, %v78
  %v86 = vpop.permute.xlu0 %85
  %vm87 = vcmp.eq.s32.totalorder %v83, %v80
  %vm88 = vcmp.eq.s32.totalorder %v86, %v80
  %v89 = vsel %vm87, 1, 0
  %v90 = vsel %vm88, 1, 0
  %v91 = vcvt.s32.f32 %v89
  %v92 = vcvt.s32.f32 %v90
  %v93 = vpack.c.bf16 %v92, %v91
  %v94 = vld [vmem:[%s3] sm:$0xf]
  %v95 = vld [vmem:[%s3 + $0x4] sm:$0xf]
  %v96 = vld [vmem:[%s3 + $0x8] sm:$0xf]
  %v97 = vld [vmem:[%s3 + $0xc] sm:$0xf]
  %v98 = vld [vmem:[%s3 + $0x10] sm:$0xf]
  %v99 = vld [vmem:[%s3 + $0x14] sm:$0xf]
  %v100 = vld [vmem:[%s3 + $0x18] sm:$0xf]
  %v101 = vld [vmem:[%s3 + $0x1c] sm:$0xf]
  %v102 = vld [vmem:[%s4] sm:$0xff]
  %v103 = vld [vmem:[%s4 + $0x8] sm:$0xff]
  %v112 = vunpack.c.l.b16 %v94
  %v113 = vunpack.c.l.b16 %v95
  %v114 = vunpack.c.l.b16 %v96
  %v115 = vunpack.c.l.b16 %v97
  %v116 = vunpack.c.l.b16 %v98
  %v117 = vunpack.c.l.b16 %v99
  %v118 = vunpack.c.l.b16 %v100
  %v119 = vunpack.c.l.b16 %v101
  %v120 = vpack.c.b16 %v113, %v112
  %v121 = vpack.c.b16 %v115, %v114
  %v122 = vpack.c.b16 %v117, %v116
  %v123 = vpack.c.b16 %v119, %v118
  %vm128 = vcmask 523264
  %v130 = vsel %vm128, %v93, 0
  %132 = vmatprep.subr.bf16.mxu0 0
  %133 = vmatpush1.bf16.msra.mxu0 %v120
  %134 = vmatprep.subr.bf16.mxu0 0
  %135 = vmatpush1.bf16.msra.mxu0 %v121
  %136 = vmatprep.subr.bf16.mxu0 0
  %137 = vmatpush1.bf16.msra.mxu0 %v122
  %138 = vmatprep.subr.bf16.mxu0 0
  %139 = vmatpush1.bf16.msra.mxu0 %v123
  %140 = vmatprep.subr.bf16.mxu0 0
  %141 = vmatpush1.bf16.msra.mxu0 0
  %142 = vmatprep.subr.bf16.mxu0 0
  %143 = vmatpush1.bf16.msra.mxu0 0
  %144 = vmatprep.subr.bf16.mxu0 0
  %145 = vmatpush1.bf16.msra.mxu0 0
  %146 = vmatprep.subr.bf16.mxu0 0
  %147 = vmatpush1.bf16.msra.mxu0 0
  %148 = vmatprep.subr.bf16.mxu0 0
  %149 = vmatpush1.bf16.msra.mxu0 0
  %150 = vmatprep.subr.bf16.mxu0 0
  %151 = vmatpush1.bf16.msra.mxu0 0
  %152 = vmatprep.subr.bf16.mxu0 0
  %153 = vmatpush1.bf16.msra.mxu0 0
  %154 = vmatprep.subr.bf16.mxu0 0
  %155 = vmatpush1.bf16.msra.mxu0 0
  %156 = vmatprep.subr.bf16.mxu0 0
  %157 = vmatpush1.bf16.msra.mxu0 0
  %158 = vmatprep.subr.bf16.mxu0 0
  %159 = vmatpush1.bf16.msra.mxu0 0
  %160 = vmatprep.subr.bf16.mxu0 0
  %161 = vmatpush1.bf16.msra.mxu0 0
  %162 = vmatprep.subr.bf16.mxu0 0
  %163 = vmatpush1.bf16.msra.mxu0 0
  %164 = vmatprep.mubr.bf16.mxu0 0
  %165 = vmatmul.mubr.bf16.gmra.mrb[0].mxu0 %v130
  %v166 = vpop.f32.mrb[0].mxu0
  %v167 = vadd.f32 %v102, %v166
  %v168 = vpop.f32.mrb[0].mxu0
  %v169 = vpop.f32.mrb[0].mxu0
  %v170 = vadd.f32 %v103, %v169
  %v171 = vpop.f32.mrb[0].mxu0
  %172 = vdwg.mxu0
  %v173 = vld [vmem:[%s5] sm:$0x1]
  %v174 = vld [vmem:[%s6] sm:$0x1]
  %vm175 = vcmask 261120
  %v176 = vsel %vm175, %v167, 0.0
  %177 = vadd.xlane.f32.xlu0 %v176
  %v178 = vpop.xlane.xlu0 %177
  %v179 = vsel %vm175, %v170, 0.0
  %180 = vadd.xlane.f32.xlu0 %v179
  %v181 = vpop.xlane.xlu0 %180
  %v182 = vrcp.pop 32.0
  %v183 = vmul.f32 %v178, %v182
  %v184 = vmul.f32 %v181, %v182
  %v185 = vsub.f32 %v167, %v183
  %v186 = vsub.f32 %v170, %v184
  %v187 = vmul.f32 %v185, %v185
  %v188 = vmul.f32 %v186, %v186
  %v189 = vsel %vm175, %v187, 0.0
  %190 = vadd.xlane.f32.xlu0 %v189
  %v191 = vpop.xlane.xlu0 %190
  %v192 = vsel %vm175, %v188, 0.0
  %193 = vadd.xlane.f32.xlu0 %v192
  %v194 = vpop.xlane.xlu0 %193
  %v195 = vmul.f32 %v191, %v182
  %v196 = vmul.f32 %v194, %v182
  %v197 = vadd.f32 %v195, 1e-12
  %v198 = vadd.f32 %v196, 1e-12
  %v199 = vrsqrt.pop %v197
  %v200 = vrsqrt.pop %v198
  %v201 = vmul.f32 %v185, %v199
  %v202 = vmul.f32 %v186, %v200
  %v204 = vlaneseq
  %v205 = vshrl.u32 %v204, 7
  %v206 = vsub.s32 0, %v205
  %v207 = vrot.slane %v173, %v206
  %v209 = vmul.f32 %v201, %v207
  %v210 = vmul.f32 %v202, %v207
  %v212 = vlaneseq
  %v213 = vshrl.u32 %v212, 7
  %v214 = vsub.s32 0, %v213
  %v215 = vrot.slane %v174, %v214
  %v217 = vadd.f32 %v209, %v215
  %v218 = vadd.f32 %v210, %v215
  %v219 = vpack.c.bf16 %v218, %v217
  %v220 = vld [vmem:[%s7] sm:$0xf]
  %v221 = vld [vmem:[%s7 + $0x4] sm:$0xf]
  %v222 = vld [vmem:[%s7 + $0x8] sm:$0xf]
  %v223 = vld [vmem:[%s7 + $0xc] sm:$0xf]
  %v224 = vld [vmem:[%s8] sm:$0x1]
  %v226 = vlaneseq
  %v227 = vshrl.u32 %v226, 7
  %v228 = vsub.s32 0, %v227
  %v229 = vrot.slane %v224, %v228
  %v235 = vunpack.c.l.b16 %v220
  %v236 = vunpack.c.l.b16 %v221
  %v237 = vunpack.c.l.b16 %v222
  %v238 = vunpack.c.l.b16 %v223
  %v239 = vpack.c.b16 %v236, %v235
  %v240 = vpack.c.b16 %v238, %v237
  %v244 = vsel %vm175, %v219, 0
  %246 = vmatprep.subr.bf16.mxu0 0
  %247 = vmatpush1.bf16.msra.mxu0 %v239
  %248 = vmatprep.subr.bf16.mxu0 0
  %249 = vmatpush1.bf16.msra.mxu0 %v240
  %250 = vmatprep.subr.bf16.mxu0 0
  %251 = vmatpush1.bf16.msra.mxu0 0
  %252 = vmatprep.subr.bf16.mxu0 0
  %253 = vmatpush1.bf16.msra.mxu0 0
  %254 = vmatprep.subr.bf16.mxu0 0
  %255 = vmatpush1.bf16.msra.mxu0 0
  %256 = vmatprep.subr.bf16.mxu0 0
  %257 = vmatpush1.bf16.msra.mxu0 0
  %258 = vmatprep.subr.bf16.mxu0 0
  %259 = vmatpush1.bf16.msra.mxu0 0
  %260 = vmatprep.subr.bf16.mxu0 0
  %261 = vmatpush1.bf16.msra.mxu0 0
  %262 = vmatprep.subr.bf16.mxu0 0
  %263 = vmatpush1.bf16.msra.mxu0 0
  %264 = vmatprep.subr.bf16.mxu0 0
  %265 = vmatpush1.bf16.msra.mxu0 0
  %266 = vmatprep.subr.bf16.mxu0 0
  %267 = vmatpush1.bf16.msra.mxu0 0
  %268 = vmatprep.subr.bf16.mxu0 0
  %269 = vmatpush1.bf16.msra.mxu0 0
  %270 = vmatprep.subr.bf16.mxu0 0
  %271 = vmatpush1.bf16.msra.mxu0 0
  %272 = vmatprep.subr.bf16.mxu0 0
  %273 = vmatpush1.bf16.msra.mxu0 0
  %274 = vmatprep.subr.bf16.mxu0 0
  %275 = vmatpush1.bf16.msra.mxu0 0
  %276 = vmatprep.subr.bf16.mxu0 0
  %277 = vmatpush1.bf16.msra.mxu0 0
  %278 = vmatprep.mubr.bf16.mxu0 0
  %279 = vmatmul.mubr.bf16.gmra.mrb[0].mxu0 %v244
  %v280 = vpop.f32.mrb[0].mxu0
  %v281 = vadd.f32 %v229, %v280
  %v282 = vpop.f32.mrb[0].mxu0
  %v283 = vpop.f32.mrb[0].mxu0
  %v284 = vadd.f32 %v229, %v283
  %v285 = vpop.f32.mrb[0].mxu0
  %286 = vdwg.mxu0
  %289 = vrot.lane.b32.xlu0 %v281, 112
  %v290 = vpop.permute.xlu0 %289
  %291 = vrot.lane.b32.xlu0 %v284, 112
  %v292 = vpop.permute.xlu0 %291
  %v295 = vpack.c.bf16 %v281, %v281
  %v296 = vpack.c.bf16 %v284, %v284
  %v297 = vpack.c.bf16 %v290, %v290
  %v298 = vpack.c.bf16 %v292, %v292
  %300 = vrot.lane.b32.xlu0 %v295, 96
  %v301 = vpop.permute.xlu0 %300
  %vm302 = vcmask 130048
  %v304 = vsel %vm302, %v295, 0
  %v307 = vsel %vm302, %v301, 0
  %309 = vmatprep.subr.bf16.mxu0 0
  %310 = vmatpush1.bf16.xpose.msra.mxu0 %v307
  %311 = vmatprep.subr.bf16.mxu0 0
  %312 = vmatpush1.bf16.xpose.msra.mxu0 0
  %313 = vmatprep.subr.bf16.mxu0 0
  %314 = vmatpush1.bf16.xpose.msra.mxu0 0
  %315 = vmatprep.subr.bf16.mxu0 0
  %316 = vmatpush1.bf16.xpose.msra.mxu0 0
  %317 = vmatprep.subr.bf16.mxu0 0
  %318 = vmatpush1.bf16.xpose.msra.mxu0 0
  %319 = vmatprep.subr.bf16.mxu0 0
  %320 = vmatpush1.bf16.xpose.msra.mxu0 0
  %321 = vmatprep.subr.bf16.mxu0 0
  %322 = vmatpush1.bf16.xpose.msra.mxu0 0
  %323 = vmatprep.subr.bf16.mxu0 0
  %324 = vmatpush1.bf16.xpose.msra.mxu0 0
  %325 = vmatprep.subr.bf16.mxu0 0
  %326 = vmatpush1.bf16.xpose.msra.mxu0 0
  %327 = vmatprep.subr.bf16.mxu0 0
  %328 = vmatpush1.bf16.xpose.msra.mxu0 0
  %329 = vmatprep.subr.bf16.mxu0 0
  %330 = vmatpush1.bf16.xpose.msra.mxu0 0
  %331 = vmatprep.subr.bf16.mxu0 0
  %332 = vmatpush1.bf16.xpose.msra.mxu0 0
  %333 = vmatprep.subr.bf16.mxu0 0
  %334 = vmatpush1.bf16.xpose.msra.mxu0 0
  %335 = vmatprep.subr.bf16.mxu0 0
  %336 = vmatpush1.bf16.xpose.msra.mxu0 0
  %337 = vmatprep.subr.bf16.mxu0 0
  %338 = vmatpush1.bf16.xpose.msra.mxu0 0
  %339 = vmatprep.subr.bf16.mxu0 0
  %340 = vmatpush1.bf16.xpose.msra.mxu0 0
  %341 = vmatprep.mubr.bf16.mxu0 0
  %342 = vmatmul.mubr.bf16.gmra.mrb[0].mxu0 %v304
  %v343 = vpop.f32.mrb[0].mxu0
  %v344 = vadd.f32 0.0, %v343
  %v345 = vpop.f32.mrb[0].mxu0
  %v346 = vpop.f32.mrb[0].mxu0
  %v347 = vpop.f32.mrb[0].mxu0
  %348 = vdwg.mxu0
  %350 = vrot.lane.b32.xlu0 %v296, 96
  %v351 = vpop.permute.xlu0 %350
  %v353 = vsel %vm302, %v296, 0
  %v356 = vsel %vm302, %v351, 0
  %358 = vmatprep.subr.bf16.mxu0 0
  %359 = vmatpush1.bf16.xpose.msra.mxu0 %v356
  %360 = vmatprep.subr.bf16.mxu0 0
  %361 = vmatpush1.bf16.xpose.msra.mxu0 0
  %362 = vmatprep.subr.bf16.mxu0 0
  %363 = vmatpush1.bf16.xpose.msra.mxu0 0
  %364 = vmatprep.subr.bf16.mxu0 0
  %365 = vmatpush1.bf16.xpose.msra.mxu0 0
  %366 = vmatprep.subr.bf16.mxu0 0
  %367 = vmatpush1.bf16.xpose.msra.mxu0 0
  %368 = vmatprep.subr.bf16.mxu0 0
  %369 = vmatpush1.bf16.xpose.msra.mxu0 0
  %370 = vmatprep.subr.bf16.mxu0 0
  %371 = vmatpush1.bf16.xpose.msra.mxu0 0
  %372 = vmatprep.subr.bf16.mxu0 0
  %373 = vmatpush1.bf16.xpose.msra.mxu0 0
  %374 = vmatprep.subr.bf16.mxu0 0
  %375 = vmatpush1.bf16.xpose.msra.mxu0 0
  %376 = vmatprep.subr.bf16.mxu0 0
  %377 = vmatpush1.bf16.xpose.msra.mxu0 0
  %378 = vmatprep.subr.bf16.mxu0 0
  %379 = vmatpush1.bf16.xpose.msra.mxu0 0
  %380 = vmatprep.subr.bf16.mxu0 0
  %381 = vmatpush1.bf16.xpose.msra.mxu0 0
  %382 = vmatprep.subr.bf16.mxu0 0
  %383 = vmatpush1.bf16.xpose.msra.mxu0 0
  %384 = vmatprep.subr.bf16.mxu0 0
  %385 = vmatpush1.bf16.xpose.msra.mxu0 0
  %386 = vmatprep.subr.bf16.mxu0 0
  %387 = vmatpush1.bf16.xpose.msra.mxu0 0
  %388 = vmatprep.subr.bf16.mxu0 0
  %389 = vmatpush1.bf16.xpose.msra.mxu0 0
  %390 = vmatprep.mubr.bf16.mxu0 0
  %391 = vmatmul.mubr.bf16.gmra.mrb[0].mxu0 %v353
  %v392 = vpop.f32.mrb[0].mxu0
  %v393 = vadd.f32 0.0, %v392
  %v394 = vpop.f32.mrb[0].mxu0
  %v395 = vpop.f32.mrb[0].mxu0
  %v396 = vpop.f32.mrb[0].mxu0
  %397 = vdwg.mxu0
  %399 = vrot.lane.b32.xlu0 %v297, 96
  %v400 = vpop.permute.xlu0 %399
  %v402 = vsel %vm302, %v297, 0
  %v405 = vsel %vm302, %v400, 0
  %407 = vmatprep.subr.bf16.mxu0 0
  %408 = vmatpush1.bf16.xpose.msra.mxu0 %v405
  %409 = vmatprep.subr.bf16.mxu0 0
  %410 = vmatpush1.bf16.xpose.msra.mxu0 0
  %411 = vmatprep.subr.bf16.mxu0 0
  %412 = vmatpush1.bf16.xpose.msra.mxu0 0
  %413 = vmatprep.subr.bf16.mxu0 0
  %414 = vmatpush1.bf16.xpose.msra.mxu0 0
  %415 = vmatprep.subr.bf16.mxu0 0
  %416 = vmatpush1.bf16.xpose.msra.mxu0 0
  %417 = vmatprep.subr.bf16.mxu0 0
  %418 = vmatpush1.bf16.xpose.msra.mxu0 0
  %419 = vmatprep.subr.bf16.mxu0 0
  %420 = vmatpush1.bf16.xpose.msra.mxu0 0
  %421 = vmatprep.subr.bf16.mxu0 0
  %422 = vmatpush1.bf16.xpose.msra.mxu0 0
  %423 = vmatprep.subr.bf16.mxu0 0
  %424 = vmatpush1.bf16.xpose.msra.mxu0 0
  %425 = vmatprep.subr.bf16.mxu0 0
  %426 = vmatpush1.bf16.xpose.msra.mxu0 0
  %427 = vmatprep.subr.bf16.mxu0 0
  %428 = vmatpush1.bf16.xpose.msra.mxu0 0
  %429 = vmatprep.subr.bf16.mxu0 0
  %430 = vmatpush1.bf16.xpose.msra.mxu0 0
  %431 = vmatprep.subr.bf16.mxu0 0
  %432 = vmatpush1.bf16.xpose.msra.mxu0 0
  %433 = vmatprep.subr.bf16.mxu0 0
  %434 = vmatpush1.bf16.xpose.msra.mxu0 0
  %435 = vmatprep.subr.bf16.mxu0 0
  %436 = vmatpush1.bf16.xpose.msra.mxu0 0
  %437 = vmatprep.subr.bf16.mxu0 0
  %438 = vmatpush1.bf16.xpose.msra.mxu0 0
  %439 = vmatprep.mubr.bf16.mxu0 0
  %440 = vmatmul.mubr.bf16.gmra.mrb[0].mxu0 %v402
  %v441 = vpop.f32.mrb[0].mxu0
  %v442 = vadd.f32 0.0, %v441
  %v443 = vpop.f32.mrb[0].mxu0
  %v444 = vpop.f32.mrb[0].mxu0
  %v445 = vpop.f32.mrb[0].mxu0
  %446 = vdwg.mxu0
  %448 = vrot.lane.b32.xlu0 %v298, 96
  %v449 = vpop.permute.xlu0 %448
  %v451 = vsel %vm302, %v298, 0
  %v454 = vsel %vm302, %v449, 0
  %456 = vmatprep.subr.bf16.mxu0 0
  %457 = vmatpush1.bf16.xpose.msra.mxu0 %v454
  %458 = vmatprep.subr.bf16.mxu0 0
  %459 = vmatpush1.bf16.xpose.msra.mxu0 0
  %460 = vmatprep.subr.bf16.mxu0 0
  %461 = vmatpush1.bf16.xpose.msra.mxu0 0
  %462 = vmatprep.subr.bf16.mxu0 0
  %463 = vmatpush1.bf16.xpose.msra.mxu0 0
  %464 = vmatprep.subr.bf16.mxu0 0
  %465 = vmatpush1.bf16.xpose.msra.mxu0 0
  %466 = vmatprep.subr.bf16.mxu0 0
  %467 = vmatpush1.bf16.xpose.msra.mxu0 0
  %468 = vmatprep.subr.bf16.mxu0 0
  %469 = vmatpush1.bf16.xpose.msra.mxu0 0
  %470 = vmatprep.subr.bf16.mxu0 0
  %471 = vmatpush1.bf16.xpose.msra.mxu0 0
  %472 = vmatprep.subr.bf16.mxu0 0
  %473 = vmatpush1.bf16.xpose.msra.mxu0 0
  %474 = vmatprep.subr.bf16.mxu0 0
  %475 = vmatpush1.bf16.xpose.msra.mxu0 0
  %476 = vmatprep.subr.bf16.mxu0 0
  %477 = vmatpush1.bf16.xpose.msra.mxu0 0
  %478 = vmatprep.subr.bf16.mxu0 0
  %479 = vmatpush1.bf16.xpose.msra.mxu0 0
  %480 = vmatprep.subr.bf16.mxu0 0
  %481 = vmatpush1.bf16.xpose.msra.mxu0 0
  %482 = vmatprep.subr.bf16.mxu0 0
  %483 = vmatpush1.bf16.xpose.msra.mxu0 0
  %484 = vmatprep.subr.bf16.mxu0 0
  %485 = vmatpush1.bf16.xpose.msra.mxu0 0
  %486 = vmatprep.subr.bf16.mxu0 0
  %487 = vmatpush1.bf16.xpose.msra.mxu0 0
  %488 = vmatprep.mubr.bf16.mxu0 0
  %489 = vmatmul.mubr.bf16.gmra.mrb[0].mxu0 %v451
  %v490 = vpop.f32.mrb[0].mxu0
  %v491 = vadd.f32 0.0, %v490
  %v492 = vpop.f32.mrb[0].mxu0
  %v493 = vpop.f32.mrb[0].mxu0
  %v494 = vpop.f32.mrb[0].mxu0
  %495 = vdwg.mxu0
  %vm496 = vcmask 64512
  %v497 = vsel %vm496, %v344, -inf
  %498 = vmax.xlane.f32.xlu0 %v497
  %v499 = vpop.xlane.xlu0 %498
  %v500 = vsel %vm496, %v393, -inf
  %501 = vmax.xlane.f32.xlu0 %v500
  %v502 = vpop.xlane.xlu0 %501
  %v503 = vsel %vm496, %v442, -inf
  %504 = vmax.xlane.f32.xlu0 %v503
  %v505 = vpop.xlane.xlu0 %504
  %v506 = vsel %vm496, %v491, -inf
  %507 = vmax.xlane.f32.xlu0 %v506
  %v508 = vpop.xlane.xlu0 %507
  %v509 = vsub.f32 %v344, %v499
  %v510 = vsub.f32 %v393, %v502
  %v511 = vsub.f32 %v442, %v505
  %v512 = vsub.f32 %v491, %v508
  %v513 = vmul.f32 %v509, 1.442695
  %v514 = vpow.pop %v513
  %v515 = vmul.f32 %v510, 1.442695
  %v516 = vpow.pop %v515
  %v517 = vmul.f32 %v511, 1.442695
  %v518 = vpow.pop %v517
  %v519 = vmul.f32 %v512, 1.442695
  %v520 = vpow.pop %v519
  %v521 = vsel %vm496, %v514, 0.0
  %522 = vadd.xlane.f32.xlu0 %v521
  %v523 = vpop.xlane.xlu0 %522
  %v524 = vsel %vm496, %v516, 0.0
  %525 = vadd.xlane.f32.xlu0 %v524
  %v526 = vpop.xlane.xlu0 %525
  %v527 = vsel %vm496, %v518, 0.0
  %528 = vadd.xlane.f32.xlu0 %v527
  %v529 = vpop.xlane.xlu0 %528
  %v530 = vsel %vm496, %v520, 0.0
  %531 = vadd.xlane.f32.xlu0 %v530
  %v532 = vpop.xlane.xlu0 %531
  %v533 = vrcp.pop %v523
  %v534 = vrcp.pop %v526
  %v535 = vrcp.pop %v529
  %v536 = vrcp.pop %v532
  %v537 = vmul.f32 %v514, %v533
  %v538 = vmul.f32 %v516, %v534
  %v539 = vmul.f32 %v518, %v535
  %v540 = vmul.f32 %v520, %v536
  %v541 = vpack.c.bf16 %v537, %v537
  %v542 = vpack.c.bf16 %v538, %v538
  %v543 = vpack.c.bf16 %v539, %v539
  %v544 = vpack.c.bf16 %v540, %v540
  %545 = vrot.lane.b32.xlu0 %v295, 64
  %v546 = vpop.permute.xlu0 %545
  %v548 = vsel %vm496, %v541, 0
  %vm550 = vcmask 1043456
  %v552 = vsel %vm550, %v546, 0
  %554 = vmatprep.subr.bf16.mxu0 0
  %555 = vmatpush1.bf16.msra.mxu0 %v552
  %556 = vmatprep.subr.bf16.mxu0 0
  %557 = vmatpush1.bf16.msra.mxu0 0
  %558 = vmatprep.subr.bf16.mxu0 0
  %559 = vmatpush1.bf16.msra.mxu0 0
  %560 = vmatprep.subr.bf16.mxu0 0
  %561 = vmatpush1.bf16.msra.mxu0 0
  %562 = vmatprep.subr.bf16.mxu0 0
  %563 = vmatpush1.bf16.msra.mxu0 0
  %564 = vmatprep.subr.bf16.mxu0 0
  %565 = vmatpush1.bf16.msra.mxu0 0
  %566 = vmatprep.subr.bf16.mxu0 0
  %567 = vmatpush1.bf16.msra.mxu0 0
  %568 = vmatprep.subr.bf16.mxu0 0
  %569 = vmatpush1.bf16.msra.mxu0 0
  %570 = vmatprep.subr.bf16.mxu0 0
  %571 = vmatpush1.bf16.msra.mxu0 0
  %572 = vmatprep.subr.bf16.mxu0 0
  %573 = vmatpush1.bf16.msra.mxu0 0
  %574 = vmatprep.subr.bf16.mxu0 0
  %575 = vmatpush1.bf16.msra.mxu0 0
  %576 = vmatprep.subr.bf16.mxu0 0
  %577 = vmatpush1.bf16.msra.mxu0 0
  %578 = vmatprep.subr.bf16.mxu0 0
  %579 = vmatpush1.bf16.msra.mxu0 0
  %580 = vmatprep.subr.bf16.mxu0 0
  %581 = vmatpush1.bf16.msra.mxu0 0
  %582 = vmatprep.subr.bf16.mxu0 0
  %583 = vmatpush1.bf16.msra.mxu0 0
  %584 = vmatprep.subr.bf16.mxu0 0
  %585 = vmatpush1.bf16.msra.mxu0 0
  %586 = vmatprep.mubr.bf16.mxu0 0
  %587 = vmatmul.mubr.bf16.gmra.mrb[0].mxu0 %v548
  %v588 = vpop.f32.mrb[0].mxu0
  %v589 = vadd.f32 0.0, %v588
  %v590 = vpop.f32.mrb[0].mxu0
  %v591 = vpop.f32.mrb[0].mxu0
  %v592 = vpop.f32.mrb[0].mxu0
  %593 = vdwg.mxu0
  %594 = vrot.lane.b32.xlu0 %v296, 64
  %v595 = vpop.permute.xlu0 %594
  %v597 = vsel %vm496, %v542, 0
  %v600 = vsel %vm550, %v595, 0
  %602 = vmatprep.subr.bf16.mxu0 0
  %603 = vmatpush1.bf16.msra.mxu0 %v600
  %604 = vmatprep.subr.bf16.mxu0 0
  %605 = vmatpush1.bf16.msra.mxu0 0
  %606 = vmatprep.subr.bf16.mxu0 0
  %607 = vmatpush1.bf16.msra.mxu0 0
  %608 = vmatprep.subr.bf16.mxu0 0
  %609 = vmatpush1.bf16.msra.mxu0 0
  %610 = vmatprep.subr.bf16.mxu0 0
  %611 = vmatpush1.bf16.msra.mxu0 0
  %612 = vmatprep.subr.bf16.mxu0 0
  %613 = vmatpush1.bf16.msra.mxu0 0
  %614 = vmatprep.subr.bf16.mxu0 0
  %615 = vmatpush1.bf16.msra.mxu0 0
  %616 = vmatprep.subr.bf16.mxu0 0
  %617 = vmatpush1.bf16.msra.mxu0 0
  %618 = vmatprep.subr.bf16.mxu0 0
  %619 = vmatpush1.bf16.msra.mxu0 0
  %620 = vmatprep.subr.bf16.mxu0 0
  %621 = vmatpush1.bf16.msra.mxu0 0
  %622 = vmatprep.subr.bf16.mxu0 0
  %623 = vmatpush1.bf16.msra.mxu0 0
  %624 = vmatprep.subr.bf16.mxu0 0
  %625 = vmatpush1.bf16.msra.mxu0 0
  %626 = vmatprep.subr.bf16.mxu0 0
  %627 = vmatpush1.bf16.msra.mxu0 0
  %628 = vmatprep.subr.bf16.mxu0 0
  %629 = vmatpush1.bf16.msra.mxu0 0
  %630 = vmatprep.subr.bf16.mxu0 0
  %631 = vmatpush1.bf16.msra.mxu0 0
  %632 = vmatprep.subr.bf16.mxu0 0
  %633 = vmatpush1.bf16.msra.mxu0 0
  %634 = vmatprep.mubr.bf16.mxu0 0
  %635 = vmatmul.mubr.bf16.gmra.mrb[0].mxu0 %v597
  %v636 = vpop.f32.mrb[0].mxu0
  %v637 = vadd.f32 0.0, %v636
  %v638 = vpop.f32.mrb[0].mxu0
  %v639 = vpop.f32.mrb[0].mxu0
  %v640 = vpop.f32.mrb[0].mxu0
  %641 = vdwg.mxu0
  %642 = vrot.lane.b32.xlu0 %v297, 64
  %v643 = vpop.permute.xlu0 %642
  %v645 = vsel %vm496, %v543, 0
  %v648 = vsel %vm550, %v643, 0
  %650 = vmatprep.subr.bf16.mxu0 0
  %651 = vmatpush1.bf16.msra.mxu0 %v648
  %652 = vmatprep.subr.bf16.mxu0 0
  %653 = vmatpush1.bf16.msra.mxu0 0
  %654 = vmatprep.subr.bf16.mxu0 0
  %655 = vmatpush1.bf16.msra.mxu0 0
  %656 = vmatprep.subr.bf16.mxu0 0
  %657 = vmatpush1.bf16.msra.mxu0 0
  %658 = vmatprep.subr.bf16.mxu0 0
  %659 = vmatpush1.bf16.msra.mxu0 0
  %660 = vmatprep.subr.bf16.mxu0 0
  %661 = vmatpush1.bf16.msra.mxu0 0
  %662 = vmatprep.subr.bf16.mxu0 0
  %663 = vmatpush1.bf16.msra.mxu0 0
  %664 = vmatprep.subr.bf16.mxu0 0
  %665 = vmatpush1.bf16.msra.mxu0 0
  %666 = vmatprep.subr.bf16.mxu0 0
  %667 = vmatpush1.bf16.msra.mxu0 0
  %668 = vmatprep.subr.bf16.mxu0 0
  %669 = vmatpush1.bf16.msra.mxu0 0
  %670 = vmatprep.subr.bf16.mxu0 0
  %671 = vmatpush1.bf16.msra.mxu0 0
  %672 = vmatprep.subr.bf16.mxu0 0
  %673 = vmatpush1.bf16.msra.mxu0 0
  %674 = vmatprep.subr.bf16.mxu0 0
  %675 = vmatpush1.bf16.msra.mxu0 0
  %676 = vmatprep.subr.bf16.mxu0 0
  %677 = vmatpush1.bf16.msra.mxu0 0
  %678 = vmatprep.subr.bf16.mxu0 0
  %679 = vmatpush1.bf16.msra.mxu0 0
  %680 = vmatprep.subr.bf16.mxu0 0
  %681 = vmatpush1.bf16.msra.mxu0 0
  %682 = vmatprep.mubr.bf16.mxu0 0
  %683 = vmatmul.mubr.bf16.gmra.mrb[0].mxu0 %v645
  %v684 = vpop.f32.mrb[0].mxu0
  %v685 = vadd.f32 0.0, %v684
  %v686 = vpop.f32.mrb[0].mxu0
  %v687 = vpop.f32.mrb[0].mxu0
  %v688 = vpop.f32.mrb[0].mxu0
  %689 = vdwg.mxu0
  %690 = vrot.lane.b32.xlu0 %v298, 64
  %v691 = vpop.permute.xlu0 %690
  %v693 = vsel %vm496, %v544, 0
  %v696 = vsel %vm550, %v691, 0
  %698 = vmatprep.subr.bf16.mxu0 0
  %699 = vmatpush1.bf16.msra.mxu0 %v696
  %700 = vmatprep.subr.bf16.mxu0 0
  %701 = vmatpush1.bf16.msra.mxu0 0
  %702 = vmatprep.subr.bf16.mxu0 0
  %703 = vmatpush1.bf16.msra.mxu0 0
  %704 = vmatprep.subr.bf16.mxu0 0
  %705 = vmatpush1.bf16.msra.mxu0 0
  %706 = vmatprep.subr.bf16.mxu0 0
  %707 = vmatpush1.bf16.msra.mxu0 0
  %708 = vmatprep.subr.bf16.mxu0 0
  %709 = vmatpush1.bf16.msra.mxu0 0
  %710 = vmatprep.subr.bf16.mxu0 0
  %711 = vmatpush1.bf16.msra.mxu0 0
  %712 = vmatprep.subr.bf16.mxu0 0
  %713 = vmatpush1.bf16.msra.mxu0 0
  %714 = vmatprep.subr.bf16.mxu0 0
  %715 = vmatpush1.bf16.msra.mxu0 0
  %716 = vmatprep.subr.bf16.mxu0 0
  %717 = vmatpush1.bf16.msra.mxu0 0
  %718 = vmatprep.subr.bf16.mxu0 0
  %719 = vmatpush1.bf16.msra.mxu0 0
  %720 = vmatprep.subr.bf16.mxu0 0
  %721 = vmatpush1.bf16.msra.mxu0 0
  %722 = vmatprep.subr.bf16.mxu0 0
  %723 = vmatpush1.bf16.msra.mxu0 0
  %724 = vmatprep.subr.bf16.mxu0 0
  %725 = vmatpush1.bf16.msra.mxu0 0
  %726 = vmatprep.subr.bf16.mxu0 0
  %727 = vmatpush1.bf16.msra.mxu0 0
  %728 = vmatprep.subr.bf16.mxu0 0
  %729 = vmatpush1.bf16.msra.mxu0 0
  %730 = vmatprep.mubr.bf16.mxu0 0
  %731 = vmatmul.mubr.bf16.gmra.mrb[0].mxu0 %v693
  %v732 = vpop.f32.mrb[0].mxu0
  %v733 = vadd.f32 0.0, %v732
  %v734 = vpop.f32.mrb[0].mxu0
  %v735 = vpop.f32.mrb[0].mxu0
  %v736 = vpop.f32.mrb[0].mxu0
  %737 = vdwg.mxu0
  %740 = vrot.lane.b32.xlu0 %v685, 16
  %v741 = vpop.permute.xlu0 %740
  %742 = vrot.lane.b32.xlu0 %v733, 16
  %v743 = vpop.permute.xlu0 %742
  %v746 = vsel %vm302, %v589, %v741
  %v747 = vsel %vm302, %v637, %v743
  %v748 = vpack.c.bf16 %v747, %v746
  %v749 = vld [vmem:[%s9] sm:$0xf]
  %v750 = vld [vmem:[%s9 + $0x4] sm:$0xf]
  %v751 = vld [vmem:[%s9 + $0x8] sm:$0xf]
  %v752 = vld [vmem:[%s9 + $0xc] sm:$0xf]
  %v753 = vld [vmem:[%s10] sm:$0x1]
  %v755 = vlaneseq
  %v756 = vshrl.u32 %v755, 7
  %v757 = vsub.s32 0, %v756
  %v758 = vrot.slane %v753, %v757
  %v764 = vunpack.c.l.b16 %v749
  %v765 = vunpack.c.l.b16 %v750
  %v766 = vunpack.c.l.b16 %v751
  %v767 = vunpack.c.l.b16 %v752
  %v768 = vpack.c.b16 %v765, %v764
  %v769 = vpack.c.b16 %v767, %v766
  %v773 = vsel %vm175, %v748, 0
  %775 = vmatprep.subr.bf16.mxu0 0
  %776 = vmatpush1.bf16.msra.mxu0 %v768
  %777 = vmatprep.subr.bf16.mxu0 0
  %778 = vmatpush1.bf16.msra.mxu0 %v769
  %779 = vmatprep.subr.bf16.mxu0 0
  %780 = vmatpush1.bf16.msra.mxu0 0
  %781 = vmatprep.subr.bf16.mxu0 0
  %782 = vmatpush1.bf16.msra.mxu0 0
  %783 = vmatprep.subr.bf16.mxu0 0
  %784 = vmatpush1.bf16.msra.mxu0 0
  %785 = vmatprep.subr.bf16.mxu0 0
  %786 = vmatpush1.bf16.msra.mxu0 0
  %787 = vmatprep.subr.bf16.mxu0 0
  %788 = vmatpush1.bf16.msra.mxu0 0
  %789 = vmatprep.subr.bf16.mxu0 0
  %790 = vmatpush1.bf16.msra.mxu0 0
  %791 = vmatprep.subr.bf16.mxu0 0
  %792 = vmatpush1.bf16.msra.mxu0 0
  %793 = vmatprep.subr.bf16.mxu0 0
  %794 = vmatpush1.bf16.msra.mxu0 0
  %795 = vmatprep.subr.bf16.mxu0 0
  %796 = vmatpush1.bf16.msra.mxu0 0
  %797 = vmatprep.subr.bf16.mxu0 0
  %798 = vmatpush1.bf16.msra.mxu0 0
  %799 = vmatprep.subr.bf16.mxu0 0
  %800 = vmatpush1.bf16.msra.mxu0 0
  %801 = vmatprep.subr.bf16.mxu0 0
  %802 = vmatpush1.bf16.msra.mxu0 0
  %803 = vmatprep.subr.bf16.mxu0 0
  %804 = vmatpush1.bf16.msra.mxu0 0
  %805 = vmatprep.subr.bf16.mxu0 0
  %806 = vmatpush1.bf16.msra.mxu0 0
  %807 = vmatprep.mubr.bf16.mxu0 0
  %808 = vmatmul.mubr.bf16.gmra.mrb[0].mxu0 %v773
  %v809 = vpop.f32.mrb[0].mxu0
  %v810 = vadd.f32 %v758, %v809
  %v811 = vpop.f32.mrb[0].mxu0
  %v812 = vpop.f32.mrb[0].mxu0
  %v813 = vadd.f32 %v758, %v812
  %v814 = vpop.f32.mrb[0].mxu0
  %815 = vdwg.mxu0
  %v816 = vadd.f32 %v217, %v810
  %v817 = vadd.f32 %v218, %v813
  %v818 = vld [vmem:[%s11] sm:$0x1]
  %v819 = vld [vmem:[%s12] sm:$0x1]
  %v820 = vsel %vm175, %v816, 0.0
  %821 = vadd.xlane.f32.xlu0 %v820
  %v822 = vpop.xlane.xlu0 %821
  %v823 = vsel %vm175, %v817, 0.0
  %824 = vadd.xlane.f32.xlu0 %v823
  %v825 = vpop.xlane.xlu0 %824
  %v826 = vmul.f32 %v822, %v182
  %v827 = vmul.f32 %v825, %v182
  %v828 = vsub.f32 %v816, %v826
  %v829 = vsub.f32 %v817, %v827
  %v830 = vmul.f32 %v828, %v828
  %v831 = vmul.f32 %v829, %v829
  %v832 = vsel %vm175, %v830, 0.0
  %833 = vadd.xlane.f32.xlu0 %v832
  %v834 = vpop.xlane.xlu0 %833
  %v835 = vsel %vm175, %v831, 0.0
  %836 = vadd.xlane.f32.xlu0 %v835
  %v837 = vpop.xlane.xlu0 %836
  %v838 = vmul.f32 %v834, %v182
  %v839 = vmul.f32 %v837, %v182
  %v840 = vadd.f32 %v838, 1e-12
  %v841 = vadd.f32 %v839, 1e-12
  %v842 = vrsqrt.pop %v840
  %v843 = vrsqrt.pop %v841
  %v844 = vmul.f32 %v828, %v842
  %v845 = vmul.f32 %v829, %v843
  %v847 = vlaneseq
  %v848 = vshrl.u32 %v847, 7
  %v849 = vsub.s32 0, %v848
  %v850 = vrot.slane %v818, %v849
  %v852 = vmul.f32 %v844, %v850
  %v853 = vmul.f32 %v845, %v850
  %v855 = vlaneseq
  %v856 = vshrl.u32 %v855, 7
  %v857 = vsub.s32 0, %v856
  %v858 = vrot.slane %v819, %v857
  %v860 = vadd.f32 %v852, %v858
  %v861 = vadd.f32 %v853, %v858
  %v862 = vpack.c.bf16 %v861, %v860
  %v863 = vld [vmem:[%s13] sm:$0xf]
  %v864 = vld [vmem:[%s13 + $0x4] sm:$0xf]
  %v865 = vld [vmem:[%s13 + $0x8] sm:$0xf]
  %v866 = vld [vmem:[%s13 + $0xc] sm:$0xf]
  %v867 = vld [vmem:[%s14] sm:$0x1]
  %v869 = vlaneseq
  %v870 = vshrl.u32 %v869, 7
  %v871 = vsub.s32 0, %v870
  %v872 = vrot.slane %v867, %v871
  %v878 = vunpack.c.l.b16 %v863
  %v879 = vunpack.c.l.b16 %v864
  %v880 = vunpack.c.l.b16 %v865
  %v881 = vunpack.c.l.b16 %v866
  %v882 = vpack.c.b16 %v879, %v878
  %v883 = vpack.c.b16 %v881, %v880
  %v887 = vsel %vm175, %v862, 0
  %889 = vmatprep.subr.bf16.mxu0 0
  %890 = vmatpush1.bf16.msra.mxu0 %v882
  %891 = vmatprep.subr.bf16.mxu0 0
  %892 = vmatpush1.bf16.msra.mxu0 %v883
  %893 = vmatprep.subr.bf16.mxu0 0
  %894 = vmatpush1.bf16.msra.mxu0 0
  %895 = vmatprep.subr.bf16.mxu0 0
  %896 = vmatpush1.bf16.msra.mxu0 0
  %897 = vmatprep.subr.bf16.mxu0 0
  %898 = vmatpush1.bf16.msra.mxu0 0
  %899 = vmatprep.subr.bf16.mxu0 0
  %900 = vmatpush1.bf16.msra.mxu0 0
  %901 = vmatprep.subr.bf16.mxu0 0
  %902 = vmatpush1.bf16.msra.mxu0 0
  %903 = vmatprep.subr.bf16.mxu0 0
  %904 = vmatpush1.bf16.msra.mxu0 0
  %905 = vmatprep.subr.bf16.mxu0 0
  %906 = vmatpush1.bf16.msra.mxu0 0
  %907 = vmatprep.subr.bf16.mxu0 0
  %908 = vmatpush1.bf16.msra.mxu0 0
  %909 = vmatprep.subr.bf16.mxu0 0
  %910 = vmatpush1.bf16.msra.mxu0 0
  %911 = vmatprep.subr.bf16.mxu0 0
  %912 = vmatpush1.bf16.msra.mxu0 0
  %913 = vmatprep.subr.bf16.mxu0 0
  %914 = vmatpush1.bf16.msra.mxu0 0
  %915 = vmatprep.subr.bf16.mxu0 0
  %916 = vmatpush1.bf16.msra.mxu0 0
  %917 = vmatprep.subr.bf16.mxu0 0
  %918 = vmatpush1.bf16.msra.mxu0 0
  %919 = vmatprep.subr.bf16.mxu0 0
  %920 = vmatpush1.bf16.msra.mxu0 0
  %921 = vmatprep.mubr.bf16.mxu0 0
  %922 = vmatmul.mubr.bf16.gmra.mrb[0].mxu0 %v887
  %v923 = vpop.f32.mrb[0].mxu0
  %v924 = vadd.f32 %v872, %v923
  %v925 = vpop.f32.mrb[0].mxu0
  %v926 = vpop.f32.mrb[0].mxu0
  %v927 = vadd.f32 %v872, %v926
  %v928 = vpop.f32.mrb[0].mxu0
  %929 = vdwg.mxu0
  %v930 = vmul.f32 %v924, %v924
  %v931 = vmul.f32 %v927, %v927
  %v932 = vmul.f32 %v924, %v930
  %v933 = vmul.f32 %v927, %v931
  %v934 = vmul.f32 %v932, 0.044715
  %v935 = vmul.f32 %v933, 0.044715
  %v936 = vadd.f32 %v924, %v934
  %v937 = vadd.f32 %v927, %v935
  %v938 = vmul.f32 %v936, 0.7978846
  %v939 = vmul.f32 %v937, 0.7978846
  %v940 = vtanh.pop %v938
  %v941 = vtanh.pop %v939
  %v942 = vadd.f32 %v940, 1.0
  %v943 = vadd.f32 %v941, 1.0
  %v944 = vmul.f32 %v942, 0.5
  %v945 = vmul.f32 %v943, 0.5
  %v946 = vmul.f32 %v924, %v944
  %v947 = vmul.f32 %v927, %v945
  %v948 = vpack.c.bf16 %v947, %v946
  %v949 = vld [vmem:[%s15] sm:$0xf]
  %v950 = vld [vmem:[%s15 + $0x4] sm:$0xf]
  %v951 = vld [vmem:[%s15 + $0x8] sm:$0xf]
  %v952 = vld [vmem:[%s15 + $0xc] sm:$0xf]
  %v953 = vld [vmem:[%s15 + $0x10] sm:$0xf]
  %v954 = vld [vmem:[%s15 + $0x14] sm:$0xf]
  %v955 = vld [vmem:[%s15 + $0x18] sm:$0xf]
  %v956 = vld [vmem:[%s15 + $0x1c] sm:$0xf]
  %v957 = vld [vmem:[%s16] sm:$0x1]
  %v959 = vlaneseq
  %v960 = vshrl.u32 %v959, 7
  %v961 = vsub.s32 0, %v960
  %v962 = vrot.slane %v957, %v961
  %v972 = vunpack.c.l.b16 %v949
  %v973 = vunpack.c.l.b16 %v950
  %v974 = vunpack.c.l.b16 %v951
  %v975 = vunpack.c.l.b16 %v952
  %v976 = vunpack.c.l.b16 %v953
  %v977 = vunpack.c.l.b16 %v954
  %v978 = vunpack.c.l.b16 %v955
  %v979 = vunpack.c.l.b16 %v956
  %v980 = vpack.c.b16 %v973, %v972
  %v981 = vpack.c.b16 %v975, %v974
  %v982 = vpack.c.b16 %v977, %v976
  %v983 = vpack.c.b16 %v979, %v978
  %v989 = vsel %vm128, %v948, 0
  %991 = vmatprep.subr.bf16.mxu0 0
  %992 = vmatpush1.bf16.msra.mxu0 %v980
  %993 = vmatprep.subr.bf16.mxu0 0
  %994 = vmatpush1.bf16.msra.mxu0 %v981
  %995 = vmatprep.subr.bf16.mxu0 0
  %996 = vmatpush1.bf16.msra.mxu0 %v982
  %997 = vmatprep.subr.bf16.mxu0 0
  %998 = vmatpush1.bf16.msra.mxu0 %v983
  %999 = vmatprep.subr.bf16.mxu0 0
  %1000 = vmatpush1.bf16.msra.mxu0 0
  %1001 = vmatprep.subr.bf16.mxu0 0
  %1002 = vmatpush1.bf16.msra.mxu0 0
  %1003 = vmatprep.subr.bf16.mxu0 0
  %1004 = vmatpush1.bf16.msra.mxu0 0
  %1005 = vmatprep.subr.bf16.mxu0 0
  %1006 = vmatpush1.bf16.msra.mxu0 0
  %1007 = vmatprep.subr.bf16.mxu0 0
  %1008 = vmatpush1.bf16.msra.mxu0 0
  %1009 = vmatprep.subr.bf16.mxu0 0
  %1010 = vmatpush1.bf16.msra.mxu0 0
  %1011 = vmatprep.subr.bf16.mxu0 0
  %1012 = vmatpush1.bf16.msra.mxu0 0
  %1013 = vmatprep.subr.bf16.mxu0 0
  %1014 = vmatpush1.bf16.msra.mxu0 0
  %1015 = vmatprep.subr.bf16.mxu0 0
  %1016 = vmatpush1.bf16.msra.mxu0 0
  %1017 = vmatprep.subr.bf16.mxu0 0
  %1018 = vmatpush1.bf16.msra.mxu0 0
  %1019 = vmatprep.subr.bf16.mxu0 0
  %1020 = vmatpush1.bf16.msra.mxu0 0
  %1021 = vmatprep.subr.bf16.mxu0 0
  %1022 = vmatpush1.bf16.msra.mxu0 0
  %1023 = vmatprep.mubr.bf16.mxu0 0
  %1024 = vmatmul.mubr.bf16.gmra.mrb[0].mxu0 %v989
  %v1025 = vpop.f32.mrb[0].mxu0
  %v1026 = vadd.f32 %v962, %v1025
  %v1027 = vpop.f32.mrb[0].mxu0
  %v1028 = vpop.f32.mrb[0].mxu0
  %v1029 = vadd.f32 %v962, %v1028
  %v1030 = vpop.f32.mrb[0].mxu0
  %1031 = vdwg.mxu0
  %v1032 = vadd.f32 %v860, %v1026
  %v1033 = vadd.f32 %v861, %v1029
  %v1034 = vld [vmem:[%s17] sm:$0x1]
  %v1035 = vld [vmem:[%s18] sm:$0x1]
  %v1036 = vsel %vm175, %v1032, 0.0
  %1037 = vadd.xlane.f32.xlu0 %v1036
  %v1038 = vpop.xlane.xlu0 %1037
  %v1039 = vsel %vm175, %v1033, 0.0
  %1040 = vadd.xlane.f32.xlu0 %v1039
  %v1041 = vpop.xlane.xlu0 %1040
  %v1042 = vmul.f32 %v1038, %v182
  %v1043 = vmul.f32 %v1041, %v182
  %v1044 = vsub.f32 %v1032, %v1042
  %v1045 = vsub.f32 %v1033, %v1043
  %v1046 = vmul.f32 %v1044, %v1044
  %v1047 = vmul.f32 %v1045, %v1045
  %v1048 = vsel %vm175, %v1046, 0.0
  %1049 = vadd.xlane.f32.xlu0 %v1048
  %v1050 = vpop.xlane.xlu0 %1049
  %v1051 = vsel %vm175, %v1047, 0.0
  %1052 = vadd.xlane.f32.xlu0 %v1051
  %v1053 = vpop.xlane.xlu0 %1052
  %v1054 = vmul.f32 %v1050, %v182
  %v1055 = vmul.f32 %v1053, %v182
  %v1056 = vadd.f32 %v1054, 1e-12
  %v1057 = vadd.f32 %v1055, 1e-12
  %v1058 = vrsqrt.pop %v1056
  %v1059 = vrsqrt.pop %v1057
  %v1060 = vmul.f32 %v1044, %v1058
  %v1061 = vmul.f32 %v1045, %v1059
  %v1063 = vlaneseq
  %v1064 = vshrl.u32 %v1063, 7
  %v1065 = vsub.s32 0, %v1064
  %v1066 = vrot.slane %v1034, %v1065
  %v1068 = vmul.f32 %v1060, %v1066
  %v1069 = vmul.f32 %v1061, %v1066
  %v1071 = vlaneseq
  %v1072 = vshrl.u32 %v1071, 7
  %v1073 = vsub.s32 0, %v1072
  %v1074 = vrot.slane %v1035, %v1073
  %v1076 = vadd.f32 %v1068, %v1074
  %v1077 = vadd.f32 %v1069, %v1074
  %v1078 = vpack.c.bf16 %v1077, %v1076
  %s1079 = scalar_lea.vmem %s7, 16
  %v1080 = vld [vmem:[%s1079] sm:$0xf]
  %v1081 = vld [vmem:[%s1079 + $0x4] sm:$0xf]
  %v1082 = vld [vmem:[%s1079 + $0x8] sm:$0xf]
  %v1083 = vld [vmem:[%s1079 + $0xc] sm:$0xf]
  %s1084 = scalar_lea.vmem %s8, 1
  %v1085 = vld [vmem:[%s1084] sm:$0x1]
  %v1087 = vlaneseq
  %v1088 = vshrl.u32 %v1087, 7
  %v1089 = vsub.s32 0, %v1088
  %v1090 = vrot.slane %v1085, %v1089
  %v1096 = vunpack.c.l.b16 %v1080
  %v1097 = vunpack.c.l.b16 %v1081
  %v1098 = vunpack.c.l.b16 %v1082
  %v1099 = vunpack.c.l.b16 %v1083
  %v1100 = vpack.c.b16 %v1097, %v1096
  %v1101 = vpack.c.b16 %v1099, %v1098
  %v1105 = vsel %vm175, %v1078, 0
  %1107 = vmatprep.subr.bf16.mxu0 0
  %1108 = vmatpush1.bf16.msra.mxu0 %v1100
  %1109 = vmatprep.subr.bf16.mxu0 0
  %1110 = vmatpush1.bf16.msra.mxu0 %v1101
  %1111 = vmatprep.subr.bf16.mxu0 0
  %1112 = vmatpush1.bf16.msra.mxu0 0
  %1113 = vmatprep.subr.bf16.mxu0 0
  %1114 = vmatpush1.bf16.msra.mxu0 0
  %1115 = vmatprep.subr.bf16.mxu0 0
  %1116 = vmatpush1.bf16.msra.mxu0 0
  %1117 = vmatprep.subr.bf16.mxu0 0
  %1118 = vmatpush1.bf16.msra.mxu0 0
  %1119 = vmatprep.subr.bf16.mxu0 0
  %1120 = vmatpush1.bf16.msra.mxu0 0
  %1121 = vmatprep.subr.bf16.mxu0 0
  %1122 = vmatpush1.bf16.msra.mxu0 0
  %1123 = vmatprep.subr.bf16.mxu0 0
  %1124 = vmatpush1.bf16.msra.mxu0 0
  %1125 = vmatprep.subr.bf16.mxu0 0
  %1126 = vmatpush1.bf16.msra.mxu0 0
  %1127 = vmatprep.subr.bf16.mxu0 0
  %1128 = vmatpush1.bf16.msra.mxu0 0
  %1129 = vmatprep.subr.bf16.mxu0 0
  %1130 = vmatpush1.bf16.msra.mxu0 0
  %1131 = vmatprep.subr.bf16.mxu0 0
  %1132 = vmatpush1.bf16.msra.mxu0 0
  %1133 = vmatprep.subr.bf16.mxu0 0
  %1134 = vmatpush1.bf16.msra.mxu0 0
  %1135 = vmatprep.subr.bf16.mxu0 0
  %1136 = vmatpush1.bf16.msra.mxu0 0
  %1137 = vmatprep.subr.bf16.mxu0 0
  %1138 = vmatpush1.bf16.msra.mxu0 0
  %1139 = vmatprep.mubr.bf16.mxu0 0
  %1140 = vmatmul.mubr.bf16.gmra.mrb[0].mxu0 %v1105
  %v1141 = vpop.f32.mrb[0].mxu0
  %v1142 = vadd.f32 %v1090, %v1141
  %v1143 = vpop.f32.mrb[0].mxu0
  %v1144 = vpop.f32.mrb[0].mxu0
  %v1145 = vadd.f32 %v1090, %v1144
  %v1146 = vpop.f32.mrb[0].mxu0
  %1147 = vdwg.mxu0
  %1150 = vrot.lane.b32.xlu0 %v1142, 112
  %v1151 = vpop.permute.xlu0 %1150
  %1152 = vrot.lane.b32.xlu0 %v1145, 112
  %v1153 = vpop.permute.xlu0 %1152
  %v1156 = vpack.c.bf16 %v1142, %v1142
  %v1157 = vpack.c.bf16 %v1145, %v1145
  %v1158 = vpack.c.bf16 %v1151, %v1151
  %v1159 = vpack.c.bf16 %v1153, %v1153
  %1161 = vrot.lane.b32.xlu0 %v1156, 96
  %v1162 = vpop.permute.xlu0 %1161
  %v1164 = vsel %vm302, %v1156, 0
  %v1167 = vsel %vm302, %v1162, 0
  %1169 = vmatprep.subr.bf16.mxu0 0
  %1170 = vmatpush1.bf16.xpose.msra.mxu0 %v1167
  %1171 = vmatprep.subr.bf16.mxu0 0
  %1172 = vmatpush1.bf16.xpose.msra.mxu0 0
  %1173 = vmatprep.subr.bf16.mxu0 0
  %1174 = vmatpush1.bf16.xpose.msra.mxu0 0
  %1175 = vmatprep.subr.bf16.mxu0 0
  %1176 = vmatpush1.bf16.xpose.msra.mxu0 0
  %1177 = vmatprep.subr.bf16.mxu0 0
  %1178 = vmatpush1.bf16.xpose.msra.mxu0 0
  %1179 = vmatprep.subr.bf16.mxu0 0
  %1180 = vmatpush1.bf16.xpose.msra.mxu0 0
  %1181 = vmatprep.subr.bf16.mxu0 0
  %1182 = vmatpush1.bf16.xpose.msra.mxu0 0
  %1183 = vmatprep.subr.bf16.mxu0 0
  %1184 = vmatpush1.bf16.xpose.msra.mxu0 0
  %1185 = vmatprep.subr.bf16.mxu0 0
  %1186 = vmatpush1.bf16.xpose.msra.mxu0 0
  %1187 = vmatprep.subr.bf16.mxu0 0
  %1188 = vmatpush1.bf16.xpose.msra.mxu0 0
  %1189 = vmatprep.subr.bf16.mxu0 0
  %1190 = vmatpush1.bf16.xpose.msra.mxu0 0
  %1191 = vmatprep.subr.bf16.mxu0 0
  %1192 = vmatpush1.bf16.xpose.msra.mxu0 0
  %1193 = vmatprep.subr.bf16.mxu0 0
  %1194 = vmatpush1.bf16.xpose.msra.mxu0 0
  %1195 = vmatprep.subr.bf16.mxu0 0
  %1196 = vmatpush1.bf16.xpose.msra.mxu0 0
  %1197 = vmatprep.subr.bf16.mxu0 0
  %1198 = vmatpush1.bf16.xpose.msra.mxu0 0
  %1199 = vmatprep.subr.bf16.mxu0 0
  %1200 = vmatpush1.bf16.xpose.msra.mxu0 0
  %1201 = vmatprep.mubr.bf16.mxu0 0
  %1202 = vmatmul.mubr.bf16.gmra.mrb[0].mxu0 %v1164
  %v1203 = vpop.f32.mrb[0].mxu0
  %v1204 = vadd.f32 0.0, %v1203
  %v1205 = vpop.f32.mrb[0].mxu0
  %v1206 = vpop.f32.mrb[0].mxu0
  %v1207 = vpop.f32.mrb[0].mxu0
  %1208 = vdwg.mxu0
  %1210 = vrot.lane.b32.xlu0 %v1157, 96
  %v1211 = vpop.permute.xlu0 %1210
  %v1213 = vsel %vm302, %v1157, 0
  %v1216 = vsel %vm302, %v1211, 0
  %1218 = vmatprep.subr.bf16.mxu0 0
  %1219 = vmatpush1.bf16.xpose.msra.mxu0 %v1216
  %1220 = vmatprep.subr.bf16.mxu0 0
  %1221 = vmatpush1.bf16.xpose.msra.mxu0 0
  %1222 = vmatprep.subr.bf16.mxu0 0
  %1223 = vmatpush1.bf16.xpose.msra.mxu0 0
  %1224 = vmatprep.subr.bf16.mxu0 0
  %1225 = vmatpush1.bf16.xpose.msra.mxu0 0
  %1226 = vmatprep.subr.bf16.mxu0 0
  %1227 = vmatpush1.bf16.xpose.msra.mxu0 0
  %1228 = vmatprep.subr.bf16.mxu0 0
  %1229 = vmatpush1.bf16.xpose.msra.mxu0 0
  %1230 = vmatprep.subr.bf16.mxu0 0
  %1231 = vmatpush1.bf16.xpose.msra.mxu0 0
  %1232 = vmatprep.subr.bf16.mxu0 0
  %1233 = vmatpush1.bf16.xpose.msra.mxu0 0
  %1234 = vmatprep.subr.bf16.mxu0 0
  %1235 = vmatpush1.bf16.xpose.msra.mxu0 0
  %1236 = vmatprep.subr.bf16.mxu0 0
  %1237 = vmatpush1.bf16.xpose.msra.mxu0 0
  %1238 = vmatprep.subr.bf16.mxu0 0
  %1239 = vmatpush1.bf16.xpose.msra.mxu0 0
  %1240 = vmatprep.subr.bf16.mxu0 0
  %1241 = vmatpush1.bf16.xpose.msra.mxu0 0
  %1242 = vmatprep.subr.bf16.mxu0 0
  %1243 = vmatpush1.bf16.xpose.msra.mxu0 0
  %1244 = vmatprep.subr.bf16.mxu0 0
  %1245 = vmatpush1.bf16.xpose.msra.mxu0 0
  %1246 = vmatprep.subr.bf16.mxu0 0
  %1247 = vmatpush1.bf16.xpose.msra.mxu0 0
  %1248 = vmatprep.subr.bf16.mxu0 0
  %1249 = vmatpush1.bf16.xpose.msra.mxu0 0
  %1250 = vmatprep.mubr.bf16.mxu0 0
  %1251 = vmatmul.mubr.bf16.gmra.mrb[0].mxu0 %v1213
  %v1252 = vpop.f32.mrb[0].mxu0
  %v1253 = vadd.f32 0.0, %v1252
  %v1254 = vpop.f32.mrb[0].mxu0
  %v1255 = vpop.f32.mrb[0].mxu0
  %v1256 = vpop.f32.mrb[0].mxu0
  %1257 = vdwg.mxu0
  %1259 = vrot.lane.b32.xlu0 %v1158, 96
  %v1260 = vpop.permute.xlu0 %1259
  %v1262 = vsel %vm302, %v1158, 0
  %v1265 = vsel %vm302, %v1260, 0
  %1267 = vmatprep.subr.bf16.mxu0 0
  %1268 = vmatpush1.bf16.xpose.msra.mxu0 %v1265
  %1269 = vmatprep.subr.bf16.mxu0 0
  %1270 = vmatpush1.bf16.xpose.msra.mxu0 0
  %1271 = vmatprep.subr.bf16.mxu0 0
  %1272 = vmatpush1.bf16.xpose.msra.mxu0 0
  %1273 = vmatprep.subr.bf16.mxu0 0
  %1274 = vmatpush1.bf16.xpose.msra.mxu0 0
  %1275 = vmatprep.subr.bf16.mxu0 0
  %1276 = vmatpush1.bf16.xpose.msra.mxu0 0
  %1277 = vmatprep.subr.bf16.mxu0 0
  %1278 = vmatpush1.bf16.xpose.msra.mxu0 0
  %1279 = vmatprep.subr.bf16.mxu0 0
  %1280 = vmatpush1.bf16.xpose.msra.mxu0 0
  %1281 = vmatprep.subr.bf16.mxu0 0
  %1282 = vmatpush1.bf16.xpose.msra.mxu0 0
  %1283 = vmatprep.subr.bf16.mxu0 0
  %1284 = vmatpush1.bf16.xpose.msra.mxu0 0
  %1285 = vmatprep.subr.bf16.mxu0 0
  %1286 = vmatpush1.bf16.xpose.msra.mxu0 0
  %1287 = vmatprep.subr.bf16.mxu0 0
  %1288 = vmatpush1.bf16.xpose.msra.mxu0 0
  %1289 = vmatprep.subr.bf16.mxu0 0
  %1290 = vmatpush1.bf16.xpose.msra.mxu0 0
  %1291 = vmatprep.subr.bf16.mxu0 0
  %1292 = vmatpush1.bf16.xpose.msra.mxu0 0
  %1293 = vmatprep.subr.bf16.mxu0 0
  %1294 = vmatpush1.bf16.xpose.msra.mxu0 0
  %1295 = vmatprep.subr.bf16.mxu0 0
  %1296 = vmatpush1.bf16.xpose.msra.mxu0 0
  %1297 = vmatprep.subr.bf16.mxu0 0
  %1298 = vmatpush1.bf16.xpose.msra.mxu0 0
  %1299 = vmatprep.mubr.bf16.mxu0 0
  %1300 = vmatmul.mubr.bf16.gmra.mrb[0].mxu0 %v1262
  %v1301 = vpop.f32.mrb[0].mxu0
  %v1302 = vadd.f32 0.0, %v1301
  %v1303 = vpop.f32.mrb[0].mxu0
  %v1304 = vpop.f32.mrb[0].mxu0
  %v1305 = vpop.f32.mrb[0].mxu0
  %1306 = vdwg.mxu0
  %1308 = vrot.lane.b32.xlu0 %v1159, 96
  %v1309 = vpop.permute.xlu0 %1308
  %v1311 = vsel %vm302, %v1159, 0
  %v1314 = vsel %vm302, %v1309, 0
  %1316 = vmatprep.subr.bf16.mxu0 0
  %1317 = vmatpush1.bf16.xpose.msra.mxu0 %v1314
  %1318 = vmatprep.subr.bf16.mxu0 0
  %1319 = vmatpush1.bf16.xpose.msra.mxu0 0
  %1320 = vmatprep.subr.bf16.mxu0 0
  %1321 = vmatpush1.bf16.xpose.msra.mxu0 0
  %1322 = vmatprep.subr.bf16.mxu0 0
  %1323 = vmatpush1.bf16.xpose.msra.mxu0 0
  %1324 = vmatprep.subr.bf16.mxu0 0
  %1325 = vmatpush1.bf16.xpose.msra.mxu0 0
  %1326 = vmatprep.subr.bf16.mxu0 0
  %1327 = vmatpush1.bf16.xpose.msra.mxu0 0
  %1328 = vmatprep.subr.bf16.mxu0 0
  %1329 = vmatpush1.bf16.xpose.msra.mxu0 0
  %1330 = vmatprep.subr.bf16.mxu0 0
  %1331 = vmatpush1.bf16.xpose.msra.mxu0 0
  %1332 = vmatprep.subr.bf16.mxu0 0
  %1333 = vmatpush1.bf16.xpose.msra.mxu0 0
  %1334 = vmatprep.subr.bf16.mxu0 0
  %1335 = vmatpush1.bf16.xpose.msra.mxu0 0
  %1336 = vmatprep.subr.bf16.mxu0 0
  %1337 = vmatpush1.bf16.xpose.msra.mxu0 0
  %1338 = vmatprep.subr.bf16.mxu0 0
  %1339 = vmatpush1.bf16.xpose.msra.mxu0 0
  %1340 = vmatprep.subr.bf16.mxu0 0
  %1341 = vmatpush1.bf16.xpose.msra.mxu0 0
  %1342 = vmatprep.subr.bf16.mxu0 0
  %1343 = vmatpush1.bf16.xpose.msra.mxu0 0
  %1344 = vmatprep.subr.bf16.mxu0 0
  %1345 = vmatpush1.bf16.xpose.msra.mxu0 0
  %1346 = vmatprep.subr.bf16.mxu0 0
  %1347 = vmatpush1.bf16.xpose.msra.mxu0 0
  %1348 = vmatprep.mubr.bf16.mxu0 0
  %1349 = vmatmul.mubr.bf16.gmra.mrb[0].mxu0 %v1311
  %v1350 = vpop.f32.mrb[0].mxu0
  %v1351 = vadd.f32 0.0, %v1350
  %v1352 = vpop.f32.mrb[0].mxu0
  %v1353 = vpop.f32.mrb[0].mxu0
  %v1354 = vpop.f32.mrb[0].mxu0
  %1355 = vdwg.mxu0
  %v1356 = vsel %vm496, %v1204, -inf
  %1357 = vmax.xlane.f32.xlu0 %v1356
  %v1358 = vpop.xlane.xlu0 %1357
  %v1359 = vsel %vm496, %v1253, -inf
  %1360 = vmax.xlane.f32.xlu0 %v1359
  %v1361 = vpop.xlane.xlu0 %1360
  %v1362 = vsel %vm496, %v1302, -inf
  %1363 = vmax.xlane.f32.xlu0 %v1362
  %v1364 = vpop.xlane.xlu0 %1363
  %v1365 = vsel %vm496, %v1351, -inf
  %1366 = vmax.xlane.f32.xlu0 %v1365
  %v1367 = vpop.xlane.xlu0 %1366
  %v1368 = vsub.f32 %v1204, %v1358
  %v1369 = vsub.f32 %v1253, %v1361
  %v1370 = vsub.f32 %v1302, %v1364
  %v1371 = vsub.f32 %v1351, %v1367
  %v1372 = vmul.f32 %v1368, 1.442695
  %v1373 = vpow.pop %v1372
  %v1374 = vmul.f32 %v1369, 1.442695
  %v1375 = vpow.pop %v1374
  %v1376 = vmul.f32 %v1370, 1.442695
  %v1377 = vpow.pop %v1376
  %v1378 = vmul.f32 %v1371, 1.442695
  %v1379 = vpow.pop %v1378
  %v1380 = vsel %vm496, %v1373, 0.0
  %1381 = vadd.xlane.f32.xlu0 %v1380
  %v1382 = vpop.xlane.xlu0 %1381
  %v1383 = vsel %vm496, %v1375, 0.0
  %1384 = vadd.xlane.f32.xlu0 %v1383
  %v1385 = vpop.xlane.xlu0 %1384
  %v1386 = vsel %vm496, %v1377, 0.0
  %1387 = vadd.xlane.f32.xlu0 %v1386
  %v1388 = vpop.xlane.xlu0 %1387
  %v1389 = vsel %vm496, %v1379, 0.0
  %1390 = vadd.xlane.f32.xlu0 %v1389
  %v1391 = vpop.xlane.xlu0 %1390
  %v1392 = vrcp.pop %v1382
  %v1393 = vrcp.pop %v1385
  %v1394 = vrcp.pop %v1388
  %v1395 = vrcp.pop %v1391
  %v1396 = vmul.f32 %v1373, %v1392
  %v1397 = vmul.f32 %v1375, %v1393
  %v1398 = vmul.f32 %v1377, %v1394
  %v1399 = vmul.f32 %v1379, %v1395
  %v1400 = vpack.c.bf16 %v1396, %v1396
  %v1401 = vpack.c.bf16 %v1397, %v1397
  %v1402 = vpack.c.bf16 %v1398, %v1398
  %v1403 = vpack.c.bf16 %v1399, %v1399
  %1404 = vrot.lane.b32.xlu0 %v1156, 64
  %v1405 = vpop.permute.xlu0 %1404
  %v1407 = vsel %vm496, %v1400, 0
  %v1410 = vsel %vm550, %v1405, 0
  %1412 = vmatprep.subr.bf16.mxu0 0
  %1413 = vmatpush1.bf16.msra.mxu0 %v1410
  %1414 = vmatprep.subr.bf16.mxu0 0
  %1415 = vmatpush1.bf16.msra.mxu0 0
  %1416 = vmatprep.subr.bf16.mxu0 0
  %1417 = vmatpush1.bf16.msra.mxu0 0
  %1418 = vmatprep.subr.bf16.mxu0 0
  %1419 = vmatpush1.bf16.msra.mxu0 0
  %1420 = vmatprep.subr.bf16.mxu0 0
  %1421 = vmatpush1.bf16.msra.mxu0 0
  %1422 = vmatprep.subr.bf16.mxu0 0
  %1423 = vmatpush1.bf16.msra.mxu0 0
  %1424 = vmatprep.subr.bf16.mxu0 0
  %1425 = vmatpush1.bf16.msra.mxu0 0
  %1426 = vmatprep.subr.bf16.mxu0 0
  %1427 = vmatpush1.bf16.msra.mxu0 0
  %1428 = vmatprep.subr.bf16.mxu0 0
  %1429 = vmatpush1.bf16.msra.mxu0 0
  %1430 = vmatprep.subr.bf16.mxu0 0
  %1431 = vmatpush1.bf16.msra.mxu0 0
  %1432 = vmatprep.subr.bf16.mxu0 0
  %1433 = vmatpush1.bf16.msra.mxu0 0
  %1434 = vmatprep.subr.bf16.mxu0 0
  %1435 = vmatpush1.bf16.msra.mxu0 0
  %1436 = vmatprep.subr.bf16.mxu0 0
  %1437 = vmatpush1.bf16.msra.mxu0 0
  %1438 = vmatprep.subr.bf16.mxu0 0
  %1439 = vmatpush1.bf16.msra.mxu0 0
  %1440 = vmatprep.subr.bf16.mxu0 0
  %1441 = vmatpush1.bf16.msra.mxu0 0
  %1442 = vmatprep.subr.bf16.mxu0 0
  %1443 = vmatpush1.bf16.msra.mxu0 0
  %1444 = vmatprep.mubr.bf16.mxu0 0
  %1445 = vmatmul.mubr.bf16.gmra.mrb[0].mxu0 %v1407
  %v1446 = vpop.f32.mrb[0].mxu0
  %v1447 = vadd.f32 0.0, %v1446
  %v1448 = vpop.f32.mrb[0].mxu0
  %v1449 = vpop.f32.mrb[0].mxu0
  %v1450 = vpop.f32.mrb[0].mxu0
  %1451 = vdwg.mxu0
  %1452 = vrot.lane.b32.xlu0 %v1157, 64
  %v1453 = vpop.permute.xlu0 %1452
  %v1455 = vsel %vm496, %v1401, 0
  %v1458 = vsel %vm550, %v1453, 0
  %1460 = vmatprep.subr.bf16.mxu0 0
  %1461 = vmatpush1.bf16.msra.mxu0 %v1458
  %1462 = vmatprep.subr.bf16.mxu0 0
  %1463 = vmatpush1.bf16.msra.mxu0 0
  %1464 = vmatprep.subr.bf16.mxu0 0
  %1465 = vmatpush1.bf16.msra.mxu0 0
  %1466 = vmatprep.subr.bf16.mxu0 0
  %1467 = vmatpush1.bf16.msra.mxu0 0
  %1468 = vmatprep.subr.bf16.mxu0 0
  %1469 = vmatpush1.bf16.msra.mxu0 0
  %1470 = vmatprep.subr.bf16.mxu0 0
  %1471 = vmatpush1.bf16.msra.mxu0 0
  %1472 = vmatprep.subr.bf16.mxu0 0
  %1473 = vmatpush1.bf16.msra.mxu0 0
  %1474 = vmatprep.subr.bf16.mxu0 0
  %1475 = vmatpush1.bf16.msra.mxu0 0
  %1476 = vmatprep.subr.bf16.mxu0 0
  %1477 = vmatpush1.bf16.msra.mxu0 0
  %1478 = vmatprep.subr.bf16.mxu0 0
  %1479 = vmatpush1.bf16.msra.mxu0 0
  %1480 = vmatprep.subr.bf16.mxu0 0
  %1481 = vmatpush1.bf16.msra.mxu0 0
  %1482 = vmatprep.subr.bf16.mxu0 0
  %1483 = vmatpush1.bf16.msra.mxu0 0
  %1484 = vmatprep.subr.bf16.mxu0 0
  %1485 = vmatpush1.bf16.msra.mxu0 0
  %1486 = vmatprep.subr.bf16.mxu0 0
  %1487 = vmatpush1.bf16.msra.mxu0 0
  %1488 = vmatprep.subr.bf16.mxu0 0
  %1489 = vmatpush1.bf16.msra.mxu0 0
  %1490 = vmatprep.subr.bf16.mxu0 0
  %1491 = vmatpush1.bf16.msra.mxu0 0
  %1492 = vmatprep.mubr.bf16.mxu0 0
  %1493 = vmatmul.mubr.bf16.gmra.mrb[0].mxu0 %v1455
  %v1494 = vpop.f32.mrb[0].mxu0
  %v1495 = vadd.f32 0.0, %v1494
  %v1496 = vpop.f32.mrb[0].mxu0
  %v1497 = vpop.f32.mrb[0].mxu0
  %v1498 = vpop.f32.mrb[0].mxu0
  %1499 = vdwg.mxu0
  %1500 = vrot.lane.b32.xlu0 %v1158, 64
  %v1501 = vpop.permute.xlu0 %1500
  %v1503 = vsel %vm496, %v1402, 0
  %v1506 = vsel %vm550, %v1501, 0
  %1508 = vmatprep.subr.bf16.mxu0 0
  %1509 = vmatpush1.bf16.msra.mxu0 %v1506
  %1510 = vmatprep.subr.bf16.mxu0 0
  %1511 = vmatpush1.bf16.msra.mxu0 0
  %1512 = vmatprep.subr.bf16.mxu0 0
  %1513 = vmatpush1.bf16.msra.mxu0 0
  %1514 = vmatprep.subr.bf16.mxu0 0
  %1515 = vmatpush1.bf16.msra.mxu0 0
  %1516 = vmatprep.subr.bf16.mxu0 0
  %1517 = vmatpush1.bf16.msra.mxu0 0
  %1518 = vmatprep.subr.bf16.mxu0 0
  %1519 = vmatpush1.bf16.msra.mxu0 0
  %1520 = vmatprep.subr.bf16.mxu0 0
  %1521 = vmatpush1.bf16.msra.mxu0 0
  %1522 = vmatprep.subr.bf16.mxu0 0
  %1523 = vmatpush1.bf16.msra.mxu0 0
  %1524 = vmatprep.subr.bf16.mxu0 0
  %1525 = vmatpush1.bf16.msra.mxu0 0
  %1526 = vmatprep.subr.bf16.mxu0 0
  %1527 = vmatpush1.bf16.msra.mxu0 0
  %1528 = vmatprep.subr.bf16.mxu0 0
  %1529 = vmatpush1.bf16.msra.mxu0 0
  %1530 = vmatprep.subr.bf16.mxu0 0
  %1531 = vmatpush1.bf16.msra.mxu0 0
  %1532 = vmatprep.subr.bf16.mxu0 0
  %1533 = vmatpush1.bf16.msra.mxu0 0
  %1534 = vmatprep.subr.bf16.mxu0 0
  %1535 = vmatpush1.bf16.msra.mxu0 0
  %1536 = vmatprep.subr.bf16.mxu0 0
  %1537 = vmatpush1.bf16.msra.mxu0 0
  %1538 = vmatprep.subr.bf16.mxu0 0
  %1539 = vmatpush1.bf16.msra.mxu0 0
  %1540 = vmatprep.mubr.bf16.mxu0 0
  %1541 = vmatmul.mubr.bf16.gmra.mrb[0].mxu0 %v1503
  %v1542 = vpop.f32.mrb[0].mxu0
  %v1543 = vadd.f32 0.0, %v1542
  %v1544 = vpop.f32.mrb[0].mxu0
  %v1545 = vpop.f32.mrb[0].mxu0
  %v1546 = vpop.f32.mrb[0].mxu0
  %1547 = vdwg.mxu0
  %1548 = vrot.lane.b32.xlu0 %v1159, 64
  %v1549 = vpop.permute.xlu0 %1548
  %v1551 = vsel %vm496, %v1403, 0
  %v1554 = vsel %vm550, %v1549, 0
  %1556 = vmatprep.subr.bf16.mxu0 0
  %1557 = vmatpush1.bf16.msra.mxu0 %v1554
  %1558 = vmatprep.subr.bf16.mxu0 0
  %1559 = vmatpush1.bf16.msra.mxu0 0
  %1560 = vmatprep.subr.bf16.mxu0 0
  %1561 = vmatpush1.bf16.msra.mxu0 0
  %1562 = vmatprep.subr.bf16.mxu0 0
  %1563 = vmatpush1.bf16.msra.mxu0 0
  %1564 = vmatprep.subr.bf16.mxu0 0
  %1565 = vmatpush1.bf16.msra.mxu0 0
  %1566 = vmatprep.subr.bf16.mxu0 0
  %1567 = vmatpush1.bf16.msra.mxu0 0
  %1568 = vmatprep.subr.bf16.mxu0 0
  %1569 = vmatpush1.bf16.msra.mxu0 0
  %1570 = vmatprep.subr.bf16.mxu0 0
  %1571 = vmatpush1.bf16.msra.mxu0 0
  %1572 = vmatprep.subr.bf16.mxu0 0
  %1573 = vmatpush1.bf16.msra.mxu0 0
  %1574 = vmatprep.subr.bf16.mxu0 0
  %1575 = vmatpush1.bf16.msra.mxu0 0
  %1576 = vmatprep.subr.bf16.mxu0 0
  %1577 = vmatpush1.bf16.msra.mxu0 0
  %1578 = vmatprep.subr.bf16.mxu0 0
  %1579 = vmatpush1.bf16.msra.mxu0 0
  %1580 = vmatprep.subr.bf16.mxu0 0
  %1581 = vmatpush1.bf16.msra.mxu0 0
  %1582 = vmatprep.subr.bf16.mxu0 0
  %1583 = vmatpush1.bf16.msra.mxu0 0
  %1584 = vmatprep.subr.bf16.mxu0 0
  %1585 = vmatpush1.bf16.msra.mxu0 0
  %1586 = vmatprep.subr.bf16.mxu0 0
  %1587 = vmatpush1.bf16.msra.mxu0 0
  %1588 = vmatprep.mubr.bf16.mxu0 0
  %1589 = vmatmul.mubr.bf16.gmra.mrb[0].mxu0 %v1551
  %v1590 = vpop.f32.mrb[0].mxu0
  %v1591 = vadd.f32 0.0, %v1590
  %v1592 = vpop.f32.mrb[0].mxu0
  %v1593 = vpop.f32.mrb[0].mxu0
  %v1594 = vpop.f32.mrb[0].mxu0
  %1595 = vdwg.mxu0
  %1598 = vrot.lane.b32.xlu0 %v1543, 16
  %v1599 = vpop.permute.xlu0 %1598
  %1600 = vrot.lane.b32.xlu0 %v1591, 16
  %v1601 = vpop.permute.xlu0 %1600
  %v1604 = vsel %vm302, %v1447, %v1599
  %v1605 = vsel %vm302, %v1495, %v1601
  %v1606 = vpack.c.bf16 %v1605, %v1604
  %s1607 = scalar_lea.vmem %s9, 16
  %v1608 = vld [vmem:[%s1607] sm:$0xf]
  %v1609 = vld [vmem:[%s1607 + $0x4] sm:$0xf]
  %v1610 = vld [vmem:[%s1607 + $0x8] sm:$0xf]
  %v1611 = vld [vmem:[%s1607 + $0xc] sm:$0xf]
  %s1612 = scalar_lea.vmem %s10, 1
  %v1613 = vld [vmem:[%s1612] sm:$0x1]
  %v1615 = vlaneseq
  %v1616 = vshrl.u32 %v1615, 7
  %v1617 = vsub.s32 0, %v1616
  %v1618 = vrot.slane %v1613, %v1617
  %v1624 = vunpack.c.l.b16 %v1608
  %v1625 = vunpack.c.l.b16 %v1609
  %v1626 = vunpack.c.l.b16 %v1610
  %v1627 = vunpack.c.l.b16 %v1611
  %v1628 = vpack.c.b16 %v1625, %v1624
  %v1629 = vpack.c.b16 %v1627, %v1626
  %v1633 = vsel %vm175, %v1606, 0
  %1635 = vmatprep.subr.bf16.mxu0 0
  %1636 = vmatpush1.bf16.msra.mxu0 %v1628
  %1637 = vmatprep.subr.bf16.mxu0 0
  %1638 = vmatpush1.bf16.msra.mxu0 %v1629
  %1639 = vmatprep.subr.bf16.mxu0 0
  %1640 = vmatpush1.bf16.msra.mxu0 0
  %1641 = vmatprep.subr.bf16.mxu0 0
  %1642 = vmatpush1.bf16.msra.mxu0 0
  %1643 = vmatprep.subr.bf16.mxu0 0
  %1644 = vmatpush1.bf16.msra.mxu0 0
  %1645 = vmatprep.subr.bf16.mxu0 0
  %1646 = vmatpush1.bf16.msra.mxu0 0
  %1647 = vmatprep.subr.bf16.mxu0 0
  %1648 = vmatpush1.bf16.msra.mxu0 0
  %1649 = vmatprep.subr.bf16.mxu0 0
  %1650 = vmatpush1.bf16.msra.mxu0 0
  %1651 = vmatprep.subr.bf16.mxu0 0
  %1652 = vmatpush1.bf16.msra.mxu0 0
  %1653 = vmatprep.subr.bf16.mxu0 0
  %1654 = vmatpush1.bf16.msra.mxu0 0
  %1655 = vmatprep.subr.bf16.mxu0 0
  %1656 = vmatpush1.bf16.msra.mxu0 0
  %1657 = vmatprep.subr.bf16.mxu0 0
  %1658 = vmatpush1.bf16.msra.mxu0 0
  %1659 = vmatprep.subr.bf16.mxu0 0
  %1660 = vmatpush1.bf16.msra.mxu0 0
  %1661 = vmatprep.subr.bf16.mxu0 0
  %1662 = vmatpush1.bf16.msra.mxu0 0
  %1663 = vmatprep.subr.bf16.mxu0 0
  %1664 = vmatpush1.bf16.msra.mxu0 0
  %1665 = vmatprep.subr.bf16.mxu0 0
  %1666 = vmatpush1.bf16.msra.mxu0 0
  %1667 = vmatprep.mubr.bf16.mxu0 0
  %1668 = vmatmul.mubr.bf16.gmra.mrb[0].mxu0 %v1633
  %v1669 = vpop.f32.mrb[0].mxu0
  %v1670 = vadd.f32 %v1618, %v1669
  %v1671 = vpop.f32.mrb[0].mxu0
  %v1672 = vpop.f32.mrb[0].mxu0
  %v1673 = vadd.f32 %v1618, %v1672
  %v1674 = vpop.f32.mrb[0].mxu0
  %1675 = vdwg.mxu0
  %v1676 = vadd.f32 %v1076, %v1670
  %v1677 = vadd.f32 %v1077, %v1673
  %s1678 = scalar_lea.vmem %s11, 1
  %v1679 = vld [vmem:[%s1678] sm:$0x1]
  %s1680 = scalar_lea.vmem %s12, 1
  %v1681 = vld [vmem:[%s1680] sm:$0x1]
  %v1682 = vsel %vm175, %v1676, 0.0
  %1683 = vadd.xlane.f32.xlu0 %v1682
  %v1684 = vpop.xlane.xlu0 %1683
  %v1685 = vsel %vm175, %v1677, 0.0
  %1686 = vadd.xlane.f32.xlu0 %v1685
  %v1687 = vpop.xlane.xlu0 %1686
  %v1688 = vmul.f32 %v1684, %v182
  %v1689 = vmul.f32 %v1687, %v182
  %v1690 = vsub.f32 %v1676, %v1688
  %v1691 = vsub.f32 %v1677, %v1689
  %v1692 = vmul.f32 %v1690, %v1690
  %v1693 = vmul.f32 %v1691, %v1691
  %v1694 = vsel %vm175, %v1692, 0.0
  %1695 = vadd.xlane.f32.xlu0 %v1694
  %v1696 = vpop.xlane.xlu0 %1695
  %v1697 = vsel %vm175, %v1693, 0.0
  %1698 = vadd.xlane.f32.xlu0 %v1697
  %v1699 = vpop.xlane.xlu0 %1698
  %v1700 = vmul.f32 %v1696, %v182
  %v1701 = vmul.f32 %v1699, %v182
  %v1702 = vadd.f32 %v1700, 1e-12
  %v1703 = vadd.f32 %v1701, 1e-12
  %v1704 = vrsqrt.pop %v1702
  %v1705 = vrsqrt.pop %v1703
  %v1706 = vmul.f32 %v1690, %v1704
  %v1707 = vmul.f32 %v1691, %v1705
  %v1709 = vlaneseq
  %v1710 = vshrl.u32 %v1709, 7
  %v1711 = vsub.s32 0, %v1710
  %v1712 = vrot.slane %v1679, %v1711
  %v1714 = vmul.f32 %v1706, %v1712
  %v1715 = vmul.f32 %v1707, %v1712
  %v1717 = vlaneseq
  %v1718 = vshrl.u32 %v1717, 7
  %v1719 = vsub.s32 0, %v1718
  %v1720 = vrot.slane %v1681, %v1719
  %v1722 = vadd.f32 %v1714, %v1720
  %v1723 = vadd.f32 %v1715, %v1720
  %v1724 = vpack.c.bf16 %v1723, %v1722
  %s1725 = scalar_lea.vmem %s13, 16
  %v1726 = vld [vmem:[%s1725] sm:$0xf]
  %v1727 = vld [vmem:[%s1725 + $0x4] sm:$0xf]
  %v1728 = vld [vmem:[%s1725 + $0x8] sm:$0xf]
  %v1729 = vld [vmem:[%s1725 + $0xc] sm:$0xf]
  %s1730 = scalar_lea.vmem %s14, 1
  %v1731 = vld [vmem:[%s1730] sm:$0x1]
  %v1733 = vlaneseq
  %v1734 = vshrl.u32 %v1733, 7
  %v1735 = vsub.s32 0, %v1734
  %v1736 = vrot.slane %v1731, %v1735
  %v1742 = vunpack.c.l.b16 %v1726
  %v1743 = vunpack.c.l.b16 %v1727
  %v1744 = vunpack.c.l.b16 %v1728
  %v1745 = vunpack.c.l.b16 %v1729
  %v1746 = vpack.c.b16 %v1743, %v1742
  %v1747 = vpack.c.b16 %v1745, %v1744
  %v1751 = vsel %vm175, %v1724, 0
  %1753 = vmatprep.subr.bf16.mxu0 0
  %1754 = vmatpush1.bf16.msra.mxu0 %v1746
  %1755 = vmatprep.subr.bf16.mxu0 0
  %1756 = vmatpush1.bf16.msra.mxu0 %v1747
  %1757 = vmatprep.subr.bf16.mxu0 0
  %1758 = vmatpush1.bf16.msra.mxu0 0
  %1759 = vmatprep.subr.bf16.mxu0 0
  %1760 = vmatpush1.bf16.msra.mxu0 0
  %1761 = vmatprep.subr.bf16.mxu0 0
  %1762 = vmatpush1.bf16.msra.mxu0 0
  %1763 = vmatprep.subr.bf16.mxu0 0
  %1764 = vmatpush1.bf16.msra.mxu0 0
  %1765 = vmatprep.subr.bf16.mxu0 0
  %1766 = vmatpush1.bf16.msra.mxu0 0
  %1767 = vmatprep.subr.bf16.mxu0 0
  %1768 = vmatpush1.bf16.msra.mxu0 0
  %1769 = vmatprep.subr.bf16.mxu0 0
  %1770 = vmatpush1.bf16.msra.mxu0 0
  %1771 = vmatprep.subr.bf16.mxu0 0
  %1772 = vmatpush1.bf16.msra.mxu0 0
  %1773 = vmatprep.subr.bf16.mxu0 0
  %1774 = vmatpush1.bf16.msra.mxu0 0
  %1775 = vmatprep.subr.bf16.mxu0 0
  %1776 = vmatpush1.bf16.msra.mxu0 0
  %1777 = vmatprep.subr.bf16.mxu0 0
  %1778 = vmatpush1.bf16.msra.mxu0 0
  %1779 = vmatprep.subr.bf16.mxu0 0
  %1780 = vmatpush1.bf16.msra.mxu0 0
  %1781 = vmatprep.subr.bf16.mxu0 0
  %1782 = vmatpush1.bf16.msra.mxu0 0
  %1783 = vmatprep.subr.bf16.mxu0 0
  %1784 = vmatpush1.bf16.msra.mxu0 0
  %1785 = vmatprep.mubr.bf16.mxu0 0
  %1786 = vmatmul.mubr.bf16.gmra.mrb[0].mxu0 %v1751
  %v1787 = vpop.f32.mrb[0].mxu0
  %v1788 = vadd.f32 %v1736, %v1787
  %v1789 = vpop.f32.mrb[0].mxu0
  %v1790 = vpop.f32.mrb[0].mxu0
  %v1791 = vadd.f32 %v1736, %v1790
  %v1792 = vpop.f32.mrb[0].mxu0
  %1793 = vdwg.mxu0
  %v1794 = vmul.f32 %v1788, %v1788
  %v1795 = vmul.f32 %v1791, %v1791
  %v1796 = vmul.f32 %v1788, %v1794
  %v1797 = vmul.f32 %v1791, %v1795
  %v1798 = vmul.f32 %v1796, 0.044715
  %v1799 = vmul.f32 %v1797, 0.044715
  %v1800 = vadd.f32 %v1788, %v1798
  %v1801 = vadd.f32 %v1791, %v1799
  %v1802 = vmul.f32 %v1800, 0.7978846
  %v1803 = vmul.f32 %v1801, 0.7978846
  %v1804 = vtanh.pop %v1802
  %v1805 = vtanh.pop %v1803
  %v1806 = vadd.f32 %v1804, 1.0
  %v1807 = vadd.f32 %v1805, 1.0
  %v1808 = vmul.f32 %v1806, 0.5
  %v1809 = vmul.f32 %v1807, 0.5
  %v1810 = vmul.f32 %v1788, %v1808
  %v1811 = vmul.f32 %v1791, %v1809
  %v1812 = vpack.c.bf16 %v1811, %v1810
  %s1813 = scalar_lea.vmem %s15, 32
  %v1814 = vld [vmem:[%s1813] sm:$0xf]
  %v1815 = vld [vmem:[%s1813 + $0x4] sm:$0xf]
  %v1816 = vld [vmem:[%s1813 + $0x8] sm:$0xf]
  %v1817 = vld [vmem:[%s1813 + $0xc] sm:$0xf]
  %v1818 = vld [vmem:[%s1813 + $0x10] sm:$0xf]
  %v1819 = vld [vmem:[%s1813 + $0x14] sm:$0xf]
  %v1820 = vld [vmem:[%s1813 + $0x18] sm:$0xf]
  %v1821 = vld [vmem:[%s1813 + $0x1c] sm:$0xf]
  %s1822 = scalar_lea.vmem %s16, 1
  %v1823 = vld [vmem:[%s1822] sm:$0x1]
  %v1825 = vlaneseq
  %v1826 = vshrl.u32 %v1825, 7
  %v1827 = vsub.s32 0, %v1826
  %v1828 = vrot.slane %v1823, %v1827
  %v1838 = vunpack.c.l.b16 %v1814
  %v1839 = vunpack.c.l.b16 %v1815
  %v1840 = vunpack.c.l.b16 %v1816
  %v1841 = vunpack.c.l.b16 %v1817
  %v1842 = vunpack.c.l.b16 %v1818
  %v1843 = vunpack.c.l.b16 %v1819
  %v1844 = vunpack.c.l.b16 %v1820
  %v1845 = vunpack.c.l.b16 %v1821
  %v1846 = vpack.c.b16 %v1839, %v1838
  %v1847 = vpack.c.b16 %v1841, %v1840
  %v1848 = vpack.c.b16 %v1843, %v1842
  %v1849 = vpack.c.b16 %v1845, %v1844
  %v1855 = vsel %vm128, %v1812, 0
  %1857 = vmatprep.subr.bf16.mxu0 0
  %1858 = vmatpush1.bf16.msra.mxu0 %v1846
  %1859 = vmatprep.subr.bf16.mxu0 0
  %1860 = vmatpush1.bf16.msra.mxu0 %v1847
  %1861 = vmatprep.subr.bf16.mxu0 0
  %1862 = vmatpush1.bf16.msra.mxu0 %v1848
  %1863 = vmatprep.subr.bf16.mxu0 0
  %1864 = vmatpush1.bf16.msra.mxu0 %v1849
  %1865 = vmatprep.subr.bf16.mxu0 0
  %1866 = vmatpush1.bf16.msra.mxu0 0
  %1867 = vmatprep.subr.bf16.mxu0 0
  %1868 = vmatpush1.bf16.msra.mxu0 0
  %1869 = vmatprep.subr.bf16.mxu0 0
  %1870 = vmatpush1.bf16.msra.mxu0 0
  %1871 = vmatprep.subr.bf16.mxu0 0
  %1872 = vmatpush1.bf16.msra.mxu0 0
  %1873 = vmatprep.subr.bf16.mxu0 0
  %1874 = vmatpush1.bf16.msra.mxu0 0
  %1875 = vmatprep.subr.bf16.mxu0 0
  %1876 = vmatpush1.bf16.msra.mxu0 0
  %1877 = vmatprep.subr.bf16.mxu0 0
  %1878 = vmatpush1.bf16.msra.mxu0 0
  %1879 = vmatprep.subr.bf16.mxu0 0
  %1880 = vmatpush1.bf16.msra.mxu0 0
  %1881 = vmatprep.subr.bf16.mxu0 0
  %1882 = vmatpush1.bf16.msra.mxu0 0
  %1883 = vmatprep.subr.bf16.mxu0 0
  %1884 = vmatpush1.bf16.msra.mxu0 0
  %1885 = vmatprep.subr.bf16.mxu0 0
  %1886 = vmatpush1.bf16.msra.mxu0 0
  %1887 = vmatprep.subr.bf16.mxu0 0
  %1888 = vmatpush1.bf16.msra.mxu0 0
  %1889 = vmatprep.mubr.bf16.mxu0 0
  %1890 = vmatmul.mubr.bf16.gmra.mrb[0].mxu0 %v1855
  %v1891 = vpop.f32.mrb[0].mxu0
  %v1892 = vadd.f32 %v1828, %v1891
  %v1893 = vpop.f32.mrb[0].mxu0
  %v1894 = vpop.f32.mrb[0].mxu0
  %v1895 = vadd.f32 %v1828, %v1894
  %v1896 = vpop.f32.mrb[0].mxu0
  %1897 = vdwg.mxu0
  %v1898 = vadd.f32 %v1722, %v1892
  %v1899 = vadd.f32 %v1723, %v1895
  %s1900 = scalar_lea.vmem %s17, 1
  %v1901 = vld [vmem:[%s1900] sm:$0x1]
  %s1902 = scalar_lea.vmem %s18, 1
  %v1903 = vld [vmem:[%s1902] sm:$0x1]
  %v1904 = vsel %vm175, %v1898, 0.0
  %1905 = vadd.xlane.f32.xlu0 %v1904
  %v1906 = vpop.xlane.xlu0 %1905
  %v1907 = vsel %vm175, %v1899, 0.0
  %1908 = vadd.xlane.f32.xlu0 %v1907
  %v1909 = vpop.xlane.xlu0 %1908
  %v1910 = vmul.f32 %v1906, %v182
  %v1911 = vmul.f32 %v1909, %v182
  %v1912 = vsub.f32 %v1898, %v1910
  %v1913 = vsub.f32 %v1899, %v1911
  %v1914 = vmul.f32 %v1912, %v1912
  %v1915 = vmul.f32 %v1913, %v1913
  %v1916 = vsel %vm175, %v1914, 0.0
  %1917 = vadd.xlane.f32.xlu0 %v1916
  %v1918 = vpop.xlane.xlu0 %1917
  %v1919 = vsel %vm175, %v1915, 0.0
  %1920 = vadd.xlane.f32.xlu0 %v1919
  %v1921 = vpop.xlane.xlu0 %1920
  %v1922 = vmul.f32 %v1918, %v182
  %v1923 = vmul.f32 %v1921, %v182
  %v1924 = vadd.f32 %v1922, 1e-12
  %v1925 = vadd.f32 %v1923, 1e-12
  %v1926 = vrsqrt.pop %v1924
  %v1927 = vrsqrt.pop %v1925
  %v1928 = vmul.f32 %v1912, %v1926
  %v1929 = vmul.f32 %v1913, %v1927
  %v1931 = vlaneseq
  %v1932 = vshrl.u32 %v1931, 7
  %v1933 = vsub.s32 0, %v1932
  %v1934 = vrot.slane %v1901, %v1933
  %v1936 = vmul.f32 %v1928, %v1934
  %v1937 = vmul.f32 %v1929, %v1934
  %v1939 = vlaneseq
  %v1940 = vshrl.u32 %v1939, 7
  %v1941 = vsub.s32 0, %v1940
  %v1942 = vrot.slane %v1903, %v1941
  %v1944 = vadd.f32 %v1936, %v1942
  %v1945 = vadd.f32 %v1937, %v1942
  %v1946 = vld [vmem:[%s19] sm:$0x1]
  %v1948 = vlaneseq
  %v1949 = vshrl.u32 %v1948, 7
  %v1950 = vsub.s32 0, %v1949
  %v1951 = vrot.slane %v1946, %v1950
  %v1953 = vmul.f32 %v1944, %v1951
  %v1954 = vmul.f32 %v1945, %v1951
  %v1955 = vsel %vm175, %v1953, 0.0
  %1956 = vadd.xlane.f32.xlu0 %v1955
  %v1957 = vpop.xlane.xlu0 %1956
  %v1958 = vsel %vm175, %v1954, 0.0
  %1959 = vadd.xlane.f32.xlu0 %v1958
  %v1960 = vpop.xlane.xlu0 %1959
  %v1961 = vld [vmem:[#allocation2] sm:$0x1]
  %v1963 = vlaneseq
  %v1964 = vshrl.u32 %v1963, 7
  %v1965 = vsub.s32 0, %v1964
  %v1966 = vrot.slane %v1961, %v1965
  %v1968 = vadd.f32 %v1957, %v1966
  %v1969 = vadd.f32 %v1960, %v1966
  %v1970 = vlaneseq
  %v1971 = vshrl.u32 %v1970, 7
  %v1972 = vld [vmem:[%s1] sm:$0x3]
  %v1974 = vunpack.c.l.s4 1966171168
  %v1975 = vunpack.c.0.s8 %v1974
  %v1976 = vlaneseq
  %v1977 = vshrl.u32 %v1976, 7
  %v1978 = vsub.s32 %v1975, %v1977
  %v1979 = vrot.slane %v1972, %v1978
  %v1980 = vcombine.high %v1979, %v1979
  %v1982 = vunpack.c.l.s4 1966171168
  %v1983 = vunpack.c.0.s8 %v1982
  %v1984 = vlaneseq
  %v1985 = vshrl.u32 %v1984, 7
  %v1986 = vsub.s32 %v1983, %v1985
  %v1987 = vrot.slane %v1979, %v1986
  %v1989 = vunpack.c.l.s4 1966171168
  %v1990 = vunpack.c.0.s8 %v1989
  %v1991 = vlaneseq
  %v1992 = vshrl.u32 %v1991, 7
  %v1993 = vsub.s32 %v1990, %v1992
  %v1994 = vrot.slane %v1980, %v1993
  %v1995 = vlaneseq
  %v1996 = vshrl.u32 %v1995, 7
  %v1997 = vsub.s32 0, %v1996
  %v1998 = vrot.slane %v1987, %v1997
  %v1999 = vlaneseq
  %v2000 = vshrl.u32 %v1999, 7
  %v2001 = vsub.s32 0, %v2000
  %v2002 = vrot.slane %v1994, %v2001
  %vm2003 = vcmp.ge.s32.totalorder %v1971, %v1998
  %vm2004 = vcmp.ge.s32.totalorder %v1971, %v2002
  %vm2005 = vcmp.le.s32.totalorder %v1971, %v1998
  %vm2006 = vcmp.le.s32.totalorder %v1971, %v2002
  %v2007 = vsel %vm2005, 1, 0
  %v2008 = vsel %vm2006, 1, 0
  %2009 = vrot.lane.b32.xlu0 %v2007, 127
  %v2010 = vpop.permute.xlu0 %2009
  %2011 = vrot.lane.b32.xlu0 %v2008, 127
  %v2012 = vpop.permute.xlu0 %2011
  %vm2013 = vcmp.ne.s32.totalorder %v2010, 0
  %vm2014 = vcmp.ne.s32.totalorder %v2012, 0
  %vm2015 = vmand %vm2003, %vm2013
  %vm2016 = vmand %vm2004, %vm2014
  %v2017 = vsel %vm2015, %v1968, -1e+30
  %v2018 = vsel %vm2016, %v1969, -1e+30
  %vm2019 = vcmask 7168
  %v2020 = vsel %vm2019, %v2017, -inf
  %v2021 = vrot.slane %v2020, 4
  %v2022 = vmax.f32 %v2020, %v2021
  %v2023 = vrot.slane %v2022, 2
  %v2024 = vmax.f32 %v2022, %v2023
  %v2025 = vrot.slane %v2024, 1
  %v2026 = vmax.f32 %v2024, %v2025
  %v2027 = vsel %vm2019, %v2018, -inf
  %v2028 = vrot.slane %v2027, 4
  %v2029 = vmax.f32 %v2027, %v2028
  %v2030 = vrot.slane %v2029, 2
  %v2031 = vmax.f32 %v2029, %v2030
  %v2032 = vrot.slane %v2031, 1
  %v2033 = vmax.f32 %v2031, %v2032
  %v2034 = vsub.f32 %v2017, %v2026
  %v2035 = vsub.f32 %v2018, %v2033
  %v2036 = vmul.f32 %v2034, 1.442695
  %v2037 = vpow.pop %v2036
  %v2038 = vmul.f32 %v2035, 1.442695
  %v2039 = vpow.pop %v2038
  %v2040 = vsel %vm2015, 1, 0
  %v2041 = vsel %vm2016, 1, 0
  %v2042 = vcvt.s32.f32 %v2040
  %v2043 = vcvt.s32.f32 %v2041
  %v2044 = vmul.f32 %v2037, %v2042
  %v2045 = vmul.f32 %v2039, %v2043
  %v2046 = vsel %vm2019, %v2044, 0.0
  %v2047 = vrot.slane %v2046, 4
  %v2048 = vadd.f32 %v2046, %v2047
  %v2049 = vrot.slane %v2048, 2
  %v2050 = vadd.f32 %v2048, %v2049
  %v2051 = vrot.slane %v2050, 1
  %v2052 = vadd.f32 %v2050, %v2051
  %v2053 = vsel %vm2019, %v2045, 0.0
  %v2054 = vrot.slane %v2053, 4
  %v2055 = vadd.f32 %v2053, %v2054
  %v2056 = vrot.slane %v2055, 2
  %v2057 = vadd.f32 %v2055, %v2056
  %v2058 = vrot.slane %v2057, 1
  %v2059 = vadd.f32 %v2057, %v2058
  %v2060 = vmax.f32 %v2052, 1e-30
  %v2061 = vmax.f32 %v2059, 1e-30
  %v2062 = vrcp.pop %v2060
  %v2063 = vrcp.pop %v2061
  %v2064 = vmul.f32 %v2044, %v2062
  %v2065 = vmul.f32 %v2045, %v2063
  %2067 = vset.pattern.permute.xlu0 0
  %2068 = vperm.xlu0 %2067, %v2064
  %v2069 = vpop.permute.xlu0 %2068
  %2072 = vset.pattern.permute.xlu0 0
  %2073 = vperm.xlu0 %2072, %v2065
  %v2074 = vpop.permute.xlu0 %2073
  %v2076 = vmul.f32 %v2069, %v1944
  %v2077 = vmul.f32 %v2074, %v1945
  %v2078 = vsel %vm175, %v2076, 0.0
  %v2079 = vrot.slane %v2078, 4
  %v2080 = vadd.f32 %v2078, %v2079
  %v2081 = vrot.slane %v2080, 2
  %v2082 = vadd.f32 %v2080, %v2081
  %v2083 = vrot.slane %v2082, 1
  %v2084 = vadd.f32 %v2082, %v2083
  %v2085 = vsel %vm175, %v2077, 0.0
  %v2086 = vrot.slane %v2085, 4
  %v2087 = vadd.f32 %v2085, %v2086
  %v2088 = vrot.slane %v2087, 2
  %v2089 = vadd.f32 %v2087, %v2088
  %v2090 = vrot.slane %v2089, 1
  %v2091 = vadd.f32 %v2089, %v2090
  %2094 = vrot.lane.b32.xlu0 %v1968, 2
  %v2095 = vpop.permute.xlu0 %2094
  %2096 = vrot.lane.b32.xlu0 %v1969, 2
  %v2097 = vpop.permute.xlu0 %2096
  %v2100 = vsel %vm2015, %v2095, -1e+30
  %v2101 = vsel %vm2016, %v2097, -1e+30
  %vm2102 = vcmask 23568
  %v2103 = vsel %vm2102, %v2100, -inf
  %v2104 = vrot.slane %v2103, 4
  %v2105 = vmax.f32 %v2103, %v2104
  %v2106 = vrot.slane %v2105, 2
  %v2107 = vmax.f32 %v2105, %v2106
  %v2108 = vrot.slane %v2107, 1
  %v2109 = vmax.f32 %v2107, %v2108
  %v2110 = vsel %vm2102, %v2101, -inf
  %v2111 = vrot.slane %v2110, 4
  %v2112 = vmax.f32 %v2110, %v2111
  %v2113 = vrot.slane %v2112, 2
  %v2114 = vmax.f32 %v2112, %v2113
  %v2115 = vrot.slane %v2114, 1
  %v2116 = vmax.f32 %v2114, %v2115
  %v2117 = vsub.f32 %v2100, %v2109
  %v2118 = vsub.f32 %v2101, %v2116
  %v2119 = vmul.f32 %v2117, 1.442695
  %v2120 = vpow.pop %v2119
  %v2121 = vmul.f32 %v2118, 1.442695
  %v2122 = vpow.pop %v2121
  %v2123 = vmul.f32 %v2120, %v2042
  %v2124 = vmul.f32 %v2122, %v2043
  %v2125 = vsel %vm2102, %v2123, 0.0
  %v2126 = vrot.slane %v2125, 4
  %v2127 = vadd.f32 %v2125, %v2126
  %v2128 = vrot.slane %v2127, 2
  %v2129 = vadd.f32 %v2127, %v2128
  %v2130 = vrot.slane %v2129, 1
  %v2131 = vadd.f32 %v2129, %v2130
  %v2132 = vsel %vm2102, %v2124, 0.0
  %v2133 = vrot.slane %v2132, 4
  %v2134 = vadd.f32 %v2132, %v2133
  %v2135 = vrot.slane %v2134, 2
  %v2136 = vadd.f32 %v2134, %v2135
  %v2137 = vrot.slane %v2136, 1
  %v2138 = vadd.f32 %v2136, %v2137
  %v2139 = vmax.f32 %v2131, 1e-30
  %v2140 = vmax.f32 %v2138, 1e-30
  %v2141 = vrcp.pop %v2139
  %v2142 = vrcp.pop %v2140
  %v2143 = vmul.f32 %v2123, %v2141
  %v2144 = vmul.f32 %v2124, %v2142
  %2146 = vset.pattern.permute.xlu0 2
  %2147 = vperm.xlu0 %2146, %v2143
  %v2148 = vpop.permute.xlu0 %2147
  %2151 = vset.pattern.permute.xlu0 2
  %2152 = vperm.xlu0 %2151, %v2144
  %v2153 = vpop.permute.xlu0 %2152
  %v2155 = vmul.f32 %v2148, %v1944
  %v2156 = vmul.f32 %v2153, %v1945
  %v2157 = vsel %vm175, %v2155, 0.0
  %v2158 = vrot.slane %v2157, 4
  %v2159 = vadd.f32 %v2157, %v2158
  %v2160 = vrot.slane %v2159, 2
  %v2161 = vadd.f32 %v2159, %v2160
  %v2162 = vrot.slane %v2161, 1
  %v2163 = vadd.f32 %v2161, %v2162
  %v2164 = vsel %vm175, %v2156, 0.0
  %v2165 = vrot.slane %v2164, 4
  %v2166 = vadd.f32 %v2164, %v2165
  %v2167 = vrot.slane %v2166, 2
  %v2168 = vadd.f32 %v2166, %v2167
  %v2169 = vrot.slane %v2168, 1
  %v2170 = vadd.f32 %v2168, %v2169
  %2171 = vrot.lane.b32.xlu0 %v1968, 4
  %v2172 = vpop.permute.xlu0 %2171
  %2173 = vrot.lane.b32.xlu0 %v1969, 4
  %v2174 = vpop.permute.xlu0 %2173
  %v2177 = vsel %vm2015, %v2172, -1e+30
  %v2178 = vsel %vm2016, %v2174, -1e+30
  %vm2179 = vcmask 39968
  %v2180 = vsel %vm2179, %v2177, -inf
  %v2181 = vrot.slane %v2180, 4
  %v2182 = vmax.f32 %v2180, %v2181
  %v2183 = vrot.slane %v2182, 2
  %v2184 = vmax.f32 %v2182, %v2183
  %v2185 = vrot.slane %v2184, 1
  %v2186 = vmax.f32 %v2184, %v2185
  %v2187 = vsel %vm2179, %v2178, -inf
  %v2188 = vrot.slane %v2187, 4
  %v2189 = vmax.f32 %v2187, %v2188
  %v2190 = vrot.slane %v2189, 2
  %v2191 = vmax.f32 %v2189, %v2190
  %v2192 = vrot.slane %v2191, 1
  %v2193 = vmax.f32 %v2191, %v2192
  %v2194 = vsub.f32 %v2177, %v2186
  %v2195 = vsub.f32 %v2178, %v2193
  %v2196 = vmul.f32 %v2194, 1.442695
  %v2197 = vpow.pop %v2196
  %v2198 = vmul.f32 %v2195, 1.442695
  %v2199 = vpow.pop %v2198
  %v2200 = vmul.f32 %v2197, %v2042
  %v2201 = vmul.f32 %v2199, %v2043
  %v2202 = vsel %vm2179, %v2200, 0.0
  %v2203 = vrot.slane %v2202, 4
  %v2204 = vadd.f32 %v2202, %v2203
  %v2205 = vrot.slane %v2204, 2
  %v2206 = vadd.f32 %v2204, %v2205
  %v2207 = vrot.slane %v2206, 1
  %v2208 = vadd.f32 %v2206, %v2207
  %v2209 = vsel %vm2179, %v2201, 0.0
  %v2210 = vrot.slane %v2209, 4
  %v2211 = vadd.f32 %v2209, %v2210
  %v2212 = vrot.slane %v2211, 2
  %v2213 = vadd.f32 %v2211, %v2212
  %v2214 = vrot.slane %v2213, 1
  %v2215 = vadd.f32 %v2213, %v2214
  %v2216 = vmax.f32 %v2208, 1e-30
  %v2217 = vmax.f32 %v2215, 1e-30
  %v2218 = vrcp.pop %v2216
  %v2219 = vrcp.pop %v2217
  %v2220 = vmul.f32 %v2200, %v2218
  %v2221 = vmul.f32 %v2201, %v2219
  %2223 = vset.pattern.permute.xlu0 4
  %2224 = vperm.xlu0 %2223, %v2220
  %v2225 = vpop.permute.xlu0 %2224
  %2228 = vset.pattern.permute.xlu0 4
  %2229 = vperm.xlu0 %2228, %v2221
  %v2230 = vpop.permute.xlu0 %2229
  %v2232 = vmul.f32 %v2225, %v1944
  %v2233 = vmul.f32 %v2230, %v1945
  %v2234 = vsel %vm175, %v2232, 0.0
  %v2235 = vrot.slane %v2234, 4
  %v2236 = vadd.f32 %v2234, %v2235
  %v2237 = vrot.slane %v2236, 2
  %v2238 = vadd.f32 %v2236, %v2237
  %v2239 = vrot.slane %v2238, 1
  %v2240 = vadd.f32 %v2238, %v2239
  %v2241 = vsel %vm175, %v2233, 0.0
  %v2242 = vrot.slane %v2241, 4
  %v2243 = vadd.f32 %v2241, %v2242
  %v2244 = vrot.slane %v2243, 2
  %v2245 = vadd.f32 %v2243, %v2244
  %v2246 = vrot.slane %v2245, 1
  %v2247 = vadd.f32 %v2245, %v2246
  %v2248 = vsub.f32 %v2084, %v2163
  %v2249 = vsub.f32 %v2091, %v2170
  %v2250 = vand.u32 2147483647, %v2248
  %v2251 = vand.u32 2147483647, %v2249
  %v2252 = vsub.f32 %v2084, %v2240
  %v2253 = vsub.f32 %v2091, %v2247
  %v2254 = vand.u32 2147483647, %v2252
  %v2255 = vand.u32 2147483647, %v2253
  %v2256 = vsub.f32 %v2163, %v2240
  %v2257 = vsub.f32 %v2170, %v2247
  %v2258 = vand.u32 2147483647, %v2256
  %v2259 = vand.u32 2147483647, %v2257
  %v2262 = vrot.slane %v1945, 7
  %2267 = vrot.lane.b32.xlu0 %v2250, 32
  %v2268 = vpop.permute.xlu0 %2267
  %2269 = vrot.lane.b32.xlu0 %v2251, 32
  %v2270 = vpop.permute.xlu0 %2269
  %2275 = vrot.lane.b32.xlu0 %v2254, 64
  %v2276 = vpop.permute.xlu0 %2275
  %2277 = vrot.lane.b32.xlu0 %v2255, 64
  %v2278 = vpop.permute.xlu0 %2277
  %2283 = vrot.lane.b32.xlu0 %v2258, 96
  %v2284 = vpop.permute.xlu0 %2283
  %2285 = vrot.lane.b32.xlu0 %v2259, 96
  %v2286 = vpop.permute.xlu0 %2285
  %v2289 = vsel %vm175, %v1944, %v2268
  %v2290 = vsel %vm175, %v2262, %v2270
  %v2291 = vsel %vm128, %v2289, %v2276
  %v2292 = vsel %vm128, %v2290, %v2278
  %vm2293 = vcmask 785408
  %v2294 = vsel %vm2293, %v2291, %v2284
  %v2295 = vsel %vm2293, %v2292, %v2286
  %v2296 = vpack.c.bf16 %v2295, %v2294
  %v2297 = vld [vmem:[%s21] sm:$0xf]
  %v2298 = vld [vmem:[%s21 + $0x4] sm:$0xf]
  %v2299 = vld [vmem:[%s21 + $0x8] sm:$0xf]
  %v2300 = vld [vmem:[%s21 + $0xc] sm:$0xf]
  %v2301 = vld [vmem:[%s21 + $0x10] sm:$0xf]
  %v2302 = vld [vmem:[%s21 + $0x14] sm:$0xf]
  %v2303 = vld [vmem:[%s21 + $0x18] sm:$0xf]
  %v2304 = vld [vmem:[%s21 + $0x1c] sm:$0xf]
  %v2305 = vld [vmem:[%s21 + $0x20] sm:$0xf]
  %v2306 = vld [vmem:[%s21 + $0x24] sm:$0xf]
  %v2307 = vld [vmem:[%s21 + $0x28] sm:$0xf]
  %v2308 = vld [vmem:[%s21 + $0x2c] sm:$0xf]
  %v2309 = vld [vmem:[%s21 + $0x30] sm:$0xf]
  %v2310 = vld [vmem:[%s21 + $0x34] sm:$0xf]
  %v2311 = vld [vmem:[%s21 + $0x38] sm:$0xf]
  %v2312 = vld [vmem:[%s21 + $0x3c] sm:$0xf]
  %v2313 = vld [vmem:[%s22] sm:$0x1]
  %v2315 = vlaneseq
  %v2316 = vshrl.u32 %v2315, 7
  %v2317 = vsub.s32 0, %v2316
  %v2318 = vrot.slane %v2313, %v2317
  %v2321 = vshrl.u32 %v2296, 16
  %v2323 = vrot.slane %v2321, 3
  %v2324 = vshll.u32 %v2296, 16
  %v2326 = vrot.slane %v2324, 4
  %v2327 = vor.u32 %v2323, %v2326
  %v2345 = vunpack.c.l.b16 %v2297
  %v2346 = vunpack.c.l.b16 %v2298
  %v2347 = vunpack.c.l.b16 %v2299
  %v2348 = vunpack.c.l.b16 %v2300
  %v2349 = vunpack.c.l.b16 %v2301
  %v2350 = vunpack.c.l.b16 %v2302
  %v2351 = vunpack.c.l.b16 %v2303
  %v2352 = vunpack.c.l.b16 %v2304
  %v2353 = vunpack.c.l.b16 %v2305
  %v2354 = vunpack.c.l.b16 %v2306
  %v2355 = vunpack.c.l.b16 %v2307
  %v2356 = vunpack.c.l.b16 %v2308
  %v2357 = vunpack.c.l.b16 %v2309
  %v2358 = vunpack.c.l.b16 %v2310
  %v2359 = vunpack.c.l.b16 %v2311
  %v2360 = vunpack.c.l.b16 %v2312
  %v2361 = vpack.c.b16 %v2346, %v2345
  %v2362 = vpack.c.b16 %v2348, %v2347
  %v2363 = vpack.c.b16 %v2350, %v2349
  %v2364 = vpack.c.b16 %v2352, %v2351
  %v2365 = vpack.c.b16 %v2354, %v2353
  %v2366 = vpack.c.b16 %v2356, %v2355
  %v2367 = vpack.c.b16 %v2358, %v2357
  %v2368 = vpack.c.b16 %v2360, %v2359
  %2377 = vmatprep.subr.bf16.mxu0 0
  %2378 = vmatpush1.bf16.msra.mxu0 %v2361
  %2379 = vmatprep.subr.bf16.mxu0 0
  %2380 = vmatpush1.bf16.msra.mxu0 %v2362
  %2381 = vmatprep.subr.bf16.mxu0 0
  %2382 = vmatpush1.bf16.msra.mxu0 %v2363
  %2383 = vmatprep.subr.bf16.mxu0 0
  %2384 = vmatpush1.bf16.msra.mxu0 %v2364
  %2385 = vmatprep.subr.bf16.mxu0 0
  %2386 = vmatpush1.bf16.msra.mxu0 %v2365
  %2387 = vmatprep.subr.bf16.mxu0 0
  %2388 = vmatpush1.bf16.msra.mxu0 %v2366
  %2389 = vmatprep.subr.bf16.mxu0 0
  %2390 = vmatpush1.bf16.msra.mxu0 %v2367
  %2391 = vmatprep.subr.bf16.mxu0 0
  %2392 = vmatpush1.bf16.msra.mxu0 %v2368
  %2393 = vmatprep.subr.bf16.mxu0 0
  %2394 = vmatpush1.bf16.msra.mxu0 0
  %2395 = vmatprep.subr.bf16.mxu0 0
  %2396 = vmatpush1.bf16.msra.mxu0 0
  %2397 = vmatprep.subr.bf16.mxu0 0
  %2398 = vmatpush1.bf16.msra.mxu0 0
  %2399 = vmatprep.subr.bf16.mxu0 0
  %2400 = vmatpush1.bf16.msra.mxu0 0
  %2401 = vmatprep.subr.bf16.mxu0 0
  %2402 = vmatpush1.bf16.msra.mxu0 0
  %2403 = vmatprep.subr.bf16.mxu0 0
  %2404 = vmatpush1.bf16.msra.mxu0 0
  %2405 = vmatprep.subr.bf16.mxu0 0
  %2406 = vmatpush1.bf16.msra.mxu0 0
  %2407 = vmatprep.subr.bf16.mxu0 0
  %2408 = vmatpush1.bf16.msra.mxu0 0
  %2409 = vmatprep.mubr.bf16.mxu0 0
  %2410 = vmatmul.mubr.bf16.gmra.mrb[0].mxu0 %v2327
  %v2411 = vpop.f32.mrb[0].mxu0
  %v2412 = vadd.f32 %v2318, %v2411
  %v2413 = vpop.f32.mrb[0].mxu0
  %v2414 = vpop.f32.mrb[0].mxu0
  %v2415 = vpop.f32.mrb[0].mxu0
  %2416 = vdwg.mxu0
  %vm2417 = vcmask 25600
  %v2418 = vsel %vm2417, %v2412, -inf
  %2419 = vmax.xlane.f32.xlu0 %v2418
  %v2420 = vpop.xlane.xlu0 %2419
  %v2421 = vsub.f32 %v2412, %v2420
  %v2422 = vmul.f32 %v2421, 1.442695
  %v2423 = vpow.pop %v2422
  %v2424 = vsel %vm2417, %v2423, 0.0
  %2425 = vadd.xlane.f32.xlu0 %v2424
  %v2426 = vpop.xlane.xlu0 %2425
  %v2427 = vlog2.pop %v2426
  %v2428 = vmul.f32 %v2427, 0.6931472
  %v2429 = vadd.f32 %v2420, %v2428
  %v2430 = vld [vmem:[%s2] sm:$0x3]
  %2431 = vset.pattern.permute.xlu0 0
  %2432 = vperm.xlu0 %2431, %v2430
  %v2433 = vpop.permute.xlu0 %2432
  %vm2434 = vcmp.eq.s32.totalorder %v80, %v2433
  %v2435 = vsel %vm2434, %v2412, 0.0
  %v2436 = vsel %vm2417, %v2435, 0.0
  %2437 = vadd.xlane.f32.xlu0 %v2436
  %v2438 = vpop.xlane.xlu0 %2437
  %v2439 = vsub.f32 %v2429, %v2438
  %vm2440 = vcmask 1041408
  %v2441 = vsel %vm2440, %v2439, 0.0
  %v2442 = vrot.slane %v2441, 4
  %v2443 = vadd.f32 %v2441, %v2442
  %v2444 = vrot.slane %v2443, 2
  %v2445 = vadd.f32 %v2443, %v2444
  %v2446 = vrot.slane %v2445, 1
  %v2447 = vadd.f32 %v2445, %v2446
  %v2448 = vmul.f32 %v2447, 0.5
  %vm2449 = vcmask 31744
  %v2450 = vsel %vm2449, %v2412, %v2448
  %vm2451 = vcmask 39936
  %v2452 = vsel %vm2451, %v2450, 0.0
  %2453 = vst [vmem:[%s23] sm:$0x3] %v2452
  // Predicated region
  $region94: #{forward.1} parent=0 // pred_check
    _
  $region95: #{forward.1} parent=0 // pred_check_branch
    %2455 = sbr.rel (0) target = $region97
  $region96: #{forward.1} parent=0 // pred_region
    _
  $region97: #{forward.1} parent=0 // pred_fallthru
    _
  // Predicated region
  $region98: #{forward.1} parent=0 // pred_check
    _
  $region99: #{forward.1} parent=0 // pred_check_branch
    %2457 = sbr.rel (0) target = $region101
  $region100: #{forward.1} parent=0 // pred_region
    _
  $region101: #{forward.1} parent=0 // pred_fallthru
    _

</llo_original>
